<compile_context>
chip_gen: v5e
topology: v5e:2x2
jax: 0.10.0
libtpu: 0.0.40
codegen_flags: <defaults>
</compile_context>

<pallas_src>
import functools

import jax
import jax.numpy as jnp
from jax import lax
from jax.experimental import pallas as pl
from jax.experimental.pallas import tpu as pltpu


# ----------------------- synthetic hyper-parameters (Net.__init__) ------------
EMB_SIZE = 16                       # emb_size
GAT_HIDDEN = 256                    # GATConv(emb_size, 256)
GGC_OUT = 32                        # gated_graph_conv_args['out_channels']
N_NODES = 8

CONV1 = dict(in_channels=1, out_channels=4, kernel_size=3, padding=1)
CONV2 = dict(in_channels=4, out_channels=2, kernel_size=3, padding=1)
MP1 = dict(kernel_size=2, stride=2)
MP2 = dict(kernel_size=2, stride=2)
FC_1_SIZE = GGC_OUT + EMB_SIZE      # 48  (hidden + emb)
FC_2_SIZE = GGC_OUT                 # 32


def get_conv_mp_out_size(in_size, last_layer, mps):
    size = in_size
    for mp in mps:
        size = round((size - mp['kernel_size']) / mp['stride'] + 1)
    size = size + 1 if size % 2 != 0 else size
    return int(size * last_layer['out_channels'])


FC1_FEATURES = get_conv_mp_out_size(FC_1_SIZE, CONV2, [MP1, MP2])   # 24
FC2_FEATURES = get_conv_mp_out_size(FC_2_SIZE, CONV2, [MP1, MP2])   # 16


def _actual_conv_flat(length):
    # conv(k=3, pad=1) keeps length; maxpool(k=2, s=2) halves it (length even).
    l2 = (length - 2) // 2 + 1
    l4 = (l2 - 2) // 2 + 1
    return CONV2['out_channels'] * l4


assert _actual_conv_flat(FC_1_SIZE) == FC1_FEATURES
assert _actual_conv_flat(FC_2_SIZE) == FC2_FEATURES

# ------------------------- packed SMEM scalar layout ---------------------------
C1 = CONV1['out_channels']          # 4
C2 = CONV2['out_channels']          # 2
K = 3
OFF_C1W = 0                         # conv1 weights  [c*K + t]           (12)
OFF_C1B = OFF_C1W + C1 * K          # conv1 biases   [c]                 (4)
OFF_C2W = OFF_C1B + C1              # conv2 weights  [(o*C1 + i)*K + t]  (24)
OFF_C2B = OFF_C2W + C2 * C1 * K     # conv2 biases   [o]                 (2)
OFF_FCB = OFF_C2B + C2              # fc1.bias, fc2.bias                 (2)
N_SCALARS = OFF_FCB + 2             # 44


# ------------------------------ fused Net kernel -------------------------------
def _net_kernel(x_ref, adj_ref, g1w_ref, g1aux_ref, g2w_ref, g2aux_ref,
                fcw_ref, sc_ref, out_ref):
    """Entire Net.forward in one kernel invocation (single block, no grid)."""
    x = x_ref[...]                        # (N, EMB)
    adj = adj_ref[...]                    # (N, N); adj[i, j]=1 <=> edge j -> i (self loops incl.)
    mask = adj > 0.5
    n = x.shape[0]

    # -------- GATConv (heads=1, dense masked softmax) + ReLU ------------------
    def gat(h_in, w_ref, aux_ref):
        xp = jnp.dot(h_in, w_ref[...], preferred_element_type=jnp.float32)   # (N, F)
        aux = aux_ref[...]                                                   # (3, F): asrc, adst, bias
        # MXU contractions over F -> no XLU lane-reduce, no transpose:
        a_src = lax.dot_general(aux[0:1], xp, (((1,), (1,)), ((), ())),
                                preferred_element_type=jnp.float32)          # (1, N)
        a_dst = lax.dot_general(xp, aux[1:2], (((1,), (1,)), ((), ())),
                                preferred_element_type=jnp.float32)          # (N, 1)
        e = a_dst + a_src                                                    # e[i, j] = a_dst[i] + a_src[j]
        e = jnp.where(e > 0, e, 0.2 * e)                                     # LeakyReLU(0.2)
        e = jnp.where(mask, e, -1e30)
        m = jnp.max(e, axis=-1, keepdims=True)
        p = jnp.where(mask, jnp.exp(e - m), 0.0)
        alpha = p / jnp.sum(p, axis=-1, keepdims=True)                       # softmax over incoming edges
        out = jnp.dot(alpha, xp, preferred_element_type=jnp.float32) + aux[2:3]
        return jnp.maximum(out, 0.0)                                         # nn.ReLU(inplace=True)

    h1 = gat(x, g1w_ref, g1aux_ref)       # (N, 256)
    h2 = gat(h1, g2w_ref, g2aux_ref)      # (N, GGC_OUT)

    # -------- Conv head: both branches stacked into one (2N, 48) slab ---------
    concat = jnp.concatenate([h2, x], axis=1)                                # (N, 48) = torch.cat([hidden, x], 1)
    hid_pad = jnp.concatenate(
        [h2, jnp.zeros((n, FC_1_SIZE - FC_2_SIZE), jnp.float32)], axis=1)    # (N, 48); zero tail == conv pad
    slab = jnp.concatenate([concat, hid_pad], axis=0)                        # (2N, 48)

    def taps(z):                          # (B, L) -> (left, center, right), zero pad=1
        zc = jnp.zeros((z.shape[0], 1), jnp.float32)
        return (jnp.concatenate([zc, z[:, :-1]], axis=1),
                z,
                jnp.concatenate([z[:, 1:], zc], axis=1))

    def maxpool2(z):                      # MaxPool1d(kernel_size=2, stride=2), L even
        b, l = z.shape
        return jnp.max(z.reshape(b, l // 2, 2), axis=-1)

    def tree_sum(vals):                   # balanced add tree (short dependence chain)
        while len(vals) > 1:
            nxt = [vals[i] + vals[i + 1] for i in range(0, len(vals) - 1, 2)]
            if len(vals) % 2:
                nxt.append(vals[-1])
            vals = nxt
        return vals[0]

    # conv1d_1 (1 -> C1, k=3, pad=1) + ReLU + mp_1
    t0 = taps(slab)
    y1 = []
    for c in range(C1):
        acc = ((sc_ref[OFF_C1W + c * K + 0] * t0[0]
                + sc_ref[OFF_C1W + c * K + 1] * t0[1])
               + (sc_ref[OFF_C1W + c * K + 2] * t0[2] + sc_ref[OFF_C1B + c]))
        y1.append(maxpool2(jnp.maximum(acc, 0.0)))                           # (2N, 24)

    # Zero the hidden-branch rows beyond their valid pooled length (16) so the
    # padding seen by conv1d_2 matches the standalone length-32 branch.
    lp = FC_1_SIZE // 2                                                      # 24
    row = lax.broadcasted_iota(jnp.int32, (2 * n, lp), 0)
    lane = lax.broadcasted_iota(jnp.int32, (2 * n, lp), 1)
    keep = jnp.logical_not(jnp.logical_and(row >= n, lane >= FC_2_SIZE // 2))
    y1 = [jnp.where(keep, z, 0.0) for z in y1]

    # conv1d_2 (C1 -> C2, k=3, pad=1) + mp_2  (no ReLU, as in the module)
    t1 = [taps(z) for z in y1]
    y2 = []
    for o in range(C2):
        prods = [sc_ref[OFF_C2W + (o * C1 + i) * K + t] * t1[i][t]
                 for i in range(C1) for t in range(K)]
        acc = tree_sum(prods) + sc_ref[OFF_C2B + o]
        y2.append(maxpool2(acc))                                             # (2N, 12)

    # torch .view(-1, C*L) flattens channel-major; fuse fc1/fc2 into one matmul
    z_flat = jnp.concatenate([y2[0][:n], y2[1][:n]], axis=1)                 # (N, 24)
    y_flat = jnp.concatenate([y2[0][n:, :FC_2_SIZE // 4],
                              y2[1][n:, :FC_2_SIZE // 4]], axis=1)           # (N, 16)
    flat = jnp.concatenate([z_flat, y_flat], axis=1)                         # (N, 40)
    logits = lax.dot_general(fcw_ref[...], flat, (((1,), (1,)), ((), ())),
                             preferred_element_type=jnp.float32)             # (2, N)
    res = ((logits[0:1, :] + sc_ref[OFF_FCB + 0])
           * (logits[1:2, :] + sc_ref[OFF_FCB + 1]))                         # fc1(Z) * fc2(Y), (1, N)
    # TODO(synk): nn.Dropout(p=0.2) is a train-time op; eval-mode identity applied here.
    out_ref[...] = 1.0 / (1.0 + jnp.exp(-res))                               # sigmoid, lane-dense (1, N)


# ------------------------------- full Net forward ------------------------------
def net_forward(x, adj, params):
    n = x.shape[0]
    vmem = functools.partial(pl.BlockSpec, memory_space=pltpu.MemorySpace.VMEM)
    smem = functools.partial(pl.BlockSpec, memory_space=pltpu.MemorySpace.SMEM)
    out = pl.pallas_call(
        _net_kernel,
        out_shape=jax.ShapeDtypeStruct((1, n), jnp.float32),
        in_specs=[vmem()] * 7 + [smem()],
        out_specs=vmem(),
        cost_estimate=pl.CostEstimate(flops=270_000, transcendentals=200,
                                      bytes_accessed=60_000),
    )(x, adj,
      params['gat1_w'], params['gat1_aux'],
      params['gat2_w'], params['gat2_aux'],
      params['fc_w'], params['conv_scalars'])
    return out.reshape(-1)                       # torch.flatten


# ------------------------------- parameter init --------------------------------
def init_params(key):
    ks = jax.random.split(key, 16)

    def rnd(k, shape, scale):
        return (scale * jax.random.normal(k, shape)).astype(jnp.float32)

    gat1_asrc = rnd(ks[1], (1, GAT_HIDDEN), 0.1)
    gat1_adst = rnd(ks[2], (1, GAT_HIDDEN), 0.1)
    gat1_b = rnd(ks[3], (1, GAT_HIDDEN), 0.05)
    gat2_asrc = rnd(ks[5], (1, GGC_OUT), 0.1)
    gat2_adst = rnd(ks[6], (1, GGC_OUT), 0.1)
    gat2_b = rnd(ks[7], (1, GGC_OUT), 0.05)

    conv1_w = rnd(ks[8], (C1 * K,), 0.3)         # [out, in=1, tap] row-major
    conv1_b = rnd(ks[9], (C1,), 0.05)
    conv2_w = rnd(ks[10], (C2 * C1 * K,), 0.3)   # [out, in, tap] row-major
    conv2_b = rnd(ks[11], (C2,), 0.05)
    fc1_w = rnd(ks[12], (FC1_FEATURES,), 0.2)    # Linear(24, 1)
    fc2_w = rnd(ks[13], (FC2_FEATURES,), 0.2)    # Linear(16, 1)
    fc_b = rnd(ks[14], (2,), 0.05)

    # fused block-diagonal fc weight: row 0 -> fc1 over z_flat, row 1 -> fc2 over y_flat
    fc_w = jnp.zeros((2, FC1_FEATURES + FC2_FEATURES), jnp.float32)
    fc_w = fc_w.at[0, :FC1_FEATURES].set(fc1_w)
    fc_w = fc_w.at[1, FC1_FEATURES:].set(fc2_w)

    conv_scalars = jnp.concatenate(
        [conv1_w, conv1_b, conv2_w, conv2_b, fc_b]).astype(jnp.float32)
    assert conv_scalars.shape == (N_SCALARS,)

    return {
        # GATConv(emb_size, 256)
        'gat1_w':   rnd(ks[0], (EMB_SIZE, GAT_HIDDEN), 0.2),
        'gat1_aux': jnp.concatenate([gat1_asrc, gat1_adst, gat1_b], axis=0),  # (3, 256)
        # GATConv(256, GGC_OUT)
        'gat2_w':   rnd(ks[4], (GAT_HIDDEN, GGC_OUT), 0.1),
        'gat2_aux': jnp.concatenate([gat2_asrc, gat2_adst, gat2_b], axis=0),  # (3, 32)
        # fused fc + packed conv scalars
        'fc_w':     fc_w,                                                     # (2, 40)
        'conv_scalars': conv_scalars,                                         # (44,)
    }


if __name__ == "__main__":
    key = jax.random.PRNGKey(0)
    kx, kp = jax.random.split(key)

    # data.x : (N, emb_size)
    x = jax.random.normal(kx, (N_NODES, EMB_SIZE)).astype(jnp.float32)

    # edge_index: bidirectional ring over N_NODES nodes (built as dense adjacency).
    src = jnp.arange(N_NODES)
    dst = (src + 1) % N_NODES
    edge_src = jnp.concatenate([src, dst])
    edge_dst = jnp.concatenate([dst, src])
    adj = jnp.zeros((N_NODES, N_NODES), jnp.float32)
    adj = adj.at[edge_dst, edge_src].set(1.0)                # adj[i, j]=1 <=> edge j -> i
    diag = jnp.arange(N_NODES)
    adj = adj.at[diag, diag].set(1.0)                        # GATConv add_self_loops=True

    params = init_params(kp)

    out = jax.jit(net_forward)(x, adj, params)
    out = jax.block_until_ready(out)
    assert out.shape == (N_NODES,)
    assert bool(jnp.all(jnp.isfinite(out)))
    assert bool(jnp.all((out >= 0.0) & (out <= 1.0)))        # sigmoid output
    print("KERNEL_OK")
</pallas_src>

<mosaic_0001>
module attributes {stable_mosaic.version = 11 : i64} {
  func.func @_net_kernel(%arg0: memref<8x16xf32, #tpu.memory_space<vmem>>, %arg1: memref<8x8xf32, #tpu.memory_space<vmem>>, %arg2: memref<16x256xf32, #tpu.memory_space<vmem>>, %arg3: memref<3x256xf32, #tpu.memory_space<vmem>>, %arg4: memref<256x32xf32, #tpu.memory_space<vmem>>, %arg5: memref<3x32xf32, #tpu.memory_space<vmem>>, %arg6: memref<2x40xf32, #tpu.memory_space<vmem>>, %arg7: memref<44xf32, #tpu.memory_space<smem>>, %arg8: memref<1x8xf32, #tpu.memory_space<vmem>>) attributes {dimension_semantics = [], scalar_prefetch = 0 : i64, scratch_operands = 0 : i64, tpu.core_type = #tpu.core_type<tc>} {
    %c0 = arith.constant 0 : index
    %c0_0 = arith.constant 0 : index
    %0 = vector.load %arg0[%c0, %c0_0] : memref<8x16xf32, #tpu.memory_space<vmem>>, vector<8x16xf32>
    %c0_1 = arith.constant 0 : index
    %c0_2 = arith.constant 0 : index
    %1 = vector.load %arg1[%c0_1, %c0_2] : memref<8x8xf32, #tpu.memory_space<vmem>>, vector<8x8xf32>
    %cst = arith.constant 5.000000e-01 : f32
    %2 = vector.broadcast %cst : f32 to vector<8x8xf32>
    %3 = arith.cmpf ogt, %1, %2 : vector<8x8xf32>
    %c0_3 = arith.constant 0 : index
    %c0_4 = arith.constant 0 : index
    %4 = vector.load %arg2[%c0_3, %c0_4] : memref<16x256xf32, #tpu.memory_space<vmem>>, vector<16x256xf32>
    %cst_5 = arith.constant dense<0.000000e+00> : vector<8x256xf32>
    %5 = tpu.matmul %0, %4, %cst_5 {dimension_numbers = #tpu.dot_dimension_numbers<[1], [0], [0], [1], [0, 0, 1, 1], [], []>} : vector<8x16xf32>, vector<16x256xf32>, vector<8x256xf32> -> vector<8x256xf32>
    %c0_6 = arith.constant 0 : index
    %c0_7 = arith.constant 0 : index
    %6 = vector.load %arg3[%c0_6, %c0_7] : memref<3x256xf32, #tpu.memory_space<vmem>>, vector<3x256xf32>
    %7 = vector.extract_strided_slice %6 {offsets = [0, 0], sizes = [1, 256], strides = [1, 1]} : vector<3x256xf32> to vector<1x256xf32>
    %cst_8 = arith.constant dense<0.000000e+00> : vector<1x8xf32>
    %8 = tpu.matmul %7, %5, %cst_8 {dimension_numbers = #tpu.dot_dimension_numbers<[1], [1], [0], [0], [0, 0, 1, 0], [], []>} : vector<1x256xf32>, vector<8x256xf32>, vector<1x8xf32> -> vector<1x8xf32>
    %9 = vector.extract_strided_slice %6 {offsets = [1, 0], sizes = [1, 256], strides = [1, 1]} : vector<3x256xf32> to vector<1x256xf32>
    %cst_9 = arith.constant dense<0.000000e+00> : vector<8x1xf32>
    %10 = tpu.matmul %5, %9, %cst_9 {dimension_numbers = #tpu.dot_dimension_numbers<[1], [1], [0], [0], [0, 0, 1, 0], [], []>} : vector<8x256xf32>, vector<1x256xf32>, vector<8x1xf32> -> vector<8x1xf32>
    %11 = vector.broadcast %10 : vector<8x1xf32> to vector<8x8xf32>
    %12 = vector.broadcast %8 : vector<1x8xf32> to vector<8x8xf32>
    %13 = arith.addf %11, %12 : vector<8x8xf32>
    %cst_10 = arith.constant 0.000000e+00 : f32
    %14 = vector.broadcast %cst_10 : f32 to vector<8x8xf32>
    %15 = arith.cmpf ogt, %13, %14 : vector<8x8xf32>
    %cst_11 = arith.constant 2.000000e-01 : f32
    %16 = vector.broadcast %cst_11 : f32 to vector<8x8xf32>
    %17 = arith.mulf %16, %13 : vector<8x8xf32>
    %18 = arith.select %15, %13, %17 : vector<8x8xi1>, vector<8x8xf32>
    %cst_12 = arith.constant -1.000000e+30 : f32
    %19 = vector.broadcast %cst_12 : f32 to vector<8x8xf32>
    %20 = arith.select %3, %18, %19 : vector<8x8xi1>, vector<8x8xf32>
    %cst_13 = arith.constant dense<0xFF800000> : vector<8xf32>
    %21 = vector.multi_reduction <maximumf>, %20, %cst_13 [1] : vector<8x8xf32> to vector<8xf32>
    %22 = vector.shape_cast %21 : vector<8xf32> to vector<8x1xf32>
    %23 = vector.broadcast %22 : vector<8x1xf32> to vector<8x8xf32>
    %24 = arith.subf %20, %23 : vector<8x8xf32>
    %25 = math.exp %24 : vector<8x8xf32>
    %cst_14 = arith.constant 0.000000e+00 : f32
    %26 = vector.broadcast %cst_14 : f32 to vector<8x8xf32>
    %27 = arith.select %3, %25, %26 : vector<8x8xi1>, vector<8x8xf32>
    %cst_15 = arith.constant dense<0.000000e+00> : vector<8xf32>
    %28 = vector.multi_reduction <add>, %27, %cst_15 [1] : vector<8x8xf32> to vector<8xf32>
    %29 = vector.shape_cast %28 : vector<8xf32> to vector<8x1xf32>
    %30 = vector.broadcast %29 : vector<8x1xf32> to vector<8x8xf32>
    %31 = arith.divf %27, %30 : vector<8x8xf32>
    %cst_16 = arith.constant dense<0.000000e+00> : vector<8x256xf32>
    %32 = tpu.matmul %31, %5, %cst_16 {dimension_numbers = #tpu.dot_dimension_numbers<[1], [0], [0], [1], [0, 0, 1, 1], [], []>} : vector<8x8xf32>, vector<8x256xf32>, vector<8x256xf32> -> vector<8x256xf32>
    %33 = vector.extract_strided_slice %6 {offsets = [2, 0], sizes = [1, 256], strides = [1, 1]} : vector<3x256xf32> to vector<1x256xf32>
    %34 = vector.broadcast %33 : vector<1x256xf32> to vector<8x256xf32>
    %35 = arith.addf %32, %34 : vector<8x256xf32>
    %cst_17 = arith.constant 0.000000e+00 : f32
    %36 = vector.broadcast %cst_17 : f32 to vector<8x256xf32>
    %37 = arith.maximumf %35, %36 : vector<8x256xf32>
    %c0_18 = arith.constant 0 : index
    %c0_19 = arith.constant 0 : index
    %38 = vector.load %arg4[%c0_18, %c0_19] : memref<256x32xf32, #tpu.memory_space<vmem>>, vector<256x32xf32>
    %cst_20 = arith.constant dense<0.000000e+00> : vector<8x32xf32>
    %39 = tpu.matmul %37, %38, %cst_20 {dimension_numbers = #tpu.dot_dimension_numbers<[1], [0], [0], [1], [0, 0, 1, 1], [], []>} : vector<8x256xf32>, vector<256x32xf32>, vector<8x32xf32> -> vector<8x32xf32>
    %c0_21 = arith.constant 0 : index
    %c0_22 = arith.constant 0 : index
    %40 = vector.load %arg5[%c0_21, %c0_22] : memref<3x32xf32, #tpu.memory_space<vmem>>, vector<3x32xf32>
    %41 = vector.extract_strided_slice %40 {offsets = [0, 0], sizes = [1, 32], strides = [1, 1]} : vector<3x32xf32> to vector<1x32xf32>
    %cst_23 = arith.constant dense<0.000000e+00> : vector<1x8xf32>
    %42 = tpu.matmul %41, %39, %cst_23 {dimension_numbers = #tpu.dot_dimension_numbers<[1], [1], [0], [0], [0, 0, 1, 0], [], []>} : vector<1x32xf32>, vector<8x32xf32>, vector<1x8xf32> -> vector<1x8xf32>
    %43 = vector.extract_strided_slice %40 {offsets = [1, 0], sizes = [1, 32], strides = [1, 1]} : vector<3x32xf32> to vector<1x32xf32>
    %cst_24 = arith.constant dense<0.000000e+00> : vector<8x1xf32>
    %44 = tpu.matmul %39, %43, %cst_24 {dimension_numbers = #tpu.dot_dimension_numbers<[1], [1], [0], [0], [0, 0, 1, 0], [], []>} : vector<8x32xf32>, vector<1x32xf32>, vector<8x1xf32> -> vector<8x1xf32>
    %45 = vector.broadcast %44 : vector<8x1xf32> to vector<8x8xf32>
    %46 = vector.broadcast %42 : vector<1x8xf32> to vector<8x8xf32>
    %47 = arith.addf %45, %46 : vector<8x8xf32>
    %cst_25 = arith.constant 0.000000e+00 : f32
    %48 = vector.broadcast %cst_25 : f32 to vector<8x8xf32>
    %49 = arith.cmpf ogt, %47, %48 : vector<8x8xf32>
    %cst_26 = arith.constant 2.000000e-01 : f32
    %50 = vector.broadcast %cst_26 : f32 to vector<8x8xf32>
    %51 = arith.mulf %50, %47 : vector<8x8xf32>
    %52 = arith.select %49, %47, %51 : vector<8x8xi1>, vector<8x8xf32>
    %cst_27 = arith.constant -1.000000e+30 : f32
    %53 = vector.broadcast %cst_27 : f32 to vector<8x8xf32>
    %54 = arith.select %3, %52, %53 : vector<8x8xi1>, vector<8x8xf32>
    %cst_28 = arith.constant dense<0xFF800000> : vector<8xf32>
    %55 = vector.multi_reduction <maximumf>, %54, %cst_28 [1] : vector<8x8xf32> to vector<8xf32>
    %56 = vector.shape_cast %55 : vector<8xf32> to vector<8x1xf32>
    %57 = vector.broadcast %56 : vector<8x1xf32> to vector<8x8xf32>
    %58 = arith.subf %54, %57 : vector<8x8xf32>
    %59 = math.exp %58 : vector<8x8xf32>
    %cst_29 = arith.constant 0.000000e+00 : f32
    %60 = vector.broadcast %cst_29 : f32 to vector<8x8xf32>
    %61 = arith.select %3, %59, %60 : vector<8x8xi1>, vector<8x8xf32>
    %cst_30 = arith.constant dense<0.000000e+00> : vector<8xf32>
    %62 = vector.multi_reduction <add>, %61, %cst_30 [1] : vector<8x8xf32> to vector<8xf32>
    %63 = vector.shape_cast %62 : vector<8xf32> to vector<8x1xf32>
    %64 = vector.broadcast %63 : vector<8x1xf32> to vector<8x8xf32>
    %65 = arith.divf %61, %64 : vector<8x8xf32>
    %cst_31 = arith.constant dense<0.000000e+00> : vector<8x32xf32>
    %66 = tpu.matmul %65, %39, %cst_31 {dimension_numbers = #tpu.dot_dimension_numbers<[1], [0], [0], [1], [0, 0, 1, 1], [], []>} : vector<8x8xf32>, vector<8x32xf32>, vector<8x32xf32> -> vector<8x32xf32>
    %67 = vector.extract_strided_slice %40 {offsets = [2, 0], sizes = [1, 32], strides = [1, 1]} : vector<3x32xf32> to vector<1x32xf32>
    %68 = vector.broadcast %67 : vector<1x32xf32> to vector<8x32xf32>
    %69 = arith.addf %66, %68 : vector<8x32xf32>
    %cst_32 = arith.constant 0.000000e+00 : f32
    %70 = vector.broadcast %cst_32 : f32 to vector<8x32xf32>
    %71 = arith.maximumf %69, %70 : vector<8x32xf32>
    %72 = tpu.concatenate %71, %0 in 1 : vector<8x32xf32>, vector<8x16xf32> -> vector<8x48xf32>
    %cst_33 = arith.constant 0.000000e+00 : f32
    %73 = vector.broadcast %cst_33 : f32 to vector<8x16xf32>
    %74 = tpu.concatenate %71, %73 in 1 : vector<8x32xf32>, vector<8x16xf32> -> vector<8x48xf32>
    %75 = tpu.concatenate %72, %74 in 0 : vector<8x48xf32>, vector<8x48xf32> -> vector<16x48xf32>
    %cst_34 = arith.constant 0.000000e+00 : f32
    %76 = vector.broadcast %cst_34 : f32 to vector<16x1xf32>
    %77 = vector.extract_strided_slice %75 {offsets = [0, 0], sizes = [16, 47], strides = [1, 1]} : vector<16x48xf32> to vector<16x47xf32>
    %78 = tpu.concatenate %76, %77 in 1 : vector<16x1xf32>, vector<16x47xf32> -> vector<16x48xf32>
    %79 = vector.extract_strided_slice %75 {offsets = [0, 1], sizes = [16, 47], strides = [1, 1]} : vector<16x48xf32> to vector<16x47xf32>
    %80 = tpu.concatenate %79, %76 in 1 : vector<16x47xf32>, vector<16x1xf32> -> vector<16x48xf32>
    %c0_35 = arith.constant 0 : index
    %81 = memref.load %arg7[%c0_35] : memref<44xf32, #tpu.memory_space<smem>>
    %82 = vector.broadcast %81 : f32 to vector<16x48xf32>
    %83 = arith.mulf %82, %78 : vector<16x48xf32>
    %c1 = arith.constant 1 : index
    %84 = memref.load %arg7[%c1] : memref<44xf32, #tpu.memory_space<smem>>
    %85 = vector.broadcast %84 : f32 to vector<16x48xf32>
    %86 = arith.mulf %85, %75 : vector<16x48xf32>
    %87 = arith.addf %83, %86 : vector<16x48xf32>
    %c2 = arith.constant 2 : index
    %88 = memref.load %arg7[%c2] : memref<44xf32, #tpu.memory_space<smem>>
    %89 = vector.broadcast %88 : f32 to vector<16x48xf32>
    %90 = arith.mulf %89, %80 : vector<16x48xf32>
    %c12 = arith.constant 12 : index
    %91 = memref.load %arg7[%c12] : memref<44xf32, #tpu.memory_space<smem>>
    %92 = vector.broadcast %91 : f32 to vector<16x48xf32>
    %93 = arith.addf %90, %92 : vector<16x48xf32>
    %94 = arith.addf %87, %93 : vector<16x48xf32>
    %cst_36 = arith.constant 0.000000e+00 : f32
    %95 = vector.broadcast %cst_36 : f32 to vector<16x48xf32>
    %96 = arith.maximumf %94, %95 : vector<16x48xf32>
    %97 = vector.shape_cast %96 : vector<16x48xf32> to vector<16x24x2xf32>
    %cst_37 = arith.constant dense<0xFF800000> : vector<16x24xf32>
    %98 = vector.multi_reduction <maximumf>, %97, %cst_37 [2] : vector<16x24x2xf32> to vector<16x24xf32>
    %c3 = arith.constant 3 : index
    %99 = memref.load %arg7[%c3] : memref<44xf32, #tpu.memory_space<smem>>
    %100 = vector.broadcast %99 : f32 to vector<16x48xf32>
    %101 = arith.mulf %100, %78 : vector<16x48xf32>
    %c4 = arith.constant 4 : index
    %102 = memref.load %arg7[%c4] : memref<44xf32, #tpu.memory_space<smem>>
    %103 = vector.broadcast %102 : f32 to vector<16x48xf32>
    %104 = arith.mulf %103, %75 : vector<16x48xf32>
    %105 = arith.addf %101, %104 : vector<16x48xf32>
    %c5 = arith.constant 5 : index
    %106 = memref.load %arg7[%c5] : memref<44xf32, #tpu.memory_space<smem>>
    %107 = vector.broadcast %106 : f32 to vector<16x48xf32>
    %108 = arith.mulf %107, %80 : vector<16x48xf32>
    %c13 = arith.constant 13 : index
    %109 = memref.load %arg7[%c13] : memref<44xf32, #tpu.memory_space<smem>>
    %110 = vector.broadcast %109 : f32 to vector<16x48xf32>
    %111 = arith.addf %108, %110 : vector<16x48xf32>
    %112 = arith.addf %105, %111 : vector<16x48xf32>
    %cst_38 = arith.constant 0.000000e+00 : f32
    %113 = vector.broadcast %cst_38 : f32 to vector<16x48xf32>
    %114 = arith.maximumf %112, %113 : vector<16x48xf32>
    %115 = vector.shape_cast %114 : vector<16x48xf32> to vector<16x24x2xf32>
    %cst_39 = arith.constant dense<0xFF800000> : vector<16x24xf32>
    %116 = vector.multi_reduction <maximumf>, %115, %cst_39 [2] : vector<16x24x2xf32> to vector<16x24xf32>
    %c6 = arith.constant 6 : index
    %117 = memref.load %arg7[%c6] : memref<44xf32, #tpu.memory_space<smem>>
    %118 = vector.broadcast %117 : f32 to vector<16x48xf32>
    %119 = arith.mulf %118, %78 : vector<16x48xf32>
    %c7 = arith.constant 7 : index
    %120 = memref.load %arg7[%c7] : memref<44xf32, #tpu.memory_space<smem>>
    %121 = vector.broadcast %120 : f32 to vector<16x48xf32>
    %122 = arith.mulf %121, %75 : vector<16x48xf32>
    %123 = arith.addf %119, %122 : vector<16x48xf32>
    %c8 = arith.constant 8 : index
    %124 = memref.load %arg7[%c8] : memref<44xf32, #tpu.memory_space<smem>>
    %125 = vector.broadcast %124 : f32 to vector<16x48xf32>
    %126 = arith.mulf %125, %80 : vector<16x48xf32>
    %c14 = arith.constant 14 : index
    %127 = memref.load %arg7[%c14] : memref<44xf32, #tpu.memory_space<smem>>
    %128 = vector.broadcast %127 : f32 to vector<16x48xf32>
    %129 = arith.addf %126, %128 : vector<16x48xf32>
    %130 = arith.addf %123, %129 : vector<16x48xf32>
    %cst_40 = arith.constant 0.000000e+00 : f32
    %131 = vector.broadcast %cst_40 : f32 to vector<16x48xf32>
    %132 = arith.maximumf %130, %131 : vector<16x48xf32>
    %133 = vector.shape_cast %132 : vector<16x48xf32> to vector<16x24x2xf32>
    %cst_41 = arith.constant dense<0xFF800000> : vector<16x24xf32>
    %134 = vector.multi_reduction <maximumf>, %133, %cst_41 [2] : vector<16x24x2xf32> to vector<16x24xf32>
    %c9 = arith.constant 9 : index
    %135 = memref.load %arg7[%c9] : memref<44xf32, #tpu.memory_space<smem>>
    %136 = vector.broadcast %135 : f32 to vector<16x48xf32>
    %137 = arith.mulf %136, %78 : vector<16x48xf32>
    %c10 = arith.constant 10 : index
    %138 = memref.load %arg7[%c10] : memref<44xf32, #tpu.memory_space<smem>>
    %139 = vector.broadcast %138 : f32 to vector<16x48xf32>
    %140 = arith.mulf %139, %75 : vector<16x48xf32>
    %141 = arith.addf %137, %140 : vector<16x48xf32>
    %c11 = arith.constant 11 : index
    %142 = memref.load %arg7[%c11] : memref<44xf32, #tpu.memory_space<smem>>
    %143 = vector.broadcast %142 : f32 to vector<16x48xf32>
    %144 = arith.mulf %143, %80 : vector<16x48xf32>
    %c15 = arith.constant 15 : index
    %145 = memref.load %arg7[%c15] : memref<44xf32, #tpu.memory_space<smem>>
    %146 = vector.broadcast %145 : f32 to vector<16x48xf32>
    %147 = arith.addf %144, %146 : vector<16x48xf32>
    %148 = arith.addf %141, %147 : vector<16x48xf32>
    %cst_42 = arith.constant 0.000000e+00 : f32
    %149 = vector.broadcast %cst_42 : f32 to vector<16x48xf32>
    %150 = arith.maximumf %148, %149 : vector<16x48xf32>
    %151 = vector.shape_cast %150 : vector<16x48xf32> to vector<16x24x2xf32>
    %cst_43 = arith.constant dense<0xFF800000> : vector<16x24xf32>
    %152 = vector.multi_reduction <maximumf>, %151, %cst_43 [2] : vector<16x24x2xf32> to vector<16x24xf32>
    %153 = tpu.iota {dimensions = array<i32: 0>} : vector<16x24xi32>
    %154 = tpu.iota {dimensions = array<i32: 1>} : vector<16x24xi32>
    %c8_i32 = arith.constant 8 : i32
    %155 = vector.broadcast %c8_i32 : i32 to vector<16x24xi32>
    %156 = arith.cmpi sge, %153, %155 : vector<16x24xi32>
    %c16_i32 = arith.constant 16 : i32
    %157 = vector.broadcast %c16_i32 : i32 to vector<16x24xi32>
    %158 = arith.cmpi sge, %154, %157 : vector<16x24xi32>
    %159 = arith.andi %156, %158 : vector<16x24xi1>
    %cst_44 = arith.constant dense<true> : vector<16x24xi1>
    %160 = arith.xori %159, %cst_44 : vector<16x24xi1>
    %cst_45 = arith.constant 0.000000e+00 : f32
    %161 = vector.broadcast %cst_45 : f32 to vector<16x24xf32>
    %162 = arith.select %160, %98, %161 : vector<16x24xi1>, vector<16x24xf32>
    %cst_46 = arith.constant 0.000000e+00 : f32
    %163 = vector.broadcast %cst_46 : f32 to vector<16x24xf32>
    %164 = arith.select %160, %116, %163 : vector<16x24xi1>, vector<16x24xf32>
    %cst_47 = arith.constant 0.000000e+00 : f32
    %165 = vector.broadcast %cst_47 : f32 to vector<16x24xf32>
    %166 = arith.select %160, %134, %165 : vector<16x24xi1>, vector<16x24xf32>
    %cst_48 = arith.constant 0.000000e+00 : f32
    %167 = vector.broadcast %cst_48 : f32 to vector<16x24xf32>
    %168 = arith.select %160, %152, %167 : vector<16x24xi1>, vector<16x24xf32>
    %cst_49 = arith.constant 0.000000e+00 : f32
    %169 = vector.broadcast %cst_49 : f32 to vector<16x1xf32>
    %170 = vector.extract_strided_slice %162 {offsets = [0, 0], sizes = [16, 23], strides = [1, 1]} : vector<16x24xf32> to vector<16x23xf32>
    %171 = tpu.concatenate %169, %170 in 1 : vector<16x1xf32>, vector<16x23xf32> -> vector<16x24xf32>
    %172 = vector.extract_strided_slice %162 {offsets = [0, 1], sizes = [16, 23], strides = [1, 1]} : vector<16x24xf32> to vector<16x23xf32>
    %173 = tpu.concatenate %172, %169 in 1 : vector<16x23xf32>, vector<16x1xf32> -> vector<16x24xf32>
    %cst_50 = arith.constant 0.000000e+00 : f32
    %174 = vector.broadcast %cst_50 : f32 to vector<16x1xf32>
    %175 = vector.extract_strided_slice %164 {offsets = [0, 0], sizes = [16, 23], strides = [1, 1]} : vector<16x24xf32> to vector<16x23xf32>
    %176 = tpu.concatenate %174, %175 in 1 : vector<16x1xf32>, vector<16x23xf32> -> vector<16x24xf32>
    %177 = vector.extract_strided_slice %164 {offsets = [0, 1], sizes = [16, 23], strides = [1, 1]} : vector<16x24xf32> to vector<16x23xf32>
    %178 = tpu.concatenate %177, %174 in 1 : vector<16x23xf32>, vector<16x1xf32> -> vector<16x24xf32>
    %cst_51 = arith.constant 0.000000e+00 : f32
    %179 = vector.broadcast %cst_51 : f32 to vector<16x1xf32>
    %180 = vector.extract_strided_slice %166 {offsets = [0, 0], sizes = [16, 23], strides = [1, 1]} : vector<16x24xf32> to vector<16x23xf32>
    %181 = tpu.concatenate %179, %180 in 1 : vector<16x1xf32>, vector<16x23xf32> -> vector<16x24xf32>
    %182 = vector.extract_strided_slice %166 {offsets = [0, 1], sizes = [16, 23], strides = [1, 1]} : vector<16x24xf32> to vector<16x23xf32>
    %183 = tpu.concatenate %182, %179 in 1 : vector<16x23xf32>, vector<16x1xf32> -> vector<16x24xf32>
    %cst_52 = arith.constant 0.000000e+00 : f32
    %184 = vector.broadcast %cst_52 : f32 to vector<16x1xf32>
    %185 = vector.extract_strided_slice %168 {offsets = [0, 0], sizes = [16, 23], strides = [1, 1]} : vector<16x24xf32> to vector<16x23xf32>
    %186 = tpu.concatenate %184, %185 in 1 : vector<16x1xf32>, vector<16x23xf32> -> vector<16x24xf32>
    %187 = vector.extract_strided_slice %168 {offsets = [0, 1], sizes = [16, 23], strides = [1, 1]} : vector<16x24xf32> to vector<16x23xf32>
    %188 = tpu.concatenate %187, %184 in 1 : vector<16x23xf32>, vector<16x1xf32> -> vector<16x24xf32>
    %c16 = arith.constant 16 : index
    %189 = memref.load %arg7[%c16] : memref<44xf32, #tpu.memory_space<smem>>
    %190 = vector.broadcast %189 : f32 to vector<16x24xf32>
    %191 = arith.mulf %190, %171 : vector<16x24xf32>
    %c17 = arith.constant 17 : index
    %192 = memref.load %arg7[%c17] : memref<44xf32, #tpu.memory_space<smem>>
    %193 = vector.broadcast %192 : f32 to vector<16x24xf32>
    %194 = arith.mulf %193, %162 : vector<16x24xf32>
    %c18 = arith.constant 18 : index
    %195 = memref.load %arg7[%c18] : memref<44xf32, #tpu.memory_space<smem>>
    %196 = vector.broadcast %195 : f32 to vector<16x24xf32>
    %197 = arith.mulf %196, %173 : vector<16x24xf32>
    %c19 = arith.constant 19 : index
    %198 = memref.load %arg7[%c19] : memref<44xf32, #tpu.memory_space<smem>>
    %199 = vector.broadcast %198 : f32 to vector<16x24xf32>
    %200 = arith.mulf %199, %176 : vector<16x24xf32>
    %c20 = arith.constant 20 : index
    %201 = memref.load %arg7[%c20] : memref<44xf32, #tpu.memory_space<smem>>
    %202 = vector.broadcast %201 : f32 to vector<16x24xf32>
    %203 = arith.mulf %202, %164 : vector<16x24xf32>
    %c21 = arith.constant 21 : index
    %204 = memref.load %arg7[%c21] : memref<44xf32, #tpu.memory_space<smem>>
    %205 = vector.broadcast %204 : f32 to vector<16x24xf32>
    %206 = arith.mulf %205, %178 : vector<16x24xf32>
    %c22 = arith.constant 22 : index
    %207 = memref.load %arg7[%c22] : memref<44xf32, #tpu.memory_space<smem>>
    %208 = vector.broadcast %207 : f32 to vector<16x24xf32>
    %209 = arith.mulf %208, %181 : vector<16x24xf32>
    %c23 = arith.constant 23 : index
    %210 = memref.load %arg7[%c23] : memref<44xf32, #tpu.memory_space<smem>>
    %211 = vector.broadcast %210 : f32 to vector<16x24xf32>
    %212 = arith.mulf %211, %166 : vector<16x24xf32>
    %c24 = arith.constant 24 : index
    %213 = memref.load %arg7[%c24] : memref<44xf32, #tpu.memory_space<smem>>
    %214 = vector.broadcast %213 : f32 to vector<16x24xf32>
    %215 = arith.mulf %214, %183 : vector<16x24xf32>
    %c25 = arith.constant 25 : index
    %216 = memref.load %arg7[%c25] : memref<44xf32, #tpu.memory_space<smem>>
    %217 = vector.broadcast %216 : f32 to vector<16x24xf32>
    %218 = arith.mulf %217, %186 : vector<16x24xf32>
    %c26 = arith.constant 26 : index
    %219 = memref.load %arg7[%c26] : memref<44xf32, #tpu.memory_space<smem>>
    %220 = vector.broadcast %219 : f32 to vector<16x24xf32>
    %221 = arith.mulf %220, %168 : vector<16x24xf32>
    %c27 = arith.constant 27 : index
    %222 = memref.load %arg7[%c27] : memref<44xf32, #tpu.memory_space<smem>>
    %223 = vector.broadcast %222 : f32 to vector<16x24xf32>
    %224 = arith.mulf %223, %188 : vector<16x24xf32>
    %225 = arith.addf %191, %194 : vector<16x24xf32>
    %226 = arith.addf %197, %200 : vector<16x24xf32>
    %227 = arith.addf %203, %206 : vector<16x24xf32>
    %228 = arith.addf %209, %212 : vector<16x24xf32>
    %229 = arith.addf %215, %218 : vector<16x24xf32>
    %230 = arith.addf %221, %224 : vector<16x24xf32>
    %231 = arith.addf %225, %226 : vector<16x24xf32>
    %232 = arith.addf %227, %228 : vector<16x24xf32>
    %233 = arith.addf %229, %230 : vector<16x24xf32>
    %234 = arith.addf %231, %232 : vector<16x24xf32>
    %235 = arith.addf %234, %233 : vector<16x24xf32>
    %c40 = arith.constant 40 : index
    %236 = memref.load %arg7[%c40] : memref<44xf32, #tpu.memory_space<smem>>
    %237 = vector.broadcast %236 : f32 to vector<16x24xf32>
    %238 = arith.addf %235, %237 : vector<16x24xf32>
    %239 = vector.shape_cast %238 : vector<16x24xf32> to vector<16x12x2xf32>
    %cst_53 = arith.constant dense<0xFF800000> : vector<16x12xf32>
    %240 = vector.multi_reduction <maximumf>, %239, %cst_53 [2] : vector<16x12x2xf32> to vector<16x12xf32>
    %c28 = arith.constant 28 : index
    %241 = memref.load %arg7[%c28] : memref<44xf32, #tpu.memory_space<smem>>
    %242 = vector.broadcast %241 : f32 to vector<16x24xf32>
    %243 = arith.mulf %242, %171 : vector<16x24xf32>
    %c29 = arith.constant 29 : index
    %244 = memref.load %arg7[%c29] : memref<44xf32, #tpu.memory_space<smem>>
    %245 = vector.broadcast %244 : f32 to vector<16x24xf32>
    %246 = arith.mulf %245, %162 : vector<16x24xf32>
    %c30 = arith.constant 30 : index
    %247 = memref.load %arg7[%c30] : memref<44xf32, #tpu.memory_space<smem>>
    %248 = vector.broadcast %247 : f32 to vector<16x24xf32>
    %249 = arith.mulf %248, %173 : vector<16x24xf32>
    %c31 = arith.constant 31 : index
    %250 = memref.load %arg7[%c31] : memref<44xf32, #tpu.memory_space<smem>>
    %251 = vector.broadcast %250 : f32 to vector<16x24xf32>
    %252 = arith.mulf %251, %176 : vector<16x24xf32>
    %c32 = arith.constant 32 : index
    %253 = memref.load %arg7[%c32] : memref<44xf32, #tpu.memory_space<smem>>
    %254 = vector.broadcast %253 : f32 to vector<16x24xf32>
    %255 = arith.mulf %254, %164 : vector<16x24xf32>
    %c33 = arith.constant 33 : index
    %256 = memref.load %arg7[%c33] : memref<44xf32, #tpu.memory_space<smem>>
    %257 = vector.broadcast %256 : f32 to vector<16x24xf32>
    %258 = arith.mulf %257, %178 : vector<16x24xf32>
    %c34 = arith.constant 34 : index
    %259 = memref.load %arg7[%c34] : memref<44xf32, #tpu.memory_space<smem>>
    %260 = vector.broadcast %259 : f32 to vector<16x24xf32>
    %261 = arith.mulf %260, %181 : vector<16x24xf32>
    %c35 = arith.constant 35 : index
    %262 = memref.load %arg7[%c35] : memref<44xf32, #tpu.memory_space<smem>>
    %263 = vector.broadcast %262 : f32 to vector<16x24xf32>
    %264 = arith.mulf %263, %166 : vector<16x24xf32>
    %c36 = arith.constant 36 : index
    %265 = memref.load %arg7[%c36] : memref<44xf32, #tpu.memory_space<smem>>
    %266 = vector.broadcast %265 : f32 to vector<16x24xf32>
    %267 = arith.mulf %266, %183 : vector<16x24xf32>
    %c37 = arith.constant 37 : index
    %268 = memref.load %arg7[%c37] : memref<44xf32, #tpu.memory_space<smem>>
    %269 = vector.broadcast %268 : f32 to vector<16x24xf32>
    %270 = arith.mulf %269, %186 : vector<16x24xf32>
    %c38 = arith.constant 38 : index
    %271 = memref.load %arg7[%c38] : memref<44xf32, #tpu.memory_space<smem>>
    %272 = vector.broadcast %271 : f32 to vector<16x24xf32>
    %273 = arith.mulf %272, %168 : vector<16x24xf32>
    %c39 = arith.constant 39 : index
    %274 = memref.load %arg7[%c39] : memref<44xf32, #tpu.memory_space<smem>>
    %275 = vector.broadcast %274 : f32 to vector<16x24xf32>
    %276 = arith.mulf %275, %188 : vector<16x24xf32>
    %277 = arith.addf %243, %246 : vector<16x24xf32>
    %278 = arith.addf %249, %252 : vector<16x24xf32>
    %279 = arith.addf %255, %258 : vector<16x24xf32>
    %280 = arith.addf %261, %264 : vector<16x24xf32>
    %281 = arith.addf %267, %270 : vector<16x24xf32>
    %282 = arith.addf %273, %276 : vector<16x24xf32>
    %283 = arith.addf %277, %278 : vector<16x24xf32>
    %284 = arith.addf %279, %280 : vector<16x24xf32>
    %285 = arith.addf %281, %282 : vector<16x24xf32>
    %286 = arith.addf %283, %284 : vector<16x24xf32>
    %287 = arith.addf %286, %285 : vector<16x24xf32>
    %c41 = arith.constant 41 : index
    %288 = memref.load %arg7[%c41] : memref<44xf32, #tpu.memory_space<smem>>
    %289 = vector.broadcast %288 : f32 to vector<16x24xf32>
    %290 = arith.addf %287, %289 : vector<16x24xf32>
    %291 = vector.shape_cast %290 : vector<16x24xf32> to vector<16x12x2xf32>
    %cst_54 = arith.constant dense<0xFF800000> : vector<16x12xf32>
    %292 = vector.multi_reduction <maximumf>, %291, %cst_54 [2] : vector<16x12x2xf32> to vector<16x12xf32>
    %293 = vector.extract_strided_slice %240 {offsets = [0, 0], sizes = [8, 12], strides = [1, 1]} : vector<16x12xf32> to vector<8x12xf32>
    %294 = vector.extract_strided_slice %292 {offsets = [0, 0], sizes = [8, 12], strides = [1, 1]} : vector<16x12xf32> to vector<8x12xf32>
    %295 = tpu.concatenate %293, %294 in 1 : vector<8x12xf32>, vector<8x12xf32> -> vector<8x24xf32>
    %296 = vector.extract_strided_slice %240 {offsets = [8, 0], sizes = [8, 8], strides = [1, 1]} : vector<16x12xf32> to vector<8x8xf32>
    %297 = vector.extract_strided_slice %292 {offsets = [8, 0], sizes = [8, 8], strides = [1, 1]} : vector<16x12xf32> to vector<8x8xf32>
    %298 = tpu.concatenate %296, %297 in 1 : vector<8x8xf32>, vector<8x8xf32> -> vector<8x16xf32>
    %299 = tpu.concatenate %295, %298 in 1 : vector<8x24xf32>, vector<8x16xf32> -> vector<8x40xf32>
    %c0_55 = arith.constant 0 : index
    %c0_56 = arith.constant 0 : index
    %300 = vector.load %arg6[%c0_55, %c0_56] : memref<2x40xf32, #tpu.memory_space<vmem>>, vector<2x40xf32>
    %cst_57 = arith.constant dense<0.000000e+00> : vector<2x8xf32>
    %301 = tpu.matmul %300, %299, %cst_57 {dimension_numbers = #tpu.dot_dimension_numbers<[1], [1], [0], [0], [0, 0, 1, 0], [], []>} : vector<2x40xf32>, vector<8x40xf32>, vector<2x8xf32> -> vector<2x8xf32>
    %302 = vector.extract_strided_slice %301 {offsets = [0, 0], sizes = [1, 8], strides = [1, 1]} : vector<2x8xf32> to vector<1x8xf32>
    %c42 = arith.constant 42 : index
    %303 = memref.load %arg7[%c42] : memref<44xf32, #tpu.memory_space<smem>>
    %304 = vector.broadcast %303 : f32 to vector<1x8xf32>
    %305 = arith.addf %302, %304 : vector<1x8xf32>
    %306 = vector.extract_strided_slice %301 {offsets = [1, 0], sizes = [1, 8], strides = [1, 1]} : vector<2x8xf32> to vector<1x8xf32>
    %c43 = arith.constant 43 : index
    %307 = memref.load %arg7[%c43] : memref<44xf32, #tpu.memory_space<smem>>
    %308 = vector.broadcast %307 : f32 to vector<1x8xf32>
    %309 = arith.addf %306, %308 : vector<1x8xf32>
    %310 = arith.mulf %305, %309 : vector<1x8xf32>
    %cst_58 = arith.constant 0.000000e+00 : f32
    %311 = vector.broadcast %cst_58 : f32 to vector<1x8xf32>
    %312 = arith.subf %311, %310 : vector<1x8xf32>
    %313 = math.exp %312 : vector<1x8xf32>
    %cst_59 = arith.constant 1.000000e+00 : f32
    %314 = vector.broadcast %cst_59 : f32 to vector<1x8xf32>
    %315 = arith.addf %314, %313 : vector<1x8xf32>
    %cst_60 = arith.constant 1.000000e+00 : f32
    %316 = vector.broadcast %cst_60 : f32 to vector<1x8xf32>
    %317 = arith.divf %316, %315 : vector<1x8xf32>
    %c0_61 = arith.constant 0 : index
    %c0_62 = arith.constant 0 : index
    %318 = vector.load %arg8[%c0_61, %c0_62] : memref<1x8xf32, #tpu.memory_space<vmem>>, vector<1x8xf32>
    tpu.vector_store %arg8[%c0_61, %c0_62], %317 {strides = array<i32>} : memref<1x8xf32, #tpu.memory_space<vmem>>, vector<1x8xf32>,
    return
  }
}

</mosaic_0001>

<llo_original>
// kernel: net_forward.1
$region0: #{net_forward.1}
  #allocation0 [shape = 'u32[]', space=smem, size = 0x4, offset = 0x4, fixed_abs, tag = 'smem constant byte address 0x4 - core index']
  #allocation1 [shape = 'u32[72,128]{1,0:T(1,128)}', space=vmem, size = 0x9000, scoped, tag = 'internal scratch']
  %s0 = inlined_call_operand.vmem [shape: f32[8,16], index: 0, kind: input, shape index: {}]
  %s1 = inlined_call_operand.vmem [shape: f32[8,8], index: 1, kind: input, shape index: {}]
  %s2 = inlined_call_operand.vmem [shape: f32[16,256], index: 2, kind: input, shape index: {}]
  %s3 = inlined_call_operand.vmem [shape: f32[3,256], index: 3, kind: input, shape index: {}]
  %s4 = inlined_call_operand.vmem [shape: f32[256,32], index: 4, kind: input, shape index: {}]
  %s5 = inlined_call_operand.vmem [shape: f32[3,32], index: 5, kind: input, shape index: {}]
  %s6 = inlined_call_operand.vmem [shape: f32[2,40], index: 6, kind: input, shape index: {}]
  %s7 = inlined_call_operand.vmem [shape: f32[44], index: 7, kind: input, shape index: {}]
  %s8 = inlined_call_operand.hbm [shape: f32[1,8], index: 8, kind: output, shape index: {}]
  %s9 = sld [smem:[#allocation0]]
  $region46: #{net_forward.1} parent=0
    _
  %s11 = ssub.s32 1, %s9
  %s12 = scalar_select 0, %s11, %s9
  $region1: #{net_forward.1} parent=0
    #allocation2 [shape = 'u8[512]{0}', space=smem, size = 0x200, scoped, tag = 'input window, operand 7, single buffered']
    #allocation3 [shape = 's32[1]{0}', space=sflag, size = 0x4, scoped, tag = 'scoped memory for net_forward.1']
    #allocation4 [shape = 's32[1]{0}', space=sflag, size = 0x4, scoped, tag = 'scoped memory for net_forward.1']
    #allocation5 [shape = 'u8[512]{0}', space=vmem, size = 0x400, scoped, tag = 'output window, operand 0, single buffered']
    %13 = vsyncpa [#allocation4], 0
    %14 = vsyncpa [#allocation3], 0
    // Predicated region
    $region2: #{net_forward.1} parent=1 // pred_check
      _
    $region3: #{net_forward.1} parent=1 // pred_check_branch
      %16 = sbr.rel (0) target = $region5
    $region4: #{net_forward.1} parent=1 // pred_region
      _
    $region5: #{net_forward.1} parent=1 // pred_fallthru
      _
    // Predicated region
    $region6: #{net_forward.1} parent=1 // pred_check
      _
    $region7: #{net_forward.1} parent=1 // pred_check_branch
      %18 = sbr.rel (0) target = $region9
    $region8: #{net_forward.1} parent=1 // pred_region
      _
    $region9: #{net_forward.1} parent=1 // pred_fallthru
      _
    // Predicated region
    $region10: #{net_forward.1} parent=1 // pred_check
      _
    $region11: #{net_forward.1} parent=1 // pred_check_branch
      %20 = sbr.rel (0) target = $region13
    $region12: #{net_forward.1} parent=1 // pred_region
      _
    $region13: #{net_forward.1} parent=1 // pred_fallthru
      _
    // Predicated region
    $region14: #{net_forward.1} parent=1 // pred_check
      _
    $region15: #{net_forward.1} parent=1 // pred_check_branch
      %22 = sbr.rel (0) target = $region17
    $region16: #{net_forward.1} parent=1 // pred_region
      _
    $region17: #{net_forward.1} parent=1 // pred_fallthru
      _
    // Predicated region
    $region18: #{net_forward.1} parent=1 // pred_check
      _
    $region19: #{net_forward.1} parent=1 // pred_check_branch
      %24 = sbr.rel (0) target = $region21
    $region20: #{net_forward.1} parent=1 // pred_region
      _
    $region21: #{net_forward.1} parent=1 // pred_fallthru
      _
    // Predicated region
    $region22: #{net_forward.1} parent=1 // pred_check
      _
    $region23: #{net_forward.1} parent=1 // pred_check_branch
      %26 = sbr.rel (0) target = $region25
    $region24: #{net_forward.1} parent=1 // pred_region
      _
    $region25: #{net_forward.1} parent=1 // pred_fallthru
      _
    // Predicated region
    $region26: #{net_forward.1} parent=1 // pred_check
      _
    $region27: #{net_forward.1} parent=1 // pred_check_branch
      %28 = sbr.rel (0) target = $region29
    $region28: #{net_forward.1} parent=1 // pred_region
      _
    $region29: #{net_forward.1} parent=1 // pred_fallthru
      _
    // Predicated region
    $region30: #{net_forward.1} parent=1 // pred_check
      _
    $region31: #{net_forward.1} parent=1 // pred_check_branch
      %30 = sbr.rel (0) target = $region33
    $region32: #{net_forward.1} parent=1 // pred_region
      %32 = vsyncadd [#allocation4], 0
      %s34 = sshll.u32 %s7, 4
      %s35 = int_to_ptr.vmem [resolvable:$true] %s34
      %37 = dma.vmem_to_smem %s35, 16, [#allocation2], [#allocation4]
    $region33: #{net_forward.1} parent=1 // pred_fallthru
      _
    // Predicated region
    $region34: #{net_forward.1} parent=1 // pred_check
      _
    $region35: #{net_forward.1} parent=1 // pred_check_branch
      %39 = sbr.rel (0) target = $region37
    $region36: #{net_forward.1} parent=1 // pred_region
      %41 = dma.done [#allocation4], 16
    $region37: #{net_forward.1} parent=1 // pred_fallthru
      _
    %42 = sfence
    %v43 = vld [vmem:[%s0] sm:$0xff]
    %v44 = vld [vmem:[%s1] sm:$0xff]
    %vm45 = vcmp.gt.f32.partialorder %v44, 0.5
    %v46 = vld [vmem:[%s2] sm:$0xff]
    %v47 = vld [vmem:[%s2 + $0x8] sm:$0xff]
    %v48 = vld [vmem:[%s2 + $0x10] sm:$0xff]
    %v49 = vld [vmem:[%s2 + $0x18] sm:$0xff]
    %vm50 = vcmask 130048
    %v52 = vsel %vm50, %v43, 0
    %54 = vmatpush.msra.mxu0 0.0
    %55 = vmatpush.msra.mxu0 0.0
    %56 = vmatpush.msra.mxu0 0.0
    %57 = vmatpush.msra.mxu0 0.0
    %58 = vmatpush.msra.mxu0 0.0
    %59 = vmatpush.msra.mxu0 0.0
    %60 = vmatpush.msra.mxu0 0.0
    %61 = vmatpush.msra.mxu0 0.0
    %62 = vmatpush.msra.mxu0 0.0
    %63 = vmatpush.msra.mxu0 0.0
    %64 = vmatpush.msra.mxu0 0.0
    %65 = vmatpush.msra.mxu0 0.0
    %66 = vmatpush.msra.mxu0 0.0
    %67 = vmatpush.msra.mxu0 0.0
    %68 = vmatpush.msra.mxu0 %v48
    %69 = vmatpush.msra.mxu0 %v46
    %70 = vmatmul.f32.gmra.mxu0 %v52
    %v71 = vpop.f32.mrf.mxu0
    %v72 = vadd.f32 0.0, %v71
    %73 = vdwg.mxu0
    %74 = vmatpush.msra.mxu0 0.0
    %75 = vmatpush.msra.mxu0 0.0
    %76 = vmatpush.msra.mxu0 0.0
    %77 = vmatpush.msra.mxu0 0.0
    %78 = vmatpush.msra.mxu0 0.0
    %79 = vmatpush.msra.mxu0 0.0
    %80 = vmatpush.msra.mxu0 0.0
    %81 = vmatpush.msra.mxu0 0.0
    %82 = vmatpush.msra.mxu0 0.0
    %83 = vmatpush.msra.mxu0 0.0
    %84 = vmatpush.msra.mxu0 0.0
    %85 = vmatpush.msra.mxu0 0.0
    %86 = vmatpush.msra.mxu0 0.0
    %87 = vmatpush.msra.mxu0 0.0
    %88 = vmatpush.msra.mxu0 %v49
    %89 = vmatpush.msra.mxu0 %v47
    %90 = vmatmul.f32.gmra.mxu0 %v52
    %v91 = vpop.f32.mrf.mxu0
    %v92 = vadd.f32 0.0, %v91
    %93 = vdwg.mxu0
    %v94 = vld [vmem:[%s3] sm:$0x77]
    %v96 = vperm.slane %v94, 0
    %v97 = vperm.slane %v94, 4
    %100 = vmatpush.xpose.msra.mxu0 0.0
    %101 = vmatpush.xpose.msra.mxu0 0.0
    %102 = vmatpush.xpose.msra.mxu0 0.0
    %103 = vmatpush.xpose.msra.mxu0 0.0
    %104 = vmatpush.xpose.msra.mxu0 0.0
    %105 = vmatpush.xpose.msra.mxu0 0.0
    %106 = vmatpush.xpose.msra.mxu0 0.0
    %107 = vmatpush.xpose.msra.mxu0 0.0
    %108 = vmatpush.xpose.msra.mxu0 0.0
    %109 = vmatpush.xpose.msra.mxu0 0.0
    %110 = vmatpush.xpose.msra.mxu0 0.0
    %111 = vmatpush.xpose.msra.mxu0 0.0
    %112 = vmatpush.xpose.msra.mxu0 0.0
    %113 = vmatpush.xpose.msra.mxu0 0.0
    %114 = vmatpush.xpose.msra.mxu0 0.0
    %115 = vmatpush.xpose.msra.mxu0 %v72
    %116 = vmatmul.f32.gmra.mxu0 %v96
    %v117 = vpop.f32.mrf.mxu0
    %v118 = vadd.f32 0.0, %v117
    %119 = vdwg.mxu0
    %120 = vmatpush.xpose.msra.mxu0 0.0
    %121 = vmatpush.xpose.msra.mxu0 0.0
    %122 = vmatpush.xpose.msra.mxu0 0.0
    %123 = vmatpush.xpose.msra.mxu0 0.0
    %124 = vmatpush.xpose.msra.mxu0 0.0
    %125 = vmatpush.xpose.msra.mxu0 0.0
    %126 = vmatpush.xpose.msra.mxu0 0.0
    %127 = vmatpush.xpose.msra.mxu0 0.0
    %128 = vmatpush.xpose.msra.mxu0 0.0
    %129 = vmatpush.xpose.msra.mxu0 0.0
    %130 = vmatpush.xpose.msra.mxu0 0.0
    %131 = vmatpush.xpose.msra.mxu0 0.0
    %132 = vmatpush.xpose.msra.mxu0 0.0
    %133 = vmatpush.xpose.msra.mxu0 0.0
    %134 = vmatpush.xpose.msra.mxu0 0.0
    %135 = vmatpush.xpose.msra.mxu0 %v92
    %136 = vmatmul.f32.gmra.mxu0 %v97
    %v137 = vpop.f32.mrf.mxu0
    %v138 = vadd.f32 %v118, %v137
    %139 = vdwg.mxu0
    %v140 = vperm.slane %v94, 1
    %v141 = vperm.slane %v94, 5
    %v144 = vperm.slane %v140, 1
    %v145 = vperm.slane %v141, 1
    %v146 = vmul.f32 %v72, %v144
    %v147 = vmul.f32 %v92, %v145
    %v148 = vadd.f32 %v146, %v147
    %149 = vadd.xlane.f32.xlu0 %v148
    %v150 = vpop.xlane.xlu0 %149
    %v151 = vperm.slane %v138, 0
    %v152 = vadd.f32 %v150, %v151
    %vm153 = vcmp.gt.f32.partialorder %v152, 0.0
    %v154 = vmul.f32 %v152, 0.2
    %v155 = vsel %vm153, %v152, %v154
    %v156 = vsel %vm45, %v155, -1e+30
    %vm157 = vcmask 64512
    %v158 = vsel %vm157, %v156, -inf
    %159 = vmax.xlane.f32.xlu0 %v158
    %v160 = vpop.xlane.xlu0 %159
    %v161 = vsub.f32 %v156, %v160
    %v162 = vmul.f32 %v161, 1.442695
    %v163 = vpow.pop %v162
    %v164 = vsel %vm45, %v163, 0.0
    %v165 = vsel %vm157, %v164, 0.0
    %166 = vadd.xlane.f32.xlu0 %v165
    %v167 = vpop.xlane.xlu0 %166
    %v168 = vrcp.pop %v167
    %v169 = vmul.f32 %v167, %v168
    %v170 = vsub.f32 1.0, %v169
    %v171 = vmul.f32 %v168, %v170
    %v172 = vadd.f32 %v168, %v171
    %vm173 = vweird.f32 %v167
    %vm174 = vweird.f32 %v168
    %vm175 = vmor %vm173, %vm174
    %v176 = vsel %vm175, %v168, %v172
    %v177 = vand.u32 2147483647, %v167
    %vm178 = vcmp.eq.f32.partialorder %v177, 8.507059e+37
    %v179 = vand.u32 %v167, 2147483648
    %v180 = vor.u32 1.1754944e-38, %v179
    %v181 = vsel %vm178, %v180, %v176
    %v182 = vmul.f32 %v164, %v181
    %v183 = vperm.slane %v94, 2
    %v184 = vperm.slane %v94, 6
    %v187 = vperm.slane %v183, 2
    %v188 = vperm.slane %v184, 2
    %v190 = vsel %vm157, %v182, 0
    %192 = vmatpush.msra.mxu0 0.0
    %193 = vmatpush.msra.mxu0 0.0
    %194 = vmatpush.msra.mxu0 0.0
    %195 = vmatpush.msra.mxu0 0.0
    %196 = vmatpush.msra.mxu0 0.0
    %197 = vmatpush.msra.mxu0 0.0
    %198 = vmatpush.msra.mxu0 0.0
    %199 = vmatpush.msra.mxu0 0.0
    %200 = vmatpush.msra.mxu0 0.0
    %201 = vmatpush.msra.mxu0 0.0
    %202 = vmatpush.msra.mxu0 0.0
    %203 = vmatpush.msra.mxu0 0.0
    %204 = vmatpush.msra.mxu0 0.0
    %205 = vmatpush.msra.mxu0 0.0
    %206 = vmatpush.msra.mxu0 0.0
    %207 = vmatpush.msra.mxu0 %v72
    %208 = vmatmul.f32.gmra.mxu0 %v190
    %v209 = vpop.f32.mrf.mxu0
    %v210 = vadd.f32 %v187, %v209
    %211 = vdwg.mxu0
    %212 = vmatpush.msra.mxu0 0.0
    %213 = vmatpush.msra.mxu0 0.0
    %214 = vmatpush.msra.mxu0 0.0
    %215 = vmatpush.msra.mxu0 0.0
    %216 = vmatpush.msra.mxu0 0.0
    %217 = vmatpush.msra.mxu0 0.0
    %218 = vmatpush.msra.mxu0 0.0
    %219 = vmatpush.msra.mxu0 0.0
    %220 = vmatpush.msra.mxu0 0.0
    %221 = vmatpush.msra.mxu0 0.0
    %222 = vmatpush.msra.mxu0 0.0
    %223 = vmatpush.msra.mxu0 0.0
    %224 = vmatpush.msra.mxu0 0.0
    %225 = vmatpush.msra.mxu0 0.0
    %226 = vmatpush.msra.mxu0 0.0
    %227 = vmatpush.msra.mxu0 %v92
    %228 = vmatmul.f32.gmra.mxu0 %v190
    %v229 = vpop.f32.mrf.mxu0
    %v230 = vadd.f32 %v188, %v229
    %231 = vdwg.mxu0
    %v232 = vmax.f32 %v210, 0.0
    %v233 = vmax.f32 %v230, 0.0
    %v234 = vld [vmem:[%s4] sm:$0xff]
    %v235 = vld [vmem:[%s4 + $0x8] sm:$0xff]
    %v236 = vld [vmem:[%s4 + $0x10] sm:$0xff]
    %v237 = vld [vmem:[%s4 + $0x18] sm:$0xff]
    %v238 = vld [vmem:[%s4 + $0x20] sm:$0xff]
    %v239 = vld [vmem:[%s4 + $0x28] sm:$0xff]
    %v240 = vld [vmem:[%s4 + $0x30] sm:$0xff]
    %v241 = vld [vmem:[%s4 + $0x38] sm:$0xff]
    %v242 = vld [vmem:[%s4 + $0x40] sm:$0xff]
    %v243 = vld [vmem:[%s4 + $0x48] sm:$0xff]
    %v244 = vld [vmem:[%s4 + $0x50] sm:$0xff]
    %v245 = vld [vmem:[%s4 + $0x58] sm:$0xff]
    %v246 = vld [vmem:[%s4 + $0x60] sm:$0xff]
    %v247 = vld [vmem:[%s4 + $0x68] sm:$0xff]
    %v248 = vld [vmem:[%s4 + $0x70] sm:$0xff]
    %v249 = vld [vmem:[%s4 + $0x78] sm:$0xff]
    %v250 = vld [vmem:[%s4 + $0x80] sm:$0xff]
    %v251 = vld [vmem:[%s4 + $0x88] sm:$0xff]
    %v252 = vld [vmem:[%s4 + $0x90] sm:$0xff]
    %v253 = vld [vmem:[%s4 + $0x98] sm:$0xff]
    %v254 = vld [vmem:[%s4 + $0xa0] sm:$0xff]
    %v255 = vld [vmem:[%s4 + $0xa8] sm:$0xff]
    %v256 = vld [vmem:[%s4 + $0xb0] sm:$0xff]
    %v257 = vld [vmem:[%s4 + $0xb8] sm:$0xff]
    %v258 = vld [vmem:[%s4 + $0xc0] sm:$0xff]
    %v259 = vld [vmem:[%s4 + $0xc8] sm:$0xff]
    %v260 = vld [vmem:[%s4 + $0xd0] sm:$0xff]
    %v261 = vld [vmem:[%s4 + $0xd8] sm:$0xff]
    %v262 = vld [vmem:[%s4 + $0xe0] sm:$0xff]
    %v263 = vld [vmem:[%s4 + $0xe8] sm:$0xff]
    %v264 = vld [vmem:[%s4 + $0xf0] sm:$0xff]
    %v265 = vld [vmem:[%s4 + $0xf8] sm:$0xff]
    %266 = vmatpush.msra.mxu0 %v249
    %267 = vmatpush.msra.mxu0 %v248
    %268 = vmatpush.msra.mxu0 %v247
    %269 = vmatpush.msra.mxu0 %v246
    %270 = vmatpush.msra.mxu0 %v245
    %271 = vmatpush.msra.mxu0 %v244
    %272 = vmatpush.msra.mxu0 %v243
    %273 = vmatpush.msra.mxu0 %v242
    %274 = vmatpush.msra.mxu0 %v241
    %275 = vmatpush.msra.mxu0 %v240
    %276 = vmatpush.msra.mxu0 %v239
    %277 = vmatpush.msra.mxu0 %v238
    %278 = vmatpush.msra.mxu0 %v237
    %279 = vmatpush.msra.mxu0 %v236
    %280 = vmatpush.msra.mxu0 %v235
    %281 = vmatpush.msra.mxu0 %v234
    %282 = vmatmul.f32.gmra.mxu0 %v232
    %v283 = vpop.f32.mrf.mxu0
    %v284 = vadd.f32 0.0, %v283
    %285 = vdwg.mxu0
    %286 = vmatpush.msra.mxu0 %v265
    %287 = vmatpush.msra.mxu0 %v264
    %288 = vmatpush.msra.mxu0 %v263
    %289 = vmatpush.msra.mxu0 %v262
    %290 = vmatpush.msra.mxu0 %v261
    %291 = vmatpush.msra.mxu0 %v260
    %292 = vmatpush.msra.mxu0 %v259
    %293 = vmatpush.msra.mxu0 %v258
    %294 = vmatpush.msra.mxu0 %v257
    %295 = vmatpush.msra.mxu0 %v256
    %296 = vmatpush.msra.mxu0 %v255
    %297 = vmatpush.msra.mxu0 %v254
    %298 = vmatpush.msra.mxu0 %v253
    %299 = vmatpush.msra.mxu0 %v252
    %300 = vmatpush.msra.mxu0 %v251
    %301 = vmatpush.msra.mxu0 %v250
    %302 = vmatmul.f32.gmra.mxu0 %v233
    %v303 = vpop.f32.mrf.mxu0
    %v304 = vadd.f32 %v284, %v303
    %305 = vdwg.mxu0
    %v306 = vld [vmem:[%s5] sm:$0x7]
    %vm307 = vcmask 261120
    %v309 = vsel %vm307, %v306, 0
    %v312 = vsel %vm307, %v304, 0
    %314 = vmatpush.xpose.msra.mxu0 0.0
    %315 = vmatpush.xpose.msra.mxu0 0.0
    %316 = vmatpush.xpose.msra.mxu0 0.0
    %317 = vmatpush.xpose.msra.mxu0 0.0
    %318 = vmatpush.xpose.msra.mxu0 0.0
    %319 = vmatpush.xpose.msra.mxu0 0.0
    %320 = vmatpush.xpose.msra.mxu0 0.0
    %321 = vmatpush.xpose.msra.mxu0 0.0
    %322 = vmatpush.xpose.msra.mxu0 0.0
    %323 = vmatpush.xpose.msra.mxu0 0.0
    %324 = vmatpush.xpose.msra.mxu0 0.0
    %325 = vmatpush.xpose.msra.mxu0 0.0
    %326 = vmatpush.xpose.msra.mxu0 0.0
    %327 = vmatpush.xpose.msra.mxu0 0.0
    %328 = vmatpush.xpose.msra.mxu0 0.0
    %329 = vmatpush.xpose.msra.mxu0 %v312
    %330 = vmatmul.f32.gmra.mxu0 %v309
    %v331 = vpop.f32.mrf.mxu0
    %v332 = vadd.f32 0.0, %v331
    %333 = vdwg.mxu0
    %v334 = vperm.slane %v306, 1
    %v335 = vmul.f32 %v304, %v334
    %v336 = vsel %vm307, %v335, 0.0
    %337 = vadd.xlane.f32.xlu0 %v336
    %v338 = vpop.xlane.xlu0 %337
    %v339 = vperm.slane %v332, 0
    %v340 = vadd.f32 %v338, %v339
    %vm341 = vcmp.gt.f32.partialorder %v340, 0.0
    %v342 = vmul.f32 %v340, 0.2
    %v343 = vsel %vm341, %v340, %v342
    %v344 = vsel %vm45, %v343, -1e+30
    %v345 = vsel %vm157, %v344, -inf
    %346 = vmax.xlane.f32.xlu0 %v345
    %v347 = vpop.xlane.xlu0 %346
    %v348 = vsub.f32 %v344, %v347
    %v349 = vmul.f32 %v348, 1.442695
    %v350 = vpow.pop %v349
    %v351 = vsel %vm45, %v350, 0.0
    %v352 = vsel %vm157, %v351, 0.0
    %353 = vadd.xlane.f32.xlu0 %v352
    %v354 = vpop.xlane.xlu0 %353
    %v355 = vrcp.pop %v354
    %v356 = vmul.f32 %v354, %v355
    %v357 = vsub.f32 1.0, %v356
    %v358 = vmul.f32 %v355, %v357
    %v359 = vadd.f32 %v355, %v358
    %vm360 = vweird.f32 %v354
    %vm361 = vweird.f32 %v355
    %vm362 = vmor %vm360, %vm361
    %v363 = vsel %vm362, %v355, %v359
    %v364 = vand.u32 2147483647, %v354
    %vm365 = vcmp.eq.f32.partialorder %v364, 8.507059e+37
    %v366 = vand.u32 %v354, 2147483648
    %v367 = vor.u32 1.1754944e-38, %v366
    %v368 = vsel %vm365, %v367, %v363
    %v369 = vmul.f32 %v351, %v368
    %v370 = vperm.slane %v306, 2
    %v372 = vsel %vm157, %v369, 0
    %374 = vmatpush.msra.mxu0 0.0
    %375 = vmatpush.msra.mxu0 0.0
    %376 = vmatpush.msra.mxu0 0.0
    %377 = vmatpush.msra.mxu0 0.0
    %378 = vmatpush.msra.mxu0 0.0
    %379 = vmatpush.msra.mxu0 0.0
    %380 = vmatpush.msra.mxu0 0.0
    %381 = vmatpush.msra.mxu0 0.0
    %382 = vmatpush.msra.mxu0 0.0
    %383 = vmatpush.msra.mxu0 0.0
    %384 = vmatpush.msra.mxu0 0.0
    %385 = vmatpush.msra.mxu0 0.0
    %386 = vmatpush.msra.mxu0 0.0
    %387 = vmatpush.msra.mxu0 0.0
    %388 = vmatpush.msra.mxu0 0.0
    %389 = vmatpush.msra.mxu0 %v304
    %390 = vmatmul.f32.gmra.mxu0 %v372
    %v391 = vpop.f32.mrf.mxu0
    %v392 = vadd.f32 %v370, %v391
    %393 = vdwg.mxu0
    %v394 = vmax.f32 %v392, 0.0
    %395 = vrot.lane.b32.xlu0 %v43, 32
    %v396 = vpop.permute.xlu0 %395
    %v398 = vsel %vm307, %v394, %v396
    %v399 = vsel %vm307, %v394, 0.0
    %402 = vrot.lane.b32.xlu0 %v398, 1
    %v403 = vpop.permute.xlu0 %402
    %404 = vrot.lane.b32.xlu0 %v399, 1
    %v405 = vpop.permute.xlu0 %404
    %vm408 = vcmask 7168
    %v409 = vsel %vm408, 0.0, %v403
    %v410 = vsel %vm408, 0.0, %v405
    %411 = vrot.lane.b32.xlu0 %v398, 127
    %v412 = vpop.permute.xlu0 %411
    %413 = vrot.lane.b32.xlu0 %v399, 127
    %v414 = vpop.permute.xlu0 %413
    %vm417 = vcmask 384000
    %v418 = vsel %vm417, %v412, 0.0
    %v419 = vsel %vm417, %v414, 0.0
    %s420 = sld [smem:[#allocation2]]
    %v421 = vstv %s420
    %v422 = vmul.f32 %v421, %v409
    %v423 = vmul.f32 %v421, %v410
    %s424 = sld [smem:[#allocation2 + $0x1]]
    %v425 = vstv %s424
    %v426 = vmul.f32 %v425, %v398
    %v427 = vmul.f32 %v425, %v399
    %v428 = vadd.f32 %v422, %v426
    %v429 = vadd.f32 %v423, %v427
    %s430 = sld [smem:[#allocation2 + $0x2]]
    %v431 = vstv %s430
    %v432 = vmul.f32 %v431, %v418
    %v433 = vmul.f32 %v431, %v419
    %s434 = sld [smem:[#allocation2 + $0xc]]
    %v435 = vstv %s434
    %v436 = vadd.f32 %v432, %v435
    %v437 = vadd.f32 %v433, %v435
    %v438 = vadd.f32 %v428, %v436
    %v439 = vadd.f32 %v429, %v437
    %v440 = vmax.f32 %v438, 0.0
    %v441 = vmax.f32 %v439, 0.0
    %444 = vrot.lane.b32.xlu0 %v440, 126
    %v445 = vpop.permute.xlu0 %444
    %446 = vrot.lane.b32.xlu0 %v441, 126
    %v447 = vpop.permute.xlu0 %446
    %450 = vrot.lane.b32.xlu0 %v440, 124
    %v451 = vpop.permute.xlu0 %450
    %452 = vrot.lane.b32.xlu0 %v441, 124
    %v453 = vpop.permute.xlu0 %452
    %456 = vrot.lane.b32.xlu0 %v440, 122
    %v457 = vpop.permute.xlu0 %456
    %458 = vrot.lane.b32.xlu0 %v441, 122
    %v459 = vpop.permute.xlu0 %458
    %462 = vrot.lane.b32.xlu0 %v440, 120
    %v463 = vpop.permute.xlu0 %462
    %464 = vrot.lane.b32.xlu0 %v441, 120
    %v465 = vpop.permute.xlu0 %464
    %468 = vrot.lane.b32.xlu0 %v440, 118
    %v469 = vpop.permute.xlu0 %468
    %470 = vrot.lane.b32.xlu0 %v441, 118
    %v471 = vpop.permute.xlu0 %470
    %474 = vrot.lane.b32.xlu0 %v440, 116
    %v475 = vpop.permute.xlu0 %474
    %476 = vrot.lane.b32.xlu0 %v441, 116
    %v477 = vpop.permute.xlu0 %476
    %480 = vrot.lane.b32.xlu0 %v440, 114
    %v481 = vpop.permute.xlu0 %480
    %482 = vrot.lane.b32.xlu0 %v441, 114
    %v483 = vpop.permute.xlu0 %482
    %486 = vrot.lane.b32.xlu0 %v440, 112
    %v487 = vpop.permute.xlu0 %486
    %488 = vrot.lane.b32.xlu0 %v441, 112
    %v489 = vpop.permute.xlu0 %488
    %492 = vrot.lane.b32.xlu0 %v440, 110
    %v493 = vpop.permute.xlu0 %492
    %494 = vrot.lane.b32.xlu0 %v441, 110
    %v495 = vpop.permute.xlu0 %494
    %498 = vrot.lane.b32.xlu0 %v440, 108
    %v499 = vpop.permute.xlu0 %498
    %500 = vrot.lane.b32.xlu0 %v441, 108
    %v501 = vpop.permute.xlu0 %500
    %504 = vrot.lane.b32.xlu0 %v440, 106
    %v505 = vpop.permute.xlu0 %504
    %506 = vrot.lane.b32.xlu0 %v441, 106
    %v507 = vpop.permute.xlu0 %506
    %510 = vrot.lane.b32.xlu0 %v440, 104
    %v511 = vpop.permute.xlu0 %510
    %512 = vrot.lane.b32.xlu0 %v441, 104
    %v513 = vpop.permute.xlu0 %512
    %516 = vrot.lane.b32.xlu0 %v440, 102
    %v517 = vpop.permute.xlu0 %516
    %518 = vrot.lane.b32.xlu0 %v441, 102
    %v519 = vpop.permute.xlu0 %518
    %522 = vrot.lane.b32.xlu0 %v440, 100
    %v523 = vpop.permute.xlu0 %522
    %524 = vrot.lane.b32.xlu0 %v441, 100
    %v525 = vpop.permute.xlu0 %524
    %528 = vrot.lane.b32.xlu0 %v440, 98
    %v529 = vpop.permute.xlu0 %528
    %530 = vrot.lane.b32.xlu0 %v441, 98
    %v531 = vpop.permute.xlu0 %530
    %534 = vrot.lane.b32.xlu0 %v440, 96
    %v535 = vpop.permute.xlu0 %534
    %536 = vrot.lane.b32.xlu0 %v441, 96
    %v537 = vpop.permute.xlu0 %536
    %540 = vrot.lane.b32.xlu0 %v440, 94
    %v541 = vpop.permute.xlu0 %540
    %542 = vrot.lane.b32.xlu0 %v441, 94
    %v543 = vpop.permute.xlu0 %542
    %546 = vrot.lane.b32.xlu0 %v440, 92
    %v547 = vpop.permute.xlu0 %546
    %548 = vrot.lane.b32.xlu0 %v441, 92
    %v549 = vpop.permute.xlu0 %548
    %552 = vrot.lane.b32.xlu0 %v440, 90
    %v553 = vpop.permute.xlu0 %552
    %554 = vrot.lane.b32.xlu0 %v441, 90
    %v555 = vpop.permute.xlu0 %554
    %558 = vrot.lane.b32.xlu0 %v440, 88
    %v559 = vpop.permute.xlu0 %558
    %560 = vrot.lane.b32.xlu0 %v441, 88
    %v561 = vpop.permute.xlu0 %560
    %564 = vrot.lane.b32.xlu0 %v440, 86
    %v565 = vpop.permute.xlu0 %564
    %566 = vrot.lane.b32.xlu0 %v441, 86
    %v567 = vpop.permute.xlu0 %566
    %570 = vrot.lane.b32.xlu0 %v440, 84
    %v571 = vpop.permute.xlu0 %570
    %572 = vrot.lane.b32.xlu0 %v441, 84
    %v573 = vpop.permute.xlu0 %572
    %576 = vrot.lane.b32.xlu0 %v440, 82
    %v577 = vpop.permute.xlu0 %576
    %578 = vrot.lane.b32.xlu0 %v441, 82
    %v579 = vpop.permute.xlu0 %578
    %v582 = vrot.slane %v451, 4
    %vm583 = vcmask 1047556
    %v584 = vsel %vm583, %v582, %v440
    %v585 = vrot.slane %v440, 4
    %v586 = vsel %vm583, %v451, %v585
    %v588 = vunpack.c.l.s4 1983009808
    %v589 = vunpack.c.0.s8 %v588
    %v590 = vperm.slane %v584, %v589
    %v592 = vunpack.c.l.s4 1983009808
    %v593 = vunpack.c.0.s8 %v592
    %v594 = vperm.slane %v586, %v593
    %v595 = vrot.slane %v457, 4
    %v596 = vsel %vm583, %v595, %v445
    %v597 = vrot.slane %v445, 4
    %v598 = vsel %vm583, %v457, %v597
    %v600 = vunpack.c.l.s4 1983009808
    %v601 = vunpack.c.0.s8 %v600
    %v602 = vperm.slane %v596, %v601
    %v604 = vunpack.c.l.s4 1983009808
    %v605 = vunpack.c.0.s8 %v604
    %v606 = vperm.slane %v598, %v605
    %v607 = vrot.slane %v475, 4
    %v608 = vsel %vm583, %v607, %v463
    %v609 = vrot.slane %v463, 4
    %v610 = vsel %vm583, %v475, %v609
    %v612 = vunpack.c.l.s4 1983009808
    %v613 = vunpack.c.0.s8 %v612
    %v614 = vperm.slane %v608, %v613
    %v616 = vunpack.c.l.s4 1983009808
    %v617 = vunpack.c.0.s8 %v616
    %v618 = vperm.slane %v610, %v617
    %v619 = vrot.slane %v481, 4
    %v620 = vsel %vm583, %v619, %v469
    %v621 = vrot.slane %v469, 4
    %v622 = vsel %vm583, %v481, %v621
    %v624 = vunpack.c.l.s4 1983009808
    %v625 = vunpack.c.0.s8 %v624
    %v626 = vperm.slane %v620, %v625
    %v628 = vunpack.c.l.s4 1983009808
    %v629 = vunpack.c.0.s8 %v628
    %v630 = vperm.slane %v622, %v629
    %v631 = vrot.slane %v602, 4
    %v632 = vsel %vm583, %v631, %v590
    %v633 = vrot.slane %v590, 4
    %v634 = vsel %vm583, %v602, %v633
    %v636 = vunpack.c.l.s4 1934713408
    %v637 = vunpack.c.0.s8 %v636
    %v638 = vperm.slane %v632, %v637
    %v640 = vunpack.c.l.s4 1934713408
    %v641 = vunpack.c.0.s8 %v640
    %v642 = vperm.slane %v634, %v641
    %v643 = vrot.slane %v606, 4
    %v644 = vsel %vm583, %v643, %v594
    %v645 = vrot.slane %v594, 4
    %v646 = vsel %vm583, %v606, %v645
    %v648 = vunpack.c.l.s4 1934713408
    %v649 = vunpack.c.0.s8 %v648
    %v650 = vperm.slane %v644, %v649
    %v652 = vunpack.c.l.s4 1934713408
    %v653 = vunpack.c.0.s8 %v652
    %v654 = vperm.slane %v646, %v653
    %v655 = vrot.slane %v626, 4
    %v656 = vsel %vm583, %v655, %v614
    %v657 = vrot.slane %v614, 4
    %v658 = vsel %vm583, %v626, %v657
    %v660 = vunpack.c.l.s4 1934713408
    %v661 = vunpack.c.0.s8 %v660
    %v662 = vperm.slane %v656, %v661
    %v664 = vunpack.c.l.s4 1934713408
    %v665 = vunpack.c.0.s8 %v664
    %v666 = vperm.slane %v658, %v665
    %v667 = vrot.slane %v630, 4
    %v668 = vsel %vm583, %v667, %v618
    %v669 = vrot.slane %v618, 4
    %v670 = vsel %vm583, %v630, %v669
    %v672 = vunpack.c.l.s4 1934713408
    %v673 = vunpack.c.0.s8 %v672
    %v674 = vperm.slane %v668, %v673
    %v676 = vunpack.c.l.s4 1934713408
    %v677 = vunpack.c.0.s8 %v676
    %v678 = vperm.slane %v670, %v677
    %v679 = vrot.slane %v662, 4
    %v680 = vsel %vm583, %v679, %v638
    %v681 = vrot.slane %v638, 4
    %v682 = vsel %vm583, %v662, %v681
    %v683 = vrot.slane %v666, 4
    %v684 = vsel %vm583, %v683, %v642
    %v685 = vrot.slane %v642, 4
    %v686 = vsel %vm583, %v666, %v685
    %v687 = vrot.slane %v674, 4
    %v688 = vsel %vm583, %v687, %v650
    %v689 = vrot.slane %v650, 4
    %v690 = vsel %vm583, %v674, %v689
    %v691 = vrot.slane %v678, 4
    %v692 = vsel %vm583, %v691, %v654
    %v693 = vrot.slane %v654, 4
    %v694 = vsel %vm583, %v678, %v693
    %v695 = vrot.slane %v499, 4
    %v696 = vsel %vm583, %v695, %v487
    %v697 = vrot.slane %v487, 4
    %v698 = vsel %vm583, %v499, %v697
    %v700 = vunpack.c.l.s4 1983009808
    %v701 = vunpack.c.0.s8 %v700
    %v702 = vperm.slane %v696, %v701
    %v704 = vunpack.c.l.s4 1983009808
    %v705 = vunpack.c.0.s8 %v704
    %v706 = vperm.slane %v698, %v705
    %v707 = vrot.slane %v505, 4
    %v708 = vsel %vm583, %v707, %v493
    %v709 = vrot.slane %v493, 4
    %v710 = vsel %vm583, %v505, %v709
    %v712 = vunpack.c.l.s4 1983009808
    %v713 = vunpack.c.0.s8 %v712
    %v714 = vperm.slane %v708, %v713
    %v716 = vunpack.c.l.s4 1983009808
    %v717 = vunpack.c.0.s8 %v716
    %v718 = vperm.slane %v710, %v717
    %v719 = vrot.slane %v523, 4
    %v720 = vsel %vm583, %v719, %v511
    %v721 = vrot.slane %v511, 4
    %v722 = vsel %vm583, %v523, %v721
    %v724 = vunpack.c.l.s4 1983009808
    %v725 = vunpack.c.0.s8 %v724
    %v726 = vperm.slane %v720, %v725
    %v728 = vunpack.c.l.s4 1983009808
    %v729 = vunpack.c.0.s8 %v728
    %v730 = vperm.slane %v722, %v729
    %v731 = vrot.slane %v529, 4
    %v732 = vsel %vm583, %v731, %v517
    %v733 = vrot.slane %v517, 4
    %v734 = vsel %vm583, %v529, %v733
    %v736 = vunpack.c.l.s4 1983009808
    %v737 = vunpack.c.0.s8 %v736
    %v738 = vperm.slane %v732, %v737
    %v740 = vunpack.c.l.s4 1983009808
    %v741 = vunpack.c.0.s8 %v740
    %v742 = vperm.slane %v734, %v741
    %v743 = vrot.slane %v714, 4
    %v744 = vsel %vm583, %v743, %v702
    %v745 = vrot.slane %v702, 4
    %v746 = vsel %vm583, %v714, %v745
    %v748 = vunpack.c.l.s4 1934713408
    %v749 = vunpack.c.0.s8 %v748
    %v750 = vperm.slane %v744, %v749
    %v752 = vunpack.c.l.s4 1934713408
    %v753 = vunpack.c.0.s8 %v752
    %v754 = vperm.slane %v746, %v753
    %v755 = vrot.slane %v718, 4
    %v756 = vsel %vm583, %v755, %v706
    %v757 = vrot.slane %v706, 4
    %v758 = vsel %vm583, %v718, %v757
    %v760 = vunpack.c.l.s4 1934713408
    %v761 = vunpack.c.0.s8 %v760
    %v762 = vperm.slane %v756, %v761
    %v764 = vunpack.c.l.s4 1934713408
    %v765 = vunpack.c.0.s8 %v764
    %v766 = vperm.slane %v758, %v765
    %v767 = vrot.slane %v738, 4
    %v768 = vsel %vm583, %v767, %v726
    %v769 = vrot.slane %v726, 4
    %v770 = vsel %vm583, %v738, %v769
    %v772 = vunpack.c.l.s4 1934713408
    %v773 = vunpack.c.0.s8 %v772
    %v774 = vperm.slane %v768, %v773
    %v776 = vunpack.c.l.s4 1934713408
    %v777 = vunpack.c.0.s8 %v776
    %v778 = vperm.slane %v770, %v777
    %v779 = vrot.slane %v742, 4
    %v780 = vsel %vm583, %v779, %v730
    %v781 = vrot.slane %v730, 4
    %v782 = vsel %vm583, %v742, %v781
    %v784 = vunpack.c.l.s4 1934713408
    %v785 = vunpack.c.0.s8 %v784
    %v786 = vperm.slane %v780, %v785
    %v788 = vunpack.c.l.s4 1934713408
    %v789 = vunpack.c.0.s8 %v788
    %v790 = vperm.slane %v782, %v789
    %v791 = vrot.slane %v774, 4
    %v792 = vsel %vm583, %v791, %v750
    %v793 = vrot.slane %v750, 4
    %v794 = vsel %vm583, %v774, %v793
    %v795 = vrot.slane %v778, 4
    %v796 = vsel %vm583, %v795, %v754
    %v797 = vrot.slane %v754, 4
    %v798 = vsel %vm583, %v778, %v797
    %v799 = vrot.slane %v786, 4
    %v800 = vsel %vm583, %v799, %v762
    %v801 = vrot.slane %v762, 4
    %v802 = vsel %vm583, %v786, %v801
    %v803 = vrot.slane %v790, 4
    %v804 = vsel %vm583, %v803, %v766
    %v805 = vrot.slane %v766, 4
    %v806 = vsel %vm583, %v790, %v805
    %v807 = vrot.slane %v547, 4
    %v808 = vsel %vm583, %v807, %v535
    %v809 = vrot.slane %v535, 4
    %v810 = vsel %vm583, %v547, %v809
    %v812 = vunpack.c.l.s4 1983009808
    %v813 = vunpack.c.0.s8 %v812
    %v814 = vperm.slane %v808, %v813
    %v816 = vunpack.c.l.s4 1983009808
    %v817 = vunpack.c.0.s8 %v816
    %v818 = vperm.slane %v810, %v817
    %v819 = vrot.slane %v553, 4
    %v820 = vsel %vm583, %v819, %v541
    %v821 = vrot.slane %v541, 4
    %v822 = vsel %vm583, %v553, %v821
    %v824 = vunpack.c.l.s4 1983009808
    %v825 = vunpack.c.0.s8 %v824
    %v826 = vperm.slane %v820, %v825
    %v828 = vunpack.c.l.s4 1983009808
    %v829 = vunpack.c.0.s8 %v828
    %v830 = vperm.slane %v822, %v829
    %v831 = vrot.slane %v571, 4
    %v832 = vsel %vm583, %v831, %v559
    %v833 = vrot.slane %v559, 4
    %v834 = vsel %vm583, %v571, %v833
    %v836 = vunpack.c.l.s4 1983009808
    %v837 = vunpack.c.0.s8 %v836
    %v838 = vperm.slane %v832, %v837
    %v840 = vunpack.c.l.s4 1983009808
    %v841 = vunpack.c.0.s8 %v840
    %v842 = vperm.slane %v834, %v841
    %v843 = vrot.slane %v577, 4
    %v844 = vsel %vm583, %v843, %v565
    %v845 = vrot.slane %v565, 4
    %v846 = vsel %vm583, %v577, %v845
    %v848 = vunpack.c.l.s4 1983009808
    %v849 = vunpack.c.0.s8 %v848
    %v850 = vperm.slane %v844, %v849
    %v852 = vunpack.c.l.s4 1983009808
    %v853 = vunpack.c.0.s8 %v852
    %v854 = vperm.slane %v846, %v853
    %v855 = vrot.slane %v826, 4
    %v856 = vsel %vm583, %v855, %v814
    %v857 = vrot.slane %v814, 4
    %v858 = vsel %vm583, %v826, %v857
    %v860 = vunpack.c.l.s4 1934713408
    %v861 = vunpack.c.0.s8 %v860
    %v862 = vperm.slane %v856, %v861
    %v864 = vunpack.c.l.s4 1934713408
    %v865 = vunpack.c.0.s8 %v864
    %v866 = vperm.slane %v858, %v865
    %v867 = vrot.slane %v830, 4
    %v868 = vsel %vm583, %v867, %v818
    %v869 = vrot.slane %v818, 4
    %v870 = vsel %vm583, %v830, %v869
    %v872 = vunpack.c.l.s4 1934713408
    %v873 = vunpack.c.0.s8 %v872
    %v874 = vperm.slane %v868, %v873
    %v876 = vunpack.c.l.s4 1934713408
    %v877 = vunpack.c.0.s8 %v876
    %v878 = vperm.slane %v870, %v877
    %v879 = vrot.slane %v850, 4
    %v880 = vsel %vm583, %v879, %v838
    %v881 = vrot.slane %v838, 4
    %v882 = vsel %vm583, %v850, %v881
    %v884 = vunpack.c.l.s4 1934713408
    %v885 = vunpack.c.0.s8 %v884
    %v886 = vperm.slane %v880, %v885
    %v888 = vunpack.c.l.s4 1934713408
    %v889 = vunpack.c.0.s8 %v888
    %v890 = vperm.slane %v882, %v889
    %v891 = vrot.slane %v854, 4
    %v892 = vsel %vm583, %v891, %v842
    %v893 = vrot.slane %v842, 4
    %v894 = vsel %vm583, %v854, %v893
    %v896 = vunpack.c.l.s4 1934713408
    %v897 = vunpack.c.0.s8 %v896
    %v898 = vperm.slane %v892, %v897
    %v900 = vunpack.c.l.s4 1934713408
    %v901 = vunpack.c.0.s8 %v900
    %v902 = vperm.slane %v894, %v901
    %v903 = vrot.slane %v886, 4
    %v904 = vsel %vm583, %v903, %v862
    %v905 = vrot.slane %v862, 4
    %v906 = vsel %vm583, %v886, %v905
    %v907 = vrot.slane %v890, 4
    %v908 = vsel %vm583, %v907, %v866
    %v909 = vrot.slane %v866, 4
    %v910 = vsel %vm583, %v890, %v909
    %v911 = vrot.slane %v898, 4
    %v912 = vsel %vm583, %v911, %v874
    %v913 = vrot.slane %v874, 4
    %v914 = vsel %vm583, %v898, %v913
    %v915 = vrot.slane %v902, 4
    %v916 = vsel %vm583, %v915, %v878
    %v917 = vrot.slane %v878, 4
    %v918 = vsel %vm583, %v902, %v917
    %v919 = vrot.slane %v453, 4
    %v920 = vsel %vm583, %v919, %v441
    %v921 = vrot.slane %v441, 4
    %v922 = vsel %vm583, %v453, %v921
    %v924 = vunpack.c.l.s4 1983009808
    %v925 = vunpack.c.0.s8 %v924
    %v926 = vperm.slane %v920, %v925
    %v928 = vunpack.c.l.s4 1983009808
    %v929 = vunpack.c.0.s8 %v928
    %v930 = vperm.slane %v922, %v929
    %v931 = vrot.slane %v459, 4
    %v932 = vsel %vm583, %v931, %v447
    %v933 = vrot.slane %v447, 4
    %v934 = vsel %vm583, %v459, %v933
    %v936 = vunpack.c.l.s4 1983009808
    %v937 = vunpack.c.0.s8 %v936
    %v938 = vperm.slane %v932, %v937
    %v940 = vunpack.c.l.s4 1983009808
    %v941 = vunpack.c.0.s8 %v940
    %v942 = vperm.slane %v934, %v941
    %v943 = vrot.slane %v477, 4
    %v944 = vsel %vm583, %v943, %v465
    %v945 = vrot.slane %v465, 4
    %v946 = vsel %vm583, %v477, %v945
    %v948 = vunpack.c.l.s4 1983009808
    %v949 = vunpack.c.0.s8 %v948
    %v950 = vperm.slane %v944, %v949
    %v952 = vunpack.c.l.s4 1983009808
    %v953 = vunpack.c.0.s8 %v952
    %v954 = vperm.slane %v946, %v953
    %v955 = vrot.slane %v483, 4
    %v956 = vsel %vm583, %v955, %v471
    %v957 = vrot.slane %v471, 4
    %v958 = vsel %vm583, %v483, %v957
    %v960 = vunpack.c.l.s4 1983009808
    %v961 = vunpack.c.0.s8 %v960
    %v962 = vperm.slane %v956, %v961
    %v964 = vunpack.c.l.s4 1983009808
    %v965 = vunpack.c.0.s8 %v964
    %v966 = vperm.slane %v958, %v965
    %v967 = vrot.slane %v938, 4
    %v968 = vsel %vm583, %v967, %v926
    %v969 = vrot.slane %v926, 4
    %v970 = vsel %vm583, %v938, %v969
    %v972 = vunpack.c.l.s4 1934713408
    %v973 = vunpack.c.0.s8 %v972
    %v974 = vperm.slane %v968, %v973
    %v976 = vunpack.c.l.s4 1934713408
    %v977 = vunpack.c.0.s8 %v976
    %v978 = vperm.slane %v970, %v977
    %v979 = vrot.slane %v942, 4
    %v980 = vsel %vm583, %v979, %v930
    %v981 = vrot.slane %v930, 4
    %v982 = vsel %vm583, %v942, %v981
    %v984 = vunpack.c.l.s4 1934713408
    %v985 = vunpack.c.0.s8 %v984
    %v986 = vperm.slane %v980, %v985
    %v988 = vunpack.c.l.s4 1934713408
    %v989 = vunpack.c.0.s8 %v988
    %v990 = vperm.slane %v982, %v989
    %v991 = vrot.slane %v962, 4
    %v992 = vsel %vm583, %v991, %v950
    %v993 = vrot.slane %v950, 4
    %v994 = vsel %vm583, %v962, %v993
    %v996 = vunpack.c.l.s4 1934713408
    %v997 = vunpack.c.0.s8 %v996
    %v998 = vperm.slane %v992, %v997
    %v1000 = vunpack.c.l.s4 1934713408
    %v1001 = vunpack.c.0.s8 %v1000
    %v1002 = vperm.slane %v994, %v1001
    %v1003 = vrot.slane %v966, 4
    %v1004 = vsel %vm583, %v1003, %v954
    %v1005 = vrot.slane %v954, 4
    %v1006 = vsel %vm583, %v966, %v1005
    %v1008 = vunpack.c.l.s4 1934713408
    %v1009 = vunpack.c.0.s8 %v1008
    %v1010 = vperm.slane %v1004, %v1009
    %v1012 = vunpack.c.l.s4 1934713408
    %v1013 = vunpack.c.0.s8 %v1012
    %v1014 = vperm.slane %v1006, %v1013
    %v1015 = vrot.slane %v998, 4
    %v1016 = vsel %vm583, %v1015, %v974
    %v1017 = vrot.slane %v974, 4
    %v1018 = vsel %vm583, %v998, %v1017
    %v1019 = vrot.slane %v1002, 4
    %v1020 = vsel %vm583, %v1019, %v978
    %v1021 = vrot.slane %v978, 4
    %v1022 = vsel %vm583, %v1002, %v1021
    %v1023 = vrot.slane %v1010, 4
    %v1024 = vsel %vm583, %v1023, %v986
    %v1025 = vrot.slane %v986, 4
    %v1026 = vsel %vm583, %v1010, %v1025
    %v1027 = vrot.slane %v1014, 4
    %v1028 = vsel %vm583, %v1027, %v990
    %v1029 = vrot.slane %v990, 4
    %v1030 = vsel %vm583, %v1014, %v1029
    %v1031 = vrot.slane %v501, 4
    %v1032 = vsel %vm583, %v1031, %v489
    %v1033 = vrot.slane %v489, 4
    %v1034 = vsel %vm583, %v501, %v1033
    %v1036 = vunpack.c.l.s4 1983009808
    %v1037 = vunpack.c.0.s8 %v1036
    %v1038 = vperm.slane %v1032, %v1037
    %v1040 = vunpack.c.l.s4 1983009808
    %v1041 = vunpack.c.0.s8 %v1040
    %v1042 = vperm.slane %v1034, %v1041
    %v1043 = vrot.slane %v507, 4
    %v1044 = vsel %vm583, %v1043, %v495
    %v1045 = vrot.slane %v495, 4
    %v1046 = vsel %vm583, %v507, %v1045
    %v1048 = vunpack.c.l.s4 1983009808
    %v1049 = vunpack.c.0.s8 %v1048
    %v1050 = vperm.slane %v1044, %v1049
    %v1052 = vunpack.c.l.s4 1983009808
    %v1053 = vunpack.c.0.s8 %v1052
    %v1054 = vperm.slane %v1046, %v1053
    %v1055 = vrot.slane %v525, 4
    %v1056 = vsel %vm583, %v1055, %v513
    %v1057 = vrot.slane %v513, 4
    %v1058 = vsel %vm583, %v525, %v1057
    %v1060 = vunpack.c.l.s4 1983009808
    %v1061 = vunpack.c.0.s8 %v1060
    %v1062 = vperm.slane %v1056, %v1061
    %v1064 = vunpack.c.l.s4 1983009808
    %v1065 = vunpack.c.0.s8 %v1064
    %v1066 = vperm.slane %v1058, %v1065
    %v1067 = vrot.slane %v531, 4
    %v1068 = vsel %vm583, %v1067, %v519
    %v1069 = vrot.slane %v519, 4
    %v1070 = vsel %vm583, %v531, %v1069
    %v1072 = vunpack.c.l.s4 1983009808
    %v1073 = vunpack.c.0.s8 %v1072
    %v1074 = vperm.slane %v1068, %v1073
    %v1076 = vunpack.c.l.s4 1983009808
    %v1077 = vunpack.c.0.s8 %v1076
    %v1078 = vperm.slane %v1070, %v1077
    %v1079 = vrot.slane %v1050, 4
    %v1080 = vsel %vm583, %v1079, %v1038
    %v1081 = vrot.slane %v1038, 4
    %v1082 = vsel %vm583, %v1050, %v1081
    %v1084 = vunpack.c.l.s4 1934713408
    %v1085 = vunpack.c.0.s8 %v1084
    %v1086 = vperm.slane %v1080, %v1085
    %v1088 = vunpack.c.l.s4 1934713408
    %v1089 = vunpack.c.0.s8 %v1088
    %v1090 = vperm.slane %v1082, %v1089
    %v1091 = vrot.slane %v1054, 4
    %v1092 = vsel %vm583, %v1091, %v1042
    %v1093 = vrot.slane %v1042, 4
    %v1094 = vsel %vm583, %v1054, %v1093
    %v1096 = vunpack.c.l.s4 1934713408
    %v1097 = vunpack.c.0.s8 %v1096
    %v1098 = vperm.slane %v1092, %v1097
    %v1100 = vunpack.c.l.s4 1934713408
    %v1101 = vunpack.c.0.s8 %v1100
    %v1102 = vperm.slane %v1094, %v1101
    %v1103 = vrot.slane %v1074, 4
    %v1104 = vsel %vm583, %v1103, %v1062
    %v1105 = vrot.slane %v1062, 4
    %v1106 = vsel %vm583, %v1074, %v1105
    %v1108 = vunpack.c.l.s4 1934713408
    %v1109 = vunpack.c.0.s8 %v1108
    %v1110 = vperm.slane %v1104, %v1109
    %v1112 = vunpack.c.l.s4 1934713408
    %v1113 = vunpack.c.0.s8 %v1112
    %v1114 = vperm.slane %v1106, %v1113
    %v1115 = vrot.slane %v1078, 4
    %v1116 = vsel %vm583, %v1115, %v1066
    %v1117 = vrot.slane %v1066, 4
    %v1118 = vsel %vm583, %v1078, %v1117
    %v1120 = vunpack.c.l.s4 1934713408
    %v1121 = vunpack.c.0.s8 %v1120
    %v1122 = vperm.slane %v1116, %v1121
    %v1124 = vunpack.c.l.s4 1934713408
    %v1125 = vunpack.c.0.s8 %v1124
    %v1126 = vperm.slane %v1118, %v1125
    %v1127 = vrot.slane %v1110, 4
    %v1128 = vsel %vm583, %v1127, %v1086
    %v1129 = vrot.slane %v1086, 4
    %v1130 = vsel %vm583, %v1110, %v1129
    %v1131 = vrot.slane %v1114, 4
    %v1132 = vsel %vm583, %v1131, %v1090
    %v1133 = vrot.slane %v1090, 4
    %v1134 = vsel %vm583, %v1114, %v1133
    %v1135 = vrot.slane %v1122, 4
    %v1136 = vsel %vm583, %v1135, %v1098
    %v1137 = vrot.slane %v1098, 4
    %v1138 = vsel %vm583, %v1122, %v1137
    %v1139 = vrot.slane %v1126, 4
    %v1140 = vsel %vm583, %v1139, %v1102
    %v1141 = vrot.slane %v1102, 4
    %v1142 = vsel %vm583, %v1126, %v1141
    %v1143 = vrot.slane %v549, 4
    %v1144 = vsel %vm583, %v1143, %v537
    %v1145 = vrot.slane %v537, 4
    %v1146 = vsel %vm583, %v549, %v1145
    %v1148 = vunpack.c.l.s4 1983009808
    %v1149 = vunpack.c.0.s8 %v1148
    %v1150 = vperm.slane %v1144, %v1149
    %v1152 = vunpack.c.l.s4 1983009808
    %v1153 = vunpack.c.0.s8 %v1152
    %v1154 = vperm.slane %v1146, %v1153
    %v1155 = vrot.slane %v555, 4
    %v1156 = vsel %vm583, %v1155, %v543
    %v1157 = vrot.slane %v543, 4
    %v1158 = vsel %vm583, %v555, %v1157
    %v1160 = vunpack.c.l.s4 1983009808
    %v1161 = vunpack.c.0.s8 %v1160
    %v1162 = vperm.slane %v1156, %v1161
    %v1164 = vunpack.c.l.s4 1983009808
    %v1165 = vunpack.c.0.s8 %v1164
    %v1166 = vperm.slane %v1158, %v1165
    %v1167 = vrot.slane %v573, 4
    %v1168 = vsel %vm583, %v1167, %v561
    %v1169 = vrot.slane %v561, 4
    %v1170 = vsel %vm583, %v573, %v1169
    %v1172 = vunpack.c.l.s4 1983009808
    %v1173 = vunpack.c.0.s8 %v1172
    %v1174 = vperm.slane %v1168, %v1173
    %v1176 = vunpack.c.l.s4 1983009808
    %v1177 = vunpack.c.0.s8 %v1176
    %v1178 = vperm.slane %v1170, %v1177
    %v1179 = vrot.slane %v579, 4
    %v1180 = vsel %vm583, %v1179, %v567
    %v1181 = vrot.slane %v567, 4
    %v1182 = vsel %vm583, %v579, %v1181
    %v1184 = vunpack.c.l.s4 1983009808
    %v1185 = vunpack.c.0.s8 %v1184
    %v1186 = vperm.slane %v1180, %v1185
    %v1188 = vunpack.c.l.s4 1983009808
    %v1189 = vunpack.c.0.s8 %v1188
    %v1190 = vperm.slane %v1182, %v1189
    %v1191 = vrot.slane %v1162, 4
    %v1192 = vsel %vm583, %v1191, %v1150
    %v1193 = vrot.slane %v1150, 4
    %v1194 = vsel %vm583, %v1162, %v1193
    %v1196 = vunpack.c.l.s4 1934713408
    %v1197 = vunpack.c.0.s8 %v1196
    %v1198 = vperm.slane %v1192, %v1197
    %v1200 = vunpack.c.l.s4 1934713408
    %v1201 = vunpack.c.0.s8 %v1200
    %v1202 = vperm.slane %v1194, %v1201
    %v1203 = vrot.slane %v1166, 4
    %v1204 = vsel %vm583, %v1203, %v1154
    %v1205 = vrot.slane %v1154, 4
    %v1206 = vsel %vm583, %v1166, %v1205
    %v1208 = vunpack.c.l.s4 1934713408
    %v1209 = vunpack.c.0.s8 %v1208
    %v1210 = vperm.slane %v1204, %v1209
    %v1212 = vunpack.c.l.s4 1934713408
    %v1213 = vunpack.c.0.s8 %v1212
    %v1214 = vperm.slane %v1206, %v1213
    %v1215 = vrot.slane %v1186, 4
    %v1216 = vsel %vm583, %v1215, %v1174
    %v1217 = vrot.slane %v1174, 4
    %v1218 = vsel %vm583, %v1186, %v1217
    %v1220 = vunpack.c.l.s4 1934713408
    %v1221 = vunpack.c.0.s8 %v1220
    %v1222 = vperm.slane %v1216, %v1221
    %v1224 = vunpack.c.l.s4 1934713408
    %v1225 = vunpack.c.0.s8 %v1224
    %v1226 = vperm.slane %v1218, %v1225
    %v1227 = vrot.slane %v1190, 4
    %v1228 = vsel %vm583, %v1227, %v1178
    %v1229 = vrot.slane %v1178, 4
    %v1230 = vsel %vm583, %v1190, %v1229
    %v1232 = vunpack.c.l.s4 1934713408
    %v1233 = vunpack.c.0.s8 %v1232
    %v1234 = vperm.slane %v1228, %v1233
    %v1236 = vunpack.c.l.s4 1934713408
    %v1237 = vunpack.c.0.s8 %v1236
    %v1238 = vperm.slane %v1230, %v1237
    %v1239 = vrot.slane %v1222, 4
    %v1240 = vsel %vm583, %v1239, %v1198
    %v1241 = vrot.slane %v1198, 4
    %v1242 = vsel %vm583, %v1222, %v1241
    %v1243 = vrot.slane %v1226, 4
    %v1244 = vsel %vm583, %v1243, %v1202
    %v1245 = vrot.slane %v1202, 4
    %v1246 = vsel %vm583, %v1226, %v1245
    %v1247 = vrot.slane %v1234, 4
    %v1248 = vsel %vm583, %v1247, %v1210
    %v1249 = vrot.slane %v1210, 4
    %v1250 = vsel %vm583, %v1234, %v1249
    %v1251 = vrot.slane %v1238, 4
    %v1252 = vsel %vm583, %v1251, %v1214
    %v1253 = vrot.slane %v1214, 4
    %v1254 = vsel %vm583, %v1238, %v1253
    %vm1255 = vcmask 15360
    %v1256 = vsel %vm1255, %v680, -inf
    %1257 = vmax.xlane.f32.xlu0 %v1256
    %v1258 = vpop.xlane.xlu0 %1257
    %v1259 = vsel %vm1255, %v792, -inf
    %1260 = vmax.xlane.f32.xlu0 %v1259
    %v1261 = vpop.xlane.xlu0 %1260
    %v1262 = vsel %vm1255, %v904, -inf
    %1263 = vmax.xlane.f32.xlu0 %v1262
    %v1264 = vpop.xlane.xlu0 %1263
    %v1265 = vsel %vm1255, %v682, -inf
    %1266 = vmax.xlane.f32.xlu0 %v1265
    %v1267 = vpop.xlane.xlu0 %1266
    %v1268 = vsel %vm1255, %v794, -inf
    %1269 = vmax.xlane.f32.xlu0 %v1268
    %v1270 = vpop.xlane.xlu0 %1269
    %v1271 = vsel %vm1255, %v906, -inf
    %1272 = vmax.xlane.f32.xlu0 %v1271
    %v1273 = vpop.xlane.xlu0 %1272
    %v1274 = vsel %vm1255, %v684, -inf
    %1275 = vmax.xlane.f32.xlu0 %v1274
    %v1276 = vpop.xlane.xlu0 %1275
    %v1277 = vsel %vm1255, %v796, -inf
    %1278 = vmax.xlane.f32.xlu0 %v1277
    %v1279 = vpop.xlane.xlu0 %1278
    %v1280 = vsel %vm1255, %v908, -inf
    %1281 = vmax.xlane.f32.xlu0 %v1280
    %v1282 = vpop.xlane.xlu0 %1281
    %v1283 = vsel %vm1255, %v686, -inf
    %1284 = vmax.xlane.f32.xlu0 %v1283
    %v1285 = vpop.xlane.xlu0 %1284
    %v1286 = vsel %vm1255, %v798, -inf
    %1287 = vmax.xlane.f32.xlu0 %v1286
    %v1288 = vpop.xlane.xlu0 %1287
    %v1289 = vsel %vm1255, %v910, -inf
    %1290 = vmax.xlane.f32.xlu0 %v1289
    %v1291 = vpop.xlane.xlu0 %1290
    %v1292 = vsel %vm1255, %v688, -inf
    %1293 = vmax.xlane.f32.xlu0 %v1292
    %v1294 = vpop.xlane.xlu0 %1293
    %v1295 = vsel %vm1255, %v800, -inf
    %1296 = vmax.xlane.f32.xlu0 %v1295
    %v1297 = vpop.xlane.xlu0 %1296
    %v1298 = vsel %vm1255, %v912, -inf
    %1299 = vmax.xlane.f32.xlu0 %v1298
    %v1300 = vpop.xlane.xlu0 %1299
    %v1301 = vsel %vm1255, %v690, -inf
    %1302 = vmax.xlane.f32.xlu0 %v1301
    %v1303 = vpop.xlane.xlu0 %1302
    %v1304 = vsel %vm1255, %v802, -inf
    %1305 = vmax.xlane.f32.xlu0 %v1304
    %v1306 = vpop.xlane.xlu0 %1305
    %v1307 = vsel %vm1255, %v914, -inf
    %1308 = vmax.xlane.f32.xlu0 %v1307
    %v1309 = vpop.xlane.xlu0 %1308
    %v1310 = vsel %vm1255, %v692, -inf
    %1311 = vmax.xlane.f32.xlu0 %v1310
    %v1312 = vpop.xlane.xlu0 %1311
    %v1313 = vsel %vm1255, %v804, -inf
    %1314 = vmax.xlane.f32.xlu0 %v1313
    %v1315 = vpop.xlane.xlu0 %1314
    %v1316 = vsel %vm1255, %v916, -inf
    %1317 = vmax.xlane.f32.xlu0 %v1316
    %v1318 = vpop.xlane.xlu0 %1317
    %v1319 = vsel %vm1255, %v694, -inf
    %1320 = vmax.xlane.f32.xlu0 %v1319
    %v1321 = vpop.xlane.xlu0 %1320
    %v1322 = vsel %vm1255, %v806, -inf
    %1323 = vmax.xlane.f32.xlu0 %v1322
    %v1324 = vpop.xlane.xlu0 %1323
    %v1325 = vsel %vm1255, %v918, -inf
    %1326 = vmax.xlane.f32.xlu0 %v1325
    %v1327 = vpop.xlane.xlu0 %1326
    %v1328 = vsel %vm1255, %v1016, -inf
    %1329 = vmax.xlane.f32.xlu0 %v1328
    %v1330 = vpop.xlane.xlu0 %1329
    %v1331 = vsel %vm1255, %v1128, -inf
    %1332 = vmax.xlane.f32.xlu0 %v1331
    %v1333 = vpop.xlane.xlu0 %1332
    %v1334 = vsel %vm1255, %v1240, -inf
    %1335 = vmax.xlane.f32.xlu0 %v1334
    %v1336 = vpop.xlane.xlu0 %1335
    %v1337 = vsel %vm1255, %v1018, -inf
    %1338 = vmax.xlane.f32.xlu0 %v1337
    %v1339 = vpop.xlane.xlu0 %1338
    %v1340 = vsel %vm1255, %v1130, -inf
    %1341 = vmax.xlane.f32.xlu0 %v1340
    %v1342 = vpop.xlane.xlu0 %1341
    %v1343 = vsel %vm1255, %v1242, -inf
    %1344 = vmax.xlane.f32.xlu0 %v1343
    %v1345 = vpop.xlane.xlu0 %1344
    %v1346 = vsel %vm1255, %v1020, -inf
    %1347 = vmax.xlane.f32.xlu0 %v1346
    %v1348 = vpop.xlane.xlu0 %1347
    %v1349 = vsel %vm1255, %v1132, -inf
    %1350 = vmax.xlane.f32.xlu0 %v1349
    %v1351 = vpop.xlane.xlu0 %1350
    %v1352 = vsel %vm1255, %v1244, -inf
    %1353 = vmax.xlane.f32.xlu0 %v1352
    %v1354 = vpop.xlane.xlu0 %1353
    %v1355 = vsel %vm1255, %v1022, -inf
    %1356 = vmax.xlane.f32.xlu0 %v1355
    %v1357 = vpop.xlane.xlu0 %1356
    %v1358 = vsel %vm1255, %v1134, -inf
    %1359 = vmax.xlane.f32.xlu0 %v1358
    %v1360 = vpop.xlane.xlu0 %1359
    %v1361 = vsel %vm1255, %v1246, -inf
    %1362 = vmax.xlane.f32.xlu0 %v1361
    %v1363 = vpop.xlane.xlu0 %1362
    %v1364 = vsel %vm1255, %v1024, -inf
    %1365 = vmax.xlane.f32.xlu0 %v1364
    %v1366 = vpop.xlane.xlu0 %1365
    %v1367 = vsel %vm1255, %v1136, -inf
    %1368 = vmax.xlane.f32.xlu0 %v1367
    %v1369 = vpop.xlane.xlu0 %1368
    %v1370 = vsel %vm1255, %v1248, -inf
    %1371 = vmax.xlane.f32.xlu0 %v1370
    %v1372 = vpop.xlane.xlu0 %1371
    %v1373 = vsel %vm1255, %v1026, -inf
    %1374 = vmax.xlane.f32.xlu0 %v1373
    %v1375 = vpop.xlane.xlu0 %1374
    %v1376 = vsel %vm1255, %v1138, -inf
    %1377 = vmax.xlane.f32.xlu0 %v1376
    %v1378 = vpop.xlane.xlu0 %1377
    %v1379 = vsel %vm1255, %v1250, -inf
    %1380 = vmax.xlane.f32.xlu0 %v1379
    %v1381 = vpop.xlane.xlu0 %1380
    %v1382 = vsel %vm1255, %v1028, -inf
    %1383 = vmax.xlane.f32.xlu0 %v1382
    %v1384 = vpop.xlane.xlu0 %1383
    %v1385 = vsel %vm1255, %v1140, -inf
    %1386 = vmax.xlane.f32.xlu0 %v1385
    %v1387 = vpop.xlane.xlu0 %1386
    %v1388 = vsel %vm1255, %v1252, -inf
    %1389 = vmax.xlane.f32.xlu0 %v1388
    %v1390 = vpop.xlane.xlu0 %1389
    %v1391 = vsel %vm1255, %v1030, -inf
    %1392 = vmax.xlane.f32.xlu0 %v1391
    %v1393 = vpop.xlane.xlu0 %1392
    %v1394 = vsel %vm1255, %v1142, -inf
    %1395 = vmax.xlane.f32.xlu0 %v1394
    %v1396 = vpop.xlane.xlu0 %1395
    %v1397 = vsel %vm1255, %v1254, -inf
    %1398 = vmax.xlane.f32.xlu0 %v1397
    %v1399 = vpop.xlane.xlu0 %1398
    %s1400 = sld [smem:[#allocation2 + $0x3]]
    %v1401 = vstv %s1400
    %v1402 = vmul.f32 %v1401, %v409
    %v1403 = vmul.f32 %v1401, %v410
    %s1404 = sld [smem:[#allocation2 + $0x4]]
    %v1405 = vstv %s1404
    %v1406 = vmul.f32 %v1405, %v398
    %v1407 = vmul.f32 %v1405, %v399
    %v1408 = vadd.f32 %v1402, %v1406
    %v1409 = vadd.f32 %v1403, %v1407
    %s1410 = sld [smem:[#allocation2 + $0x5]]
    %v1411 = vstv %s1410
    %v1412 = vmul.f32 %v1411, %v418
    %v1413 = vmul.f32 %v1411, %v419
    %s1414 = sld [smem:[#allocation2 + $0xd]]
    %v1415 = vstv %s1414
    %v1416 = vadd.f32 %v1412, %v1415
    %v1417 = vadd.f32 %v1413, %v1415
    %v1418 = vadd.f32 %v1408, %v1416
    %v1419 = vadd.f32 %v1409, %v1417
    %v1420 = vmax.f32 %v1418, 0.0
    %v1421 = vmax.f32 %v1419, 0.0
    %1424 = vrot.lane.b32.xlu0 %v1420, 126
    %v1425 = vpop.permute.xlu0 %1424
    %1426 = vrot.lane.b32.xlu0 %v1421, 126
    %v1427 = vpop.permute.xlu0 %1426
    %1430 = vrot.lane.b32.xlu0 %v1420, 124
    %v1431 = vpop.permute.xlu0 %1430
    %1432 = vrot.lane.b32.xlu0 %v1421, 124
    %v1433 = vpop.permute.xlu0 %1432
    %1436 = vrot.lane.b32.xlu0 %v1420, 122
    %v1437 = vpop.permute.xlu0 %1436
    %1438 = vrot.lane.b32.xlu0 %v1421, 122
    %v1439 = vpop.permute.xlu0 %1438
    %1442 = vrot.lane.b32.xlu0 %v1420, 120
    %v1443 = vpop.permute.xlu0 %1442
    %1444 = vrot.lane.b32.xlu0 %v1421, 120
    %v1445 = vpop.permute.xlu0 %1444
    %1448 = vrot.lane.b32.xlu0 %v1420, 118
    %v1449 = vpop.permute.xlu0 %1448
    %1450 = vrot.lane.b32.xlu0 %v1421, 118
    %v1451 = vpop.permute.xlu0 %1450
    %1454 = vrot.lane.b32.xlu0 %v1420, 116
    %v1455 = vpop.permute.xlu0 %1454
    %1456 = vrot.lane.b32.xlu0 %v1421, 116
    %v1457 = vpop.permute.xlu0 %1456
    %1460 = vrot.lane.b32.xlu0 %v1420, 114
    %v1461 = vpop.permute.xlu0 %1460
    %1462 = vrot.lane.b32.xlu0 %v1421, 114
    %v1463 = vpop.permute.xlu0 %1462
    %1466 = vrot.lane.b32.xlu0 %v1420, 112
    %v1467 = vpop.permute.xlu0 %1466
    %1468 = vrot.lane.b32.xlu0 %v1421, 112
    %v1469 = vpop.permute.xlu0 %1468
    %1472 = vrot.lane.b32.xlu0 %v1420, 110
    %v1473 = vpop.permute.xlu0 %1472
    %1474 = vrot.lane.b32.xlu0 %v1421, 110
    %v1475 = vpop.permute.xlu0 %1474
    %1478 = vrot.lane.b32.xlu0 %v1420, 108
    %v1479 = vpop.permute.xlu0 %1478
    %1480 = vrot.lane.b32.xlu0 %v1421, 108
    %v1481 = vpop.permute.xlu0 %1480
    %1484 = vrot.lane.b32.xlu0 %v1420, 106
    %v1485 = vpop.permute.xlu0 %1484
    %1486 = vrot.lane.b32.xlu0 %v1421, 106
    %v1487 = vpop.permute.xlu0 %1486
    %1490 = vrot.lane.b32.xlu0 %v1420, 104
    %v1491 = vpop.permute.xlu0 %1490
    %1492 = vrot.lane.b32.xlu0 %v1421, 104
    %v1493 = vpop.permute.xlu0 %1492
    %1496 = vrot.lane.b32.xlu0 %v1420, 102
    %v1497 = vpop.permute.xlu0 %1496
    %1498 = vrot.lane.b32.xlu0 %v1421, 102
    %v1499 = vpop.permute.xlu0 %1498
    %1502 = vrot.lane.b32.xlu0 %v1420, 100
    %v1503 = vpop.permute.xlu0 %1502
    %1504 = vrot.lane.b32.xlu0 %v1421, 100
    %v1505 = vpop.permute.xlu0 %1504
    %1508 = vrot.lane.b32.xlu0 %v1420, 98
    %v1509 = vpop.permute.xlu0 %1508
    %1510 = vrot.lane.b32.xlu0 %v1421, 98
    %v1511 = vpop.permute.xlu0 %1510
    %1514 = vrot.lane.b32.xlu0 %v1420, 96
    %v1515 = vpop.permute.xlu0 %1514
    %1516 = vrot.lane.b32.xlu0 %v1421, 96
    %v1517 = vpop.permute.xlu0 %1516
    %1520 = vrot.lane.b32.xlu0 %v1420, 94
    %v1521 = vpop.permute.xlu0 %1520
    %1522 = vrot.lane.b32.xlu0 %v1421, 94
    %v1523 = vpop.permute.xlu0 %1522
    %1526 = vrot.lane.b32.xlu0 %v1420, 92
    %v1527 = vpop.permute.xlu0 %1526
    %1528 = vrot.lane.b32.xlu0 %v1421, 92
    %v1529 = vpop.permute.xlu0 %1528
    %1532 = vrot.lane.b32.xlu0 %v1420, 90
    %v1533 = vpop.permute.xlu0 %1532
    %1534 = vrot.lane.b32.xlu0 %v1421, 90
    %v1535 = vpop.permute.xlu0 %1534
    %1538 = vrot.lane.b32.xlu0 %v1420, 88
    %v1539 = vpop.permute.xlu0 %1538
    %1540 = vrot.lane.b32.xlu0 %v1421, 88
    %v1541 = vpop.permute.xlu0 %1540
    %1544 = vrot.lane.b32.xlu0 %v1420, 86
    %v1545 = vpop.permute.xlu0 %1544
    %1546 = vrot.lane.b32.xlu0 %v1421, 86
    %v1547 = vpop.permute.xlu0 %1546
    %1550 = vrot.lane.b32.xlu0 %v1420, 84
    %v1551 = vpop.permute.xlu0 %1550
    %1552 = vrot.lane.b32.xlu0 %v1421, 84
    %v1553 = vpop.permute.xlu0 %1552
    %1556 = vrot.lane.b32.xlu0 %v1420, 82
    %v1557 = vpop.permute.xlu0 %1556
    %1558 = vrot.lane.b32.xlu0 %v1421, 82
    %v1559 = vpop.permute.xlu0 %1558
    %v1562 = vrot.slane %v1431, 4
    %v1563 = vsel %vm583, %v1562, %v1420
    %v1564 = vrot.slane %v1420, 4
    %v1565 = vsel %vm583, %v1431, %v1564
    %v1567 = vunpack.c.l.s4 1983009808
    %v1568 = vunpack.c.0.s8 %v1567
    %v1569 = vperm.slane %v1563, %v1568
    %v1571 = vunpack.c.l.s4 1983009808
    %v1572 = vunpack.c.0.s8 %v1571
    %v1573 = vperm.slane %v1565, %v1572
    %v1574 = vrot.slane %v1437, 4
    %v1575 = vsel %vm583, %v1574, %v1425
    %v1576 = vrot.slane %v1425, 4
    %v1577 = vsel %vm583, %v1437, %v1576
    %v1579 = vunpack.c.l.s4 1983009808
    %v1580 = vunpack.c.0.s8 %v1579
    %v1581 = vperm.slane %v1575, %v1580
    %v1583 = vunpack.c.l.s4 1983009808
    %v1584 = vunpack.c.0.s8 %v1583
    %v1585 = vperm.slane %v1577, %v1584
    %v1586 = vrot.slane %v1455, 4
    %v1587 = vsel %vm583, %v1586, %v1443
    %v1588 = vrot.slane %v1443, 4
    %v1589 = vsel %vm583, %v1455, %v1588
    %v1591 = vunpack.c.l.s4 1983009808
    %v1592 = vunpack.c.0.s8 %v1591
    %v1593 = vperm.slane %v1587, %v1592
    %v1595 = vunpack.c.l.s4 1983009808
    %v1596 = vunpack.c.0.s8 %v1595
    %v1597 = vperm.slane %v1589, %v1596
    %v1598 = vrot.slane %v1461, 4
    %v1599 = vsel %vm583, %v1598, %v1449
    %v1600 = vrot.slane %v1449, 4
    %v1601 = vsel %vm583, %v1461, %v1600
    %v1603 = vunpack.c.l.s4 1983009808
    %v1604 = vunpack.c.0.s8 %v1603
    %v1605 = vperm.slane %v1599, %v1604
    %v1607 = vunpack.c.l.s4 1983009808
    %v1608 = vunpack.c.0.s8 %v1607
    %v1609 = vperm.slane %v1601, %v1608
    %v1610 = vrot.slane %v1581, 4
    %v1611 = vsel %vm583, %v1610, %v1569
    %v1612 = vrot.slane %v1569, 4
    %v1613 = vsel %vm583, %v1581, %v1612
    %v1615 = vunpack.c.l.s4 1934713408
    %v1616 = vunpack.c.0.s8 %v1615
    %v1617 = vperm.slane %v1611, %v1616
    %v1619 = vunpack.c.l.s4 1934713408
    %v1620 = vunpack.c.0.s8 %v1619
    %v1621 = vperm.slane %v1613, %v1620
    %v1622 = vrot.slane %v1585, 4
    %v1623 = vsel %vm583, %v1622, %v1573
    %v1624 = vrot.slane %v1573, 4
    %v1625 = vsel %vm583, %v1585, %v1624
    %v1627 = vunpack.c.l.s4 1934713408
    %v1628 = vunpack.c.0.s8 %v1627
    %v1629 = vperm.slane %v1623, %v1628
    %v1631 = vunpack.c.l.s4 1934713408
    %v1632 = vunpack.c.0.s8 %v1631
    %v1633 = vperm.slane %v1625, %v1632
    %v1634 = vrot.slane %v1605, 4
    %v1635 = vsel %vm583, %v1634, %v1593
    %v1636 = vrot.slane %v1593, 4
    %v1637 = vsel %vm583, %v1605, %v1636
    %v1639 = vunpack.c.l.s4 1934713408
    %v1640 = vunpack.c.0.s8 %v1639
    %v1641 = vperm.slane %v1635, %v1640
    %v1643 = vunpack.c.l.s4 1934713408
    %v1644 = vunpack.c.0.s8 %v1643
    %v1645 = vperm.slane %v1637, %v1644
    %v1646 = vrot.slane %v1609, 4
    %v1647 = vsel %vm583, %v1646, %v1597
    %v1648 = vrot.slane %v1597, 4
    %v1649 = vsel %vm583, %v1609, %v1648
    %v1651 = vunpack.c.l.s4 1934713408
    %v1652 = vunpack.c.0.s8 %v1651
    %v1653 = vperm.slane %v1647, %v1652
    %v1655 = vunpack.c.l.s4 1934713408
    %v1656 = vunpack.c.0.s8 %v1655
    %v1657 = vperm.slane %v1649, %v1656
    %v1658 = vrot.slane %v1641, 4
    %v1659 = vsel %vm583, %v1658, %v1617
    %v1660 = vrot.slane %v1617, 4
    %v1661 = vsel %vm583, %v1641, %v1660
    %v1662 = vrot.slane %v1645, 4
    %v1663 = vsel %vm583, %v1662, %v1621
    %v1664 = vrot.slane %v1621, 4
    %v1665 = vsel %vm583, %v1645, %v1664
    %v1666 = vrot.slane %v1653, 4
    %v1667 = vsel %vm583, %v1666, %v1629
    %v1668 = vrot.slane %v1629, 4
    %v1669 = vsel %vm583, %v1653, %v1668
    %v1670 = vrot.slane %v1657, 4
    %v1671 = vsel %vm583, %v1670, %v1633
    %v1672 = vrot.slane %v1633, 4
    %v1673 = vsel %vm583, %v1657, %v1672
    %v1674 = vrot.slane %v1479, 4
    %v1675 = vsel %vm583, %v1674, %v1467
    %v1676 = vrot.slane %v1467, 4
    %v1677 = vsel %vm583, %v1479, %v1676
    %v1679 = vunpack.c.l.s4 1983009808
    %v1680 = vunpack.c.0.s8 %v1679
    %v1681 = vperm.slane %v1675, %v1680
    %v1683 = vunpack.c.l.s4 1983009808
    %v1684 = vunpack.c.0.s8 %v1683
    %v1685 = vperm.slane %v1677, %v1684
    %v1686 = vrot.slane %v1485, 4
    %v1687 = vsel %vm583, %v1686, %v1473
    %v1688 = vrot.slane %v1473, 4
    %v1689 = vsel %vm583, %v1485, %v1688
    %v1691 = vunpack.c.l.s4 1983009808
    %v1692 = vunpack.c.0.s8 %v1691
    %v1693 = vperm.slane %v1687, %v1692
    %v1695 = vunpack.c.l.s4 1983009808
    %v1696 = vunpack.c.0.s8 %v1695
    %v1697 = vperm.slane %v1689, %v1696
    %v1698 = vrot.slane %v1503, 4
    %v1699 = vsel %vm583, %v1698, %v1491
    %v1700 = vrot.slane %v1491, 4
    %v1701 = vsel %vm583, %v1503, %v1700
    %v1703 = vunpack.c.l.s4 1983009808
    %v1704 = vunpack.c.0.s8 %v1703
    %v1705 = vperm.slane %v1699, %v1704
    %v1707 = vunpack.c.l.s4 1983009808
    %v1708 = vunpack.c.0.s8 %v1707
    %v1709 = vperm.slane %v1701, %v1708
    %v1710 = vrot.slane %v1509, 4
    %v1711 = vsel %vm583, %v1710, %v1497
    %v1712 = vrot.slane %v1497, 4
    %v1713 = vsel %vm583, %v1509, %v1712
    %v1715 = vunpack.c.l.s4 1983009808
    %v1716 = vunpack.c.0.s8 %v1715
    %v1717 = vperm.slane %v1711, %v1716
    %v1719 = vunpack.c.l.s4 1983009808
    %v1720 = vunpack.c.0.s8 %v1719
    %v1721 = vperm.slane %v1713, %v1720
    %v1722 = vrot.slane %v1693, 4
    %v1723 = vsel %vm583, %v1722, %v1681
    %v1724 = vrot.slane %v1681, 4
    %v1725 = vsel %vm583, %v1693, %v1724
    %v1727 = vunpack.c.l.s4 1934713408
    %v1728 = vunpack.c.0.s8 %v1727
    %v1729 = vperm.slane %v1723, %v1728
    %v1731 = vunpack.c.l.s4 1934713408
    %v1732 = vunpack.c.0.s8 %v1731
    %v1733 = vperm.slane %v1725, %v1732
    %v1734 = vrot.slane %v1697, 4
    %v1735 = vsel %vm583, %v1734, %v1685
    %v1736 = vrot.slane %v1685, 4
    %v1737 = vsel %vm583, %v1697, %v1736
    %v1739 = vunpack.c.l.s4 1934713408
    %v1740 = vunpack.c.0.s8 %v1739
    %v1741 = vperm.slane %v1735, %v1740
    %v1743 = vunpack.c.l.s4 1934713408
    %v1744 = vunpack.c.0.s8 %v1743
    %v1745 = vperm.slane %v1737, %v1744
    %v1746 = vrot.slane %v1717, 4
    %v1747 = vsel %vm583, %v1746, %v1705
    %v1748 = vrot.slane %v1705, 4
    %v1749 = vsel %vm583, %v1717, %v1748
    %v1751 = vunpack.c.l.s4 1934713408
    %v1752 = vunpack.c.0.s8 %v1751
    %v1753 = vperm.slane %v1747, %v1752
    %v1755 = vunpack.c.l.s4 1934713408
    %v1756 = vunpack.c.0.s8 %v1755
    %v1757 = vperm.slane %v1749, %v1756
    %v1758 = vrot.slane %v1721, 4
    %v1759 = vsel %vm583, %v1758, %v1709
    %v1760 = vrot.slane %v1709, 4
    %v1761 = vsel %vm583, %v1721, %v1760
    %v1763 = vunpack.c.l.s4 1934713408
    %v1764 = vunpack.c.0.s8 %v1763
    %v1765 = vperm.slane %v1759, %v1764
    %v1767 = vunpack.c.l.s4 1934713408
    %v1768 = vunpack.c.0.s8 %v1767
    %v1769 = vperm.slane %v1761, %v1768
    %v1770 = vrot.slane %v1753, 4
    %v1771 = vsel %vm583, %v1770, %v1729
    %v1772 = vrot.slane %v1729, 4
    %v1773 = vsel %vm583, %v1753, %v1772
    %v1774 = vrot.slane %v1757, 4
    %v1775 = vsel %vm583, %v1774, %v1733
    %v1776 = vrot.slane %v1733, 4
    %v1777 = vsel %vm583, %v1757, %v1776
    %v1778 = vrot.slane %v1765, 4
    %v1779 = vsel %vm583, %v1778, %v1741
    %v1780 = vrot.slane %v1741, 4
    %v1781 = vsel %vm583, %v1765, %v1780
    %v1782 = vrot.slane %v1769, 4
    %v1783 = vsel %vm583, %v1782, %v1745
    %v1784 = vrot.slane %v1745, 4
    %v1785 = vsel %vm583, %v1769, %v1784
    %v1786 = vrot.slane %v1527, 4
    %v1787 = vsel %vm583, %v1786, %v1515
    %v1788 = vrot.slane %v1515, 4
    %v1789 = vsel %vm583, %v1527, %v1788
    %v1791 = vunpack.c.l.s4 1983009808
    %v1792 = vunpack.c.0.s8 %v1791
    %v1793 = vperm.slane %v1787, %v1792
    %v1795 = vunpack.c.l.s4 1983009808
    %v1796 = vunpack.c.0.s8 %v1795
    %v1797 = vperm.slane %v1789, %v1796
    %v1798 = vrot.slane %v1533, 4
    %v1799 = vsel %vm583, %v1798, %v1521
    %v1800 = vrot.slane %v1521, 4
    %v1801 = vsel %vm583, %v1533, %v1800
    %v1803 = vunpack.c.l.s4 1983009808
    %v1804 = vunpack.c.0.s8 %v1803
    %v1805 = vperm.slane %v1799, %v1804
    %v1807 = vunpack.c.l.s4 1983009808
    %v1808 = vunpack.c.0.s8 %v1807
    %v1809 = vperm.slane %v1801, %v1808
    %v1810 = vrot.slane %v1551, 4
    %v1811 = vsel %vm583, %v1810, %v1539
    %v1812 = vrot.slane %v1539, 4
    %v1813 = vsel %vm583, %v1551, %v1812
    %v1815 = vunpack.c.l.s4 1983009808
    %v1816 = vunpack.c.0.s8 %v1815
    %v1817 = vperm.slane %v1811, %v1816
    %v1819 = vunpack.c.l.s4 1983009808
    %v1820 = vunpack.c.0.s8 %v1819
    %v1821 = vperm.slane %v1813, %v1820
    %v1822 = vrot.slane %v1557, 4
    %v1823 = vsel %vm583, %v1822, %v1545
    %v1824 = vrot.slane %v1545, 4
    %v1825 = vsel %vm583, %v1557, %v1824
    %v1827 = vunpack.c.l.s4 1983009808
    %v1828 = vunpack.c.0.s8 %v1827
    %v1829 = vperm.slane %v1823, %v1828
    %v1831 = vunpack.c.l.s4 1983009808
    %v1832 = vunpack.c.0.s8 %v1831
    %v1833 = vperm.slane %v1825, %v1832
    %v1834 = vrot.slane %v1805, 4
    %v1835 = vsel %vm583, %v1834, %v1793
    %v1836 = vrot.slane %v1793, 4
    %v1837 = vsel %vm583, %v1805, %v1836
    %v1839 = vunpack.c.l.s4 1934713408
    %v1840 = vunpack.c.0.s8 %v1839
    %v1841 = vperm.slane %v1835, %v1840
    %v1843 = vunpack.c.l.s4 1934713408
    %v1844 = vunpack.c.0.s8 %v1843
    %v1845 = vperm.slane %v1837, %v1844
    %v1846 = vrot.slane %v1809, 4
    %v1847 = vsel %vm583, %v1846, %v1797
    %v1848 = vrot.slane %v1797, 4
    %v1849 = vsel %vm583, %v1809, %v1848
    %v1851 = vunpack.c.l.s4 1934713408
    %v1852 = vunpack.c.0.s8 %v1851
    %v1853 = vperm.slane %v1847, %v1852
    %v1855 = vunpack.c.l.s4 1934713408
    %v1856 = vunpack.c.0.s8 %v1855
    %v1857 = vperm.slane %v1849, %v1856
    %v1858 = vrot.slane %v1829, 4
    %v1859 = vsel %vm583, %v1858, %v1817
    %v1860 = vrot.slane %v1817, 4
    %v1861 = vsel %vm583, %v1829, %v1860
    %v1863 = vunpack.c.l.s4 1934713408
    %v1864 = vunpack.c.0.s8 %v1863
    %v1865 = vperm.slane %v1859, %v1864
    %v1867 = vunpack.c.l.s4 1934713408
    %v1868 = vunpack.c.0.s8 %v1867
    %v1869 = vperm.slane %v1861, %v1868
    %v1870 = vrot.slane %v1833, 4
    %v1871 = vsel %vm583, %v1870, %v1821
    %v1872 = vrot.slane %v1821, 4
    %v1873 = vsel %vm583, %v1833, %v1872
    %v1875 = vunpack.c.l.s4 1934713408
    %v1876 = vunpack.c.0.s8 %v1875
    %v1877 = vperm.slane %v1871, %v1876
    %v1879 = vunpack.c.l.s4 1934713408
    %v1880 = vunpack.c.0.s8 %v1879
    %v1881 = vperm.slane %v1873, %v1880
    %v1882 = vrot.slane %v1865, 4
    %v1883 = vsel %vm583, %v1882, %v1841
    %v1884 = vrot.slane %v1841, 4
    %v1885 = vsel %vm583, %v1865, %v1884
    %v1886 = vrot.slane %v1869, 4
    %v1887 = vsel %vm583, %v1886, %v1845
    %v1888 = vrot.slane %v1845, 4
    %v1889 = vsel %vm583, %v1869, %v1888
    %v1890 = vrot.slane %v1877, 4
    %v1891 = vsel %vm583, %v1890, %v1853
    %v1892 = vrot.slane %v1853, 4
    %v1893 = vsel %vm583, %v1877, %v1892
    %v1894 = vrot.slane %v1881, 4
    %v1895 = vsel %vm583, %v1894, %v1857
    %v1896 = vrot.slane %v1857, 4
    %v1897 = vsel %vm583, %v1881, %v1896
    %v1898 = vrot.slane %v1433, 4
    %v1899 = vsel %vm583, %v1898, %v1421
    %v1900 = vrot.slane %v1421, 4
    %v1901 = vsel %vm583, %v1433, %v1900
    %v1903 = vunpack.c.l.s4 1983009808
    %v1904 = vunpack.c.0.s8 %v1903
    %v1905 = vperm.slane %v1899, %v1904
    %v1907 = vunpack.c.l.s4 1983009808
    %v1908 = vunpack.c.0.s8 %v1907
    %v1909 = vperm.slane %v1901, %v1908
    %v1910 = vrot.slane %v1439, 4
    %v1911 = vsel %vm583, %v1910, %v1427
    %v1912 = vrot.slane %v1427, 4
    %v1913 = vsel %vm583, %v1439, %v1912
    %v1915 = vunpack.c.l.s4 1983009808
    %v1916 = vunpack.c.0.s8 %v1915
    %v1917 = vperm.slane %v1911, %v1916
    %v1919 = vunpack.c.l.s4 1983009808
    %v1920 = vunpack.c.0.s8 %v1919
    %v1921 = vperm.slane %v1913, %v1920
    %v1922 = vrot.slane %v1457, 4
    %v1923 = vsel %vm583, %v1922, %v1445
    %v1924 = vrot.slane %v1445, 4
    %v1925 = vsel %vm583, %v1457, %v1924
    %v1927 = vunpack.c.l.s4 1983009808
    %v1928 = vunpack.c.0.s8 %v1927
    %v1929 = vperm.slane %v1923, %v1928
    %v1931 = vunpack.c.l.s4 1983009808
    %v1932 = vunpack.c.0.s8 %v1931
    %v1933 = vperm.slane %v1925, %v1932
    %v1934 = vrot.slane %v1463, 4
    %v1935 = vsel %vm583, %v1934, %v1451
    %v1936 = vrot.slane %v1451, 4
    %v1937 = vsel %vm583, %v1463, %v1936
    %v1939 = vunpack.c.l.s4 1983009808
    %v1940 = vunpack.c.0.s8 %v1939
    %v1941 = vperm.slane %v1935, %v1940
    %v1943 = vunpack.c.l.s4 1983009808
    %v1944 = vunpack.c.0.s8 %v1943
    %v1945 = vperm.slane %v1937, %v1944
    %v1946 = vrot.slane %v1917, 4
    %v1947 = vsel %vm583, %v1946, %v1905
    %v1948 = vrot.slane %v1905, 4
    %v1949 = vsel %vm583, %v1917, %v1948
    %v1951 = vunpack.c.l.s4 1934713408
    %v1952 = vunpack.c.0.s8 %v1951
    %v1953 = vperm.slane %v1947, %v1952
    %v1955 = vunpack.c.l.s4 1934713408
    %v1956 = vunpack.c.0.s8 %v1955
    %v1957 = vperm.slane %v1949, %v1956
    %v1958 = vrot.slane %v1921, 4
    %v1959 = vsel %vm583, %v1958, %v1909
    %v1960 = vrot.slane %v1909, 4
    %v1961 = vsel %vm583, %v1921, %v1960
    %v1963 = vunpack.c.l.s4 1934713408
    %v1964 = vunpack.c.0.s8 %v1963
    %v1965 = vperm.slane %v1959, %v1964
    %v1967 = vunpack.c.l.s4 1934713408
    %v1968 = vunpack.c.0.s8 %v1967
    %v1969 = vperm.slane %v1961, %v1968
    %v1970 = vrot.slane %v1941, 4
    %v1971 = vsel %vm583, %v1970, %v1929
    %v1972 = vrot.slane %v1929, 4
    %v1973 = vsel %vm583, %v1941, %v1972
    %v1975 = vunpack.c.l.s4 1934713408
    %v1976 = vunpack.c.0.s8 %v1975
    %v1977 = vperm.slane %v1971, %v1976
    %v1979 = vunpack.c.l.s4 1934713408
    %v1980 = vunpack.c.0.s8 %v1979
    %v1981 = vperm.slane %v1973, %v1980
    %v1982 = vrot.slane %v1945, 4
    %v1983 = vsel %vm583, %v1982, %v1933
    %v1984 = vrot.slane %v1933, 4
    %v1985 = vsel %vm583, %v1945, %v1984
    %v1987 = vunpack.c.l.s4 1934713408
    %v1988 = vunpack.c.0.s8 %v1987
    %v1989 = vperm.slane %v1983, %v1988
    %v1991 = vunpack.c.l.s4 1934713408
    %v1992 = vunpack.c.0.s8 %v1991
    %v1993 = vperm.slane %v1985, %v1992
    %v1994 = vrot.slane %v1977, 4
    %v1995 = vsel %vm583, %v1994, %v1953
    %v1996 = vrot.slane %v1953, 4
    %v1997 = vsel %vm583, %v1977, %v1996
    %v1998 = vrot.slane %v1981, 4
    %v1999 = vsel %vm583, %v1998, %v1957
    %v2000 = vrot.slane %v1957, 4
    %v2001 = vsel %vm583, %v1981, %v2000
    %v2002 = vrot.slane %v1989, 4
    %v2003 = vsel %vm583, %v2002, %v1965
    %v2004 = vrot.slane %v1965, 4
    %v2005 = vsel %vm583, %v1989, %v2004
    %v2006 = vrot.slane %v1993, 4
    %v2007 = vsel %vm583, %v2006, %v1969
    %v2008 = vrot.slane %v1969, 4
    %v2009 = vsel %vm583, %v1993, %v2008
    %v2010 = vrot.slane %v1481, 4
    %v2011 = vsel %vm583, %v2010, %v1469
    %v2012 = vrot.slane %v1469, 4
    %v2013 = vsel %vm583, %v1481, %v2012
    %v2015 = vunpack.c.l.s4 1983009808
    %v2016 = vunpack.c.0.s8 %v2015
    %v2017 = vperm.slane %v2011, %v2016
    %v2019 = vunpack.c.l.s4 1983009808
    %v2020 = vunpack.c.0.s8 %v2019
    %v2021 = vperm.slane %v2013, %v2020
    %v2022 = vrot.slane %v1487, 4
    %v2023 = vsel %vm583, %v2022, %v1475
    %v2024 = vrot.slane %v1475, 4
    %v2025 = vsel %vm583, %v1487, %v2024
    %v2027 = vunpack.c.l.s4 1983009808
    %v2028 = vunpack.c.0.s8 %v2027
    %v2029 = vperm.slane %v2023, %v2028
    %v2031 = vunpack.c.l.s4 1983009808
    %v2032 = vunpack.c.0.s8 %v2031
    %v2033 = vperm.slane %v2025, %v2032
    %v2034 = vrot.slane %v1505, 4
    %v2035 = vsel %vm583, %v2034, %v1493
    %v2036 = vrot.slane %v1493, 4
    %v2037 = vsel %vm583, %v1505, %v2036
    %v2039 = vunpack.c.l.s4 1983009808
    %v2040 = vunpack.c.0.s8 %v2039
    %v2041 = vperm.slane %v2035, %v2040
    %v2043 = vunpack.c.l.s4 1983009808
    %v2044 = vunpack.c.0.s8 %v2043
    %v2045 = vperm.slane %v2037, %v2044
    %v2046 = vrot.slane %v1511, 4
    %v2047 = vsel %vm583, %v2046, %v1499
    %v2048 = vrot.slane %v1499, 4
    %v2049 = vsel %vm583, %v1511, %v2048
    %v2051 = vunpack.c.l.s4 1983009808
    %v2052 = vunpack.c.0.s8 %v2051
    %v2053 = vperm.slane %v2047, %v2052
    %v2055 = vunpack.c.l.s4 1983009808
    %v2056 = vunpack.c.0.s8 %v2055
    %v2057 = vperm.slane %v2049, %v2056
    %v2058 = vrot.slane %v2029, 4
    %v2059 = vsel %vm583, %v2058, %v2017
    %v2060 = vrot.slane %v2017, 4
    %v2061 = vsel %vm583, %v2029, %v2060
    %v2063 = vunpack.c.l.s4 1934713408
    %v2064 = vunpack.c.0.s8 %v2063
    %v2065 = vperm.slane %v2059, %v2064
    %v2067 = vunpack.c.l.s4 1934713408
    %v2068 = vunpack.c.0.s8 %v2067
    %v2069 = vperm.slane %v2061, %v2068
    %v2070 = vrot.slane %v2033, 4
    %v2071 = vsel %vm583, %v2070, %v2021
    %v2072 = vrot.slane %v2021, 4
    %v2073 = vsel %vm583, %v2033, %v2072
    %v2075 = vunpack.c.l.s4 1934713408
    %v2076 = vunpack.c.0.s8 %v2075
    %v2077 = vperm.slane %v2071, %v2076
    %v2079 = vunpack.c.l.s4 1934713408
    %v2080 = vunpack.c.0.s8 %v2079
    %v2081 = vperm.slane %v2073, %v2080
    %v2082 = vrot.slane %v2053, 4
    %v2083 = vsel %vm583, %v2082, %v2041
    %v2084 = vrot.slane %v2041, 4
    %v2085 = vsel %vm583, %v2053, %v2084
    %v2087 = vunpack.c.l.s4 1934713408
    %v2088 = vunpack.c.0.s8 %v2087
    %v2089 = vperm.slane %v2083, %v2088
    %v2091 = vunpack.c.l.s4 1934713408
    %v2092 = vunpack.c.0.s8 %v2091
    %v2093 = vperm.slane %v2085, %v2092
    %v2094 = vrot.slane %v2057, 4
    %v2095 = vsel %vm583, %v2094, %v2045
    %v2096 = vrot.slane %v2045, 4
    %v2097 = vsel %vm583, %v2057, %v2096
    %v2099 = vunpack.c.l.s4 1934713408
    %v2100 = vunpack.c.0.s8 %v2099
    %v2101 = vperm.slane %v2095, %v2100
    %v2103 = vunpack.c.l.s4 1934713408
    %v2104 = vunpack.c.0.s8 %v2103
    %v2105 = vperm.slane %v2097, %v2104
    %v2106 = vrot.slane %v2089, 4
    %v2107 = vsel %vm583, %v2106, %v2065
    %v2108 = vrot.slane %v2065, 4
    %v2109 = vsel %vm583, %v2089, %v2108
    %v2110 = vrot.slane %v2093, 4
    %v2111 = vsel %vm583, %v2110, %v2069
    %v2112 = vrot.slane %v2069, 4
    %v2113 = vsel %vm583, %v2093, %v2112
    %v2114 = vrot.slane %v2101, 4
    %v2115 = vsel %vm583, %v2114, %v2077
    %v2116 = vrot.slane %v2077, 4
    %v2117 = vsel %vm583, %v2101, %v2116
    %v2118 = vrot.slane %v2105, 4
    %v2119 = vsel %vm583, %v2118, %v2081
    %v2120 = vrot.slane %v2081, 4
    %v2121 = vsel %vm583, %v2105, %v2120
    %v2122 = vrot.slane %v1529, 4
    %v2123 = vsel %vm583, %v2122, %v1517
    %v2124 = vrot.slane %v1517, 4
    %v2125 = vsel %vm583, %v1529, %v2124
    %v2127 = vunpack.c.l.s4 1983009808
    %v2128 = vunpack.c.0.s8 %v2127
    %v2129 = vperm.slane %v2123, %v2128
    %v2131 = vunpack.c.l.s4 1983009808
    %v2132 = vunpack.c.0.s8 %v2131
    %v2133 = vperm.slane %v2125, %v2132
    %v2134 = vrot.slane %v1535, 4
    %v2135 = vsel %vm583, %v2134, %v1523
    %v2136 = vrot.slane %v1523, 4
    %v2137 = vsel %vm583, %v1535, %v2136
    %v2139 = vunpack.c.l.s4 1983009808
    %v2140 = vunpack.c.0.s8 %v2139
    %v2141 = vperm.slane %v2135, %v2140
    %v2143 = vunpack.c.l.s4 1983009808
    %v2144 = vunpack.c.0.s8 %v2143
    %v2145 = vperm.slane %v2137, %v2144
    %v2146 = vrot.slane %v1553, 4
    %v2147 = vsel %vm583, %v2146, %v1541
    %v2148 = vrot.slane %v1541, 4
    %v2149 = vsel %vm583, %v1553, %v2148
    %v2151 = vunpack.c.l.s4 1983009808
    %v2152 = vunpack.c.0.s8 %v2151
    %v2153 = vperm.slane %v2147, %v2152
    %v2155 = vunpack.c.l.s4 1983009808
    %v2156 = vunpack.c.0.s8 %v2155
    %v2157 = vperm.slane %v2149, %v2156
    %v2158 = vrot.slane %v1559, 4
    %v2159 = vsel %vm583, %v2158, %v1547
    %v2160 = vrot.slane %v1547, 4
    %v2161 = vsel %vm583, %v1559, %v2160
    %v2163 = vunpack.c.l.s4 1983009808
    %v2164 = vunpack.c.0.s8 %v2163
    %v2165 = vperm.slane %v2159, %v2164
    %v2167 = vunpack.c.l.s4 1983009808
    %v2168 = vunpack.c.0.s8 %v2167
    %v2169 = vperm.slane %v2161, %v2168
    %v2170 = vrot.slane %v2141, 4
    %v2171 = vsel %vm583, %v2170, %v2129
    %v2172 = vrot.slane %v2129, 4
    %v2173 = vsel %vm583, %v2141, %v2172
    %v2175 = vunpack.c.l.s4 1934713408
    %v2176 = vunpack.c.0.s8 %v2175
    %v2177 = vperm.slane %v2171, %v2176
    %v2179 = vunpack.c.l.s4 1934713408
    %v2180 = vunpack.c.0.s8 %v2179
    %v2181 = vperm.slane %v2173, %v2180
    %v2182 = vrot.slane %v2145, 4
    %v2183 = vsel %vm583, %v2182, %v2133
    %v2184 = vrot.slane %v2133, 4
    %v2185 = vsel %vm583, %v2145, %v2184
    %v2187 = vunpack.c.l.s4 1934713408
    %v2188 = vunpack.c.0.s8 %v2187
    %v2189 = vperm.slane %v2183, %v2188
    %v2191 = vunpack.c.l.s4 1934713408
    %v2192 = vunpack.c.0.s8 %v2191
    %v2193 = vperm.slane %v2185, %v2192
    %v2194 = vrot.slane %v2165, 4
    %v2195 = vsel %vm583, %v2194, %v2153
    %v2196 = vrot.slane %v2153, 4
    %v2197 = vsel %vm583, %v2165, %v2196
    %v2199 = vunpack.c.l.s4 1934713408
    %v2200 = vunpack.c.0.s8 %v2199
    %v2201 = vperm.slane %v2195, %v2200
    %v2203 = vunpack.c.l.s4 1934713408
    %v2204 = vunpack.c.0.s8 %v2203
    %v2205 = vperm.slane %v2197, %v2204
    %v2206 = vrot.slane %v2169, 4
    %v2207 = vsel %vm583, %v2206, %v2157
    %v2208 = vrot.slane %v2157, 4
    %v2209 = vsel %vm583, %v2169, %v2208
    %v2211 = vunpack.c.l.s4 1934713408
    %v2212 = vunpack.c.0.s8 %v2211
    %v2213 = vperm.slane %v2207, %v2212
    %v2215 = vunpack.c.l.s4 1934713408
    %v2216 = vunpack.c.0.s8 %v2215
    %v2217 = vperm.slane %v2209, %v2216
    %v2218 = vrot.slane %v2201, 4
    %v2219 = vsel %vm583, %v2218, %v2177
    %v2220 = vrot.slane %v2177, 4
    %v2221 = vsel %vm583, %v2201, %v2220
    %v2222 = vrot.slane %v2205, 4
    %v2223 = vsel %vm583, %v2222, %v2181
    %v2224 = vrot.slane %v2181, 4
    %v2225 = vsel %vm583, %v2205, %v2224
    %v2226 = vrot.slane %v2213, 4
    %v2227 = vsel %vm583, %v2226, %v2189
    %v2228 = vrot.slane %v2189, 4
    %v2229 = vsel %vm583, %v2213, %v2228
    %v2230 = vrot.slane %v2217, 4
    %v2231 = vsel %vm583, %v2230, %v2193
    %v2232 = vrot.slane %v2193, 4
    %v2233 = vsel %vm583, %v2217, %v2232
    %v2234 = vsel %vm1255, %v1659, -inf
    %2235 = vmax.xlane.f32.xlu0 %v2234
    %v2236 = vpop.xlane.xlu0 %2235
    %v2237 = vsel %vm1255, %v1771, -inf
    %2238 = vmax.xlane.f32.xlu0 %v2237
    %v2239 = vpop.xlane.xlu0 %2238
    %v2240 = vsel %vm1255, %v1883, -inf
    %2241 = vmax.xlane.f32.xlu0 %v2240
    %v2242 = vpop.xlane.xlu0 %2241
    %v2243 = vsel %vm1255, %v1661, -inf
    %2244 = vmax.xlane.f32.xlu0 %v2243
    %v2245 = vpop.xlane.xlu0 %2244
    %v2246 = vsel %vm1255, %v1773, -inf
    %2247 = vmax.xlane.f32.xlu0 %v2246
    %v2248 = vpop.xlane.xlu0 %2247
    %v2249 = vsel %vm1255, %v1885, -inf
    %2250 = vmax.xlane.f32.xlu0 %v2249
    %v2251 = vpop.xlane.xlu0 %2250
    %v2252 = vsel %vm1255, %v1663, -inf
    %2253 = vmax.xlane.f32.xlu0 %v2252
    %v2254 = vpop.xlane.xlu0 %2253
    %v2255 = vsel %vm1255, %v1775, -inf
    %2256 = vmax.xlane.f32.xlu0 %v2255
    %v2257 = vpop.xlane.xlu0 %2256
    %v2258 = vsel %vm1255, %v1887, -inf
    %2259 = vmax.xlane.f32.xlu0 %v2258
    %v2260 = vpop.xlane.xlu0 %2259
    %v2261 = vsel %vm1255, %v1665, -inf
    %2262 = vmax.xlane.f32.xlu0 %v2261
    %v2263 = vpop.xlane.xlu0 %2262
    %v2264 = vsel %vm1255, %v1777, -inf
    %2265 = vmax.xlane.f32.xlu0 %v2264
    %v2266 = vpop.xlane.xlu0 %2265
    %v2267 = vsel %vm1255, %v1889, -inf
    %2268 = vmax.xlane.f32.xlu0 %v2267
    %v2269 = vpop.xlane.xlu0 %2268
    %v2270 = vsel %vm1255, %v1667, -inf
    %2271 = vmax.xlane.f32.xlu0 %v2270
    %v2272 = vpop.xlane.xlu0 %2271
    %v2273 = vsel %vm1255, %v1779, -inf
    %2274 = vmax.xlane.f32.xlu0 %v2273
    %v2275 = vpop.xlane.xlu0 %2274
    %v2276 = vsel %vm1255, %v1891, -inf
    %2277 = vmax.xlane.f32.xlu0 %v2276
    %v2278 = vpop.xlane.xlu0 %2277
    %v2279 = vsel %vm1255, %v1669, -inf
    %2280 = vmax.xlane.f32.xlu0 %v2279
    %v2281 = vpop.xlane.xlu0 %2280
    %v2282 = vsel %vm1255, %v1781, -inf
    %2283 = vmax.xlane.f32.xlu0 %v2282
    %v2284 = vpop.xlane.xlu0 %2283
    %v2285 = vsel %vm1255, %v1893, -inf
    %2286 = vmax.xlane.f32.xlu0 %v2285
    %v2287 = vpop.xlane.xlu0 %2286
    %v2288 = vsel %vm1255, %v1671, -inf
    %2289 = vmax.xlane.f32.xlu0 %v2288
    %v2290 = vpop.xlane.xlu0 %2289
    %v2291 = vsel %vm1255, %v1783, -inf
    %2292 = vmax.xlane.f32.xlu0 %v2291
    %v2293 = vpop.xlane.xlu0 %2292
    %v2294 = vsel %vm1255, %v1895, -inf
    %2295 = vmax.xlane.f32.xlu0 %v2294
    %v2296 = vpop.xlane.xlu0 %2295
    %v2297 = vsel %vm1255, %v1673, -inf
    %2298 = vmax.xlane.f32.xlu0 %v2297
    %v2299 = vpop.xlane.xlu0 %2298
    %v2300 = vsel %vm1255, %v1785, -inf
    %2301 = vmax.xlane.f32.xlu0 %v2300
    %v2302 = vpop.xlane.xlu0 %2301
    %v2303 = vsel %vm1255, %v1897, -inf
    %2304 = vmax.xlane.f32.xlu0 %v2303
    %v2305 = vpop.xlane.xlu0 %2304
    %v2306 = vsel %vm1255, %v1995, -inf
    %2307 = vmax.xlane.f32.xlu0 %v2306
    %v2308 = vpop.xlane.xlu0 %2307
    %v2309 = vsel %vm1255, %v2107, -inf
    %2310 = vmax.xlane.f32.xlu0 %v2309
    %v2311 = vpop.xlane.xlu0 %2310
    %v2312 = vsel %vm1255, %v2219, -inf
    %2313 = vmax.xlane.f32.xlu0 %v2312
    %v2314 = vpop.xlane.xlu0 %2313
    %v2315 = vsel %vm1255, %v1997, -inf
    %2316 = vmax.xlane.f32.xlu0 %v2315
    %v2317 = vpop.xlane.xlu0 %2316
    %v2318 = vsel %vm1255, %v2109, -inf
    %2319 = vmax.xlane.f32.xlu0 %v2318
    %v2320 = vpop.xlane.xlu0 %2319
    %v2321 = vsel %vm1255, %v2221, -inf
    %2322 = vmax.xlane.f32.xlu0 %v2321
    %v2323 = vpop.xlane.xlu0 %2322
    %v2324 = vsel %vm1255, %v1999, -inf
    %2325 = vmax.xlane.f32.xlu0 %v2324
    %v2326 = vpop.xlane.xlu0 %2325
    %v2327 = vsel %vm1255, %v2111, -inf
    %2328 = vmax.xlane.f32.xlu0 %v2327
    %v2329 = vpop.xlane.xlu0 %2328
    %v2330 = vsel %vm1255, %v2223, -inf
    %2331 = vmax.xlane.f32.xlu0 %v2330
    %v2332 = vpop.xlane.xlu0 %2331
    %v2333 = vsel %vm1255, %v2001, -inf
    %2334 = vmax.xlane.f32.xlu0 %v2333
    %v2335 = vpop.xlane.xlu0 %2334
    %v2336 = vsel %vm1255, %v2113, -inf
    %2337 = vmax.xlane.f32.xlu0 %v2336
    %v2338 = vpop.xlane.xlu0 %2337
    %v2339 = vsel %vm1255, %v2225, -inf
    %2340 = vmax.xlane.f32.xlu0 %v2339
    %v2341 = vpop.xlane.xlu0 %2340
    %v2342 = vsel %vm1255, %v2003, -inf
    %2343 = vmax.xlane.f32.xlu0 %v2342
    %v2344 = vpop.xlane.xlu0 %2343
    %v2345 = vsel %vm1255, %v2115, -inf
    %2346 = vmax.xlane.f32.xlu0 %v2345
    %v2347 = vpop.xlane.xlu0 %2346
    %v2348 = vsel %vm1255, %v2227, -inf
    %2349 = vmax.xlane.f32.xlu0 %v2348
    %v2350 = vpop.xlane.xlu0 %2349
    %v2351 = vsel %vm1255, %v2005, -inf
    %2352 = vmax.xlane.f32.xlu0 %v2351
    %v2353 = vpop.xlane.xlu0 %2352
    %v2354 = vsel %vm1255, %v2117, -inf
    %2355 = vmax.xlane.f32.xlu0 %v2354
    %v2356 = vpop.xlane.xlu0 %2355
    %v2357 = vsel %vm1255, %v2229, -inf
    %2358 = vmax.xlane.f32.xlu0 %v2357
    %v2359 = vpop.xlane.xlu0 %2358
    %v2360 = vsel %vm1255, %v2007, -inf
    %2361 = vmax.xlane.f32.xlu0 %v2360
    %v2362 = vpop.xlane.xlu0 %2361
    %v2363 = vsel %vm1255, %v2119, -inf
    %2364 = vmax.xlane.f32.xlu0 %v2363
    %v2365 = vpop.xlane.xlu0 %2364
    %v2366 = vsel %vm1255, %v2231, -inf
    %2367 = vmax.xlane.f32.xlu0 %v2366
    %v2368 = vpop.xlane.xlu0 %2367
    %v2369 = vsel %vm1255, %v2009, -inf
    %2370 = vmax.xlane.f32.xlu0 %v2369
    %v2371 = vpop.xlane.xlu0 %2370
    %v2372 = vsel %vm1255, %v2121, -inf
    %2373 = vmax.xlane.f32.xlu0 %v2372
    %v2374 = vpop.xlane.xlu0 %2373
    %v2375 = vsel %vm1255, %v2233, -inf
    %2376 = vmax.xlane.f32.xlu0 %v2375
    %v2377 = vpop.xlane.xlu0 %2376
    %s2378 = sld [smem:[#allocation2 + $0x6]]
    %v2379 = vstv %s2378
    %v2380 = vmul.f32 %v2379, %v409
    %v2381 = vmul.f32 %v2379, %v410
    %s2382 = sld [smem:[#allocation2 + $0x7]]
    %v2383 = vstv %s2382
    %v2384 = vmul.f32 %v2383, %v398
    %v2385 = vmul.f32 %v2383, %v399
    %v2386 = vadd.f32 %v2380, %v2384
    %v2387 = vadd.f32 %v2381, %v2385
    %s2388 = sld [smem:[#allocation2 + $0x8]]
    %v2389 = vstv %s2388
    %v2390 = vmul.f32 %v2389, %v418
    %v2391 = vmul.f32 %v2389, %v419
    %s2392 = sld [smem:[#allocation2 + $0xe]]
    %v2393 = vstv %s2392
    %v2394 = vadd.f32 %v2390, %v2393
    %v2395 = vadd.f32 %v2391, %v2393
    %v2396 = vadd.f32 %v2386, %v2394
    %v2397 = vadd.f32 %v2387, %v2395
    %v2398 = vmax.f32 %v2396, 0.0
    %v2399 = vmax.f32 %v2397, 0.0
    %2402 = vrot.lane.b32.xlu0 %v2398, 126
    %v2403 = vpop.permute.xlu0 %2402
    %2404 = vrot.lane.b32.xlu0 %v2399, 126
    %v2405 = vpop.permute.xlu0 %2404
    %2408 = vrot.lane.b32.xlu0 %v2398, 124
    %v2409 = vpop.permute.xlu0 %2408
    %2410 = vrot.lane.b32.xlu0 %v2399, 124
    %v2411 = vpop.permute.xlu0 %2410
    %2414 = vrot.lane.b32.xlu0 %v2398, 122
    %v2415 = vpop.permute.xlu0 %2414
    %2416 = vrot.lane.b32.xlu0 %v2399, 122
    %v2417 = vpop.permute.xlu0 %2416
    %2420 = vrot.lane.b32.xlu0 %v2398, 120
    %v2421 = vpop.permute.xlu0 %2420
    %2422 = vrot.lane.b32.xlu0 %v2399, 120
    %v2423 = vpop.permute.xlu0 %2422
    %2426 = vrot.lane.b32.xlu0 %v2398, 118
    %v2427 = vpop.permute.xlu0 %2426
    %2428 = vrot.lane.b32.xlu0 %v2399, 118
    %v2429 = vpop.permute.xlu0 %2428
    %2432 = vrot.lane.b32.xlu0 %v2398, 116
    %v2433 = vpop.permute.xlu0 %2432
    %2434 = vrot.lane.b32.xlu0 %v2399, 116
    %v2435 = vpop.permute.xlu0 %2434
    %2438 = vrot.lane.b32.xlu0 %v2398, 114
    %v2439 = vpop.permute.xlu0 %2438
    %2440 = vrot.lane.b32.xlu0 %v2399, 114
    %v2441 = vpop.permute.xlu0 %2440
    %2444 = vrot.lane.b32.xlu0 %v2398, 112
    %v2445 = vpop.permute.xlu0 %2444
    %2446 = vrot.lane.b32.xlu0 %v2399, 112
    %v2447 = vpop.permute.xlu0 %2446
    %2450 = vrot.lane.b32.xlu0 %v2398, 110
    %v2451 = vpop.permute.xlu0 %2450
    %2452 = vrot.lane.b32.xlu0 %v2399, 110
    %v2453 = vpop.permute.xlu0 %2452
    %2456 = vrot.lane.b32.xlu0 %v2398, 108
    %v2457 = vpop.permute.xlu0 %2456
    %2458 = vrot.lane.b32.xlu0 %v2399, 108
    %v2459 = vpop.permute.xlu0 %2458
    %2462 = vrot.lane.b32.xlu0 %v2398, 106
    %v2463 = vpop.permute.xlu0 %2462
    %2464 = vrot.lane.b32.xlu0 %v2399, 106
    %v2465 = vpop.permute.xlu0 %2464
    %2468 = vrot.lane.b32.xlu0 %v2398, 104
    %v2469 = vpop.permute.xlu0 %2468
    %2470 = vrot.lane.b32.xlu0 %v2399, 104
    %v2471 = vpop.permute.xlu0 %2470
    %2474 = vrot.lane.b32.xlu0 %v2398, 102
    %v2475 = vpop.permute.xlu0 %2474
    %2476 = vrot.lane.b32.xlu0 %v2399, 102
    %v2477 = vpop.permute.xlu0 %2476
    %2480 = vrot.lane.b32.xlu0 %v2398, 100
    %v2481 = vpop.permute.xlu0 %2480
    %2482 = vrot.lane.b32.xlu0 %v2399, 100
    %v2483 = vpop.permute.xlu0 %2482
    %2486 = vrot.lane.b32.xlu0 %v2398, 98
    %v2487 = vpop.permute.xlu0 %2486
    %2488 = vrot.lane.b32.xlu0 %v2399, 98
    %v2489 = vpop.permute.xlu0 %2488
    %2492 = vrot.lane.b32.xlu0 %v2398, 96
    %v2493 = vpop.permute.xlu0 %2492
    %2494 = vrot.lane.b32.xlu0 %v2399, 96
    %v2495 = vpop.permute.xlu0 %2494
    %2498 = vrot.lane.b32.xlu0 %v2398, 94
    %v2499 = vpop.permute.xlu0 %2498
    %2500 = vrot.lane.b32.xlu0 %v2399, 94
    %v2501 = vpop.permute.xlu0 %2500
    %2504 = vrot.lane.b32.xlu0 %v2398, 92
    %v2505 = vpop.permute.xlu0 %2504
    %2506 = vrot.lane.b32.xlu0 %v2399, 92
    %v2507 = vpop.permute.xlu0 %2506
    %2510 = vrot.lane.b32.xlu0 %v2398, 90
    %v2511 = vpop.permute.xlu0 %2510
    %2512 = vrot.lane.b32.xlu0 %v2399, 90
    %v2513 = vpop.permute.xlu0 %2512
    %2516 = vrot.lane.b32.xlu0 %v2398, 88
    %v2517 = vpop.permute.xlu0 %2516
    %2518 = vrot.lane.b32.xlu0 %v2399, 88
    %v2519 = vpop.permute.xlu0 %2518
    %2522 = vrot.lane.b32.xlu0 %v2398, 86
    %v2523 = vpop.permute.xlu0 %2522
    %2524 = vrot.lane.b32.xlu0 %v2399, 86
    %v2525 = vpop.permute.xlu0 %2524
    %2528 = vrot.lane.b32.xlu0 %v2398, 84
    %v2529 = vpop.permute.xlu0 %2528
    %2530 = vrot.lane.b32.xlu0 %v2399, 84
    %v2531 = vpop.permute.xlu0 %2530
    %2534 = vrot.lane.b32.xlu0 %v2398, 82
    %v2535 = vpop.permute.xlu0 %2534
    %2536 = vrot.lane.b32.xlu0 %v2399, 82
    %v2537 = vpop.permute.xlu0 %2536
    %v2540 = vrot.slane %v2409, 4
    %v2541 = vsel %vm583, %v2540, %v2398
    %v2542 = vrot.slane %v2398, 4
    %v2543 = vsel %vm583, %v2409, %v2542
    %v2545 = vunpack.c.l.s4 1983009808
    %v2546 = vunpack.c.0.s8 %v2545
    %v2547 = vperm.slane %v2541, %v2546
    %v2549 = vunpack.c.l.s4 1983009808
    %v2550 = vunpack.c.0.s8 %v2549
    %v2551 = vperm.slane %v2543, %v2550
    %v2552 = vrot.slane %v2415, 4
    %v2553 = vsel %vm583, %v2552, %v2403
    %v2554 = vrot.slane %v2403, 4
    %v2555 = vsel %vm583, %v2415, %v2554
    %v2557 = vunpack.c.l.s4 1983009808
    %v2558 = vunpack.c.0.s8 %v2557
    %v2559 = vperm.slane %v2553, %v2558
    %v2561 = vunpack.c.l.s4 1983009808
    %v2562 = vunpack.c.0.s8 %v2561
    %v2563 = vperm.slane %v2555, %v2562
    %v2564 = vrot.slane %v2433, 4
    %v2565 = vsel %vm583, %v2564, %v2421
    %v2566 = vrot.slane %v2421, 4
    %v2567 = vsel %vm583, %v2433, %v2566
    %v2569 = vunpack.c.l.s4 1983009808
    %v2570 = vunpack.c.0.s8 %v2569
    %v2571 = vperm.slane %v2565, %v2570
    %v2573 = vunpack.c.l.s4 1983009808
    %v2574 = vunpack.c.0.s8 %v2573
    %v2575 = vperm.slane %v2567, %v2574
    %v2576 = vrot.slane %v2439, 4
    %v2577 = vsel %vm583, %v2576, %v2427
    %v2578 = vrot.slane %v2427, 4
    %v2579 = vsel %vm583, %v2439, %v2578
    %v2581 = vunpack.c.l.s4 1983009808
    %v2582 = vunpack.c.0.s8 %v2581
    %v2583 = vperm.slane %v2577, %v2582
    %v2585 = vunpack.c.l.s4 1983009808
    %v2586 = vunpack.c.0.s8 %v2585
    %v2587 = vperm.slane %v2579, %v2586
    %v2588 = vrot.slane %v2559, 4
    %v2589 = vsel %vm583, %v2588, %v2547
    %v2590 = vrot.slane %v2547, 4
    %v2591 = vsel %vm583, %v2559, %v2590
    %v2593 = vunpack.c.l.s4 1934713408
    %v2594 = vunpack.c.0.s8 %v2593
    %v2595 = vperm.slane %v2589, %v2594
    %v2597 = vunpack.c.l.s4 1934713408
    %v2598 = vunpack.c.0.s8 %v2597
    %v2599 = vperm.slane %v2591, %v2598
    %v2600 = vrot.slane %v2563, 4
    %v2601 = vsel %vm583, %v2600, %v2551
    %v2602 = vrot.slane %v2551, 4
    %v2603 = vsel %vm583, %v2563, %v2602
    %v2605 = vunpack.c.l.s4 1934713408
    %v2606 = vunpack.c.0.s8 %v2605
    %v2607 = vperm.slane %v2601, %v2606
    %v2609 = vunpack.c.l.s4 1934713408
    %v2610 = vunpack.c.0.s8 %v2609
    %v2611 = vperm.slane %v2603, %v2610
    %v2612 = vrot.slane %v2583, 4
    %v2613 = vsel %vm583, %v2612, %v2571
    %v2614 = vrot.slane %v2571, 4
    %v2615 = vsel %vm583, %v2583, %v2614
    %v2617 = vunpack.c.l.s4 1934713408
    %v2618 = vunpack.c.0.s8 %v2617
    %v2619 = vperm.slane %v2613, %v2618
    %v2621 = vunpack.c.l.s4 1934713408
    %v2622 = vunpack.c.0.s8 %v2621
    %v2623 = vperm.slane %v2615, %v2622
    %v2624 = vrot.slane %v2587, 4
    %v2625 = vsel %vm583, %v2624, %v2575
    %v2626 = vrot.slane %v2575, 4
    %v2627 = vsel %vm583, %v2587, %v2626
    %v2629 = vunpack.c.l.s4 1934713408
    %v2630 = vunpack.c.0.s8 %v2629
    %v2631 = vperm.slane %v2625, %v2630
    %v2633 = vunpack.c.l.s4 1934713408
    %v2634 = vunpack.c.0.s8 %v2633
    %v2635 = vperm.slane %v2627, %v2634
    %v2636 = vrot.slane %v2619, 4
    %v2637 = vsel %vm583, %v2636, %v2595
    %v2638 = vrot.slane %v2595, 4
    %v2639 = vsel %vm583, %v2619, %v2638
    %v2640 = vrot.slane %v2623, 4
    %v2641 = vsel %vm583, %v2640, %v2599
    %v2642 = vrot.slane %v2599, 4
    %v2643 = vsel %vm583, %v2623, %v2642
    %v2644 = vrot.slane %v2631, 4
    %v2645 = vsel %vm583, %v2644, %v2607
    %v2646 = vrot.slane %v2607, 4
    %v2647 = vsel %vm583, %v2631, %v2646
    %v2648 = vrot.slane %v2635, 4
    %v2649 = vsel %vm583, %v2648, %v2611
    %v2650 = vrot.slane %v2611, 4
    %v2651 = vsel %vm583, %v2635, %v2650
    %v2652 = vrot.slane %v2457, 4
    %v2653 = vsel %vm583, %v2652, %v2445
    %v2654 = vrot.slane %v2445, 4
    %v2655 = vsel %vm583, %v2457, %v2654
    %v2657 = vunpack.c.l.s4 1983009808
    %v2658 = vunpack.c.0.s8 %v2657
    %v2659 = vperm.slane %v2653, %v2658
    %v2661 = vunpack.c.l.s4 1983009808
    %v2662 = vunpack.c.0.s8 %v2661
    %v2663 = vperm.slane %v2655, %v2662
    %v2664 = vrot.slane %v2463, 4
    %v2665 = vsel %vm583, %v2664, %v2451
    %v2666 = vrot.slane %v2451, 4
    %v2667 = vsel %vm583, %v2463, %v2666
    %v2669 = vunpack.c.l.s4 1983009808
    %v2670 = vunpack.c.0.s8 %v2669
    %v2671 = vperm.slane %v2665, %v2670
    %v2673 = vunpack.c.l.s4 1983009808
    %v2674 = vunpack.c.0.s8 %v2673
    %v2675 = vperm.slane %v2667, %v2674
    %v2676 = vrot.slane %v2481, 4
    %v2677 = vsel %vm583, %v2676, %v2469
    %v2678 = vrot.slane %v2469, 4
    %v2679 = vsel %vm583, %v2481, %v2678
    %v2681 = vunpack.c.l.s4 1983009808
    %v2682 = vunpack.c.0.s8 %v2681
    %v2683 = vperm.slane %v2677, %v2682
    %v2685 = vunpack.c.l.s4 1983009808
    %v2686 = vunpack.c.0.s8 %v2685
    %v2687 = vperm.slane %v2679, %v2686
    %v2688 = vrot.slane %v2487, 4
    %v2689 = vsel %vm583, %v2688, %v2475
    %v2690 = vrot.slane %v2475, 4
    %v2691 = vsel %vm583, %v2487, %v2690
    %v2693 = vunpack.c.l.s4 1983009808
    %v2694 = vunpack.c.0.s8 %v2693
    %v2695 = vperm.slane %v2689, %v2694
    %v2697 = vunpack.c.l.s4 1983009808
    %v2698 = vunpack.c.0.s8 %v2697
    %v2699 = vperm.slane %v2691, %v2698
    %v2700 = vrot.slane %v2671, 4
    %v2701 = vsel %vm583, %v2700, %v2659
    %v2702 = vrot.slane %v2659, 4
    %v2703 = vsel %vm583, %v2671, %v2702
    %v2705 = vunpack.c.l.s4 1934713408
    %v2706 = vunpack.c.0.s8 %v2705
    %v2707 = vperm.slane %v2701, %v2706
    %v2709 = vunpack.c.l.s4 1934713408
    %v2710 = vunpack.c.0.s8 %v2709
    %v2711 = vperm.slane %v2703, %v2710
    %v2712 = vrot.slane %v2675, 4
    %v2713 = vsel %vm583, %v2712, %v2663
    %v2714 = vrot.slane %v2663, 4
    %v2715 = vsel %vm583, %v2675, %v2714
    %v2717 = vunpack.c.l.s4 1934713408
    %v2718 = vunpack.c.0.s8 %v2717
    %v2719 = vperm.slane %v2713, %v2718
    %v2721 = vunpack.c.l.s4 1934713408
    %v2722 = vunpack.c.0.s8 %v2721
    %v2723 = vperm.slane %v2715, %v2722
    %v2724 = vrot.slane %v2695, 4
    %v2725 = vsel %vm583, %v2724, %v2683
    %v2726 = vrot.slane %v2683, 4
    %v2727 = vsel %vm583, %v2695, %v2726
    %v2729 = vunpack.c.l.s4 1934713408
    %v2730 = vunpack.c.0.s8 %v2729
    %v2731 = vperm.slane %v2725, %v2730
    %v2733 = vunpack.c.l.s4 1934713408
    %v2734 = vunpack.c.0.s8 %v2733
    %v2735 = vperm.slane %v2727, %v2734
    %v2736 = vrot.slane %v2699, 4
    %v2737 = vsel %vm583, %v2736, %v2687
    %v2738 = vrot.slane %v2687, 4
    %v2739 = vsel %vm583, %v2699, %v2738
    %v2741 = vunpack.c.l.s4 1934713408
    %v2742 = vunpack.c.0.s8 %v2741
    %v2743 = vperm.slane %v2737, %v2742
    %v2745 = vunpack.c.l.s4 1934713408
    %v2746 = vunpack.c.0.s8 %v2745
    %v2747 = vperm.slane %v2739, %v2746
    %v2748 = vrot.slane %v2731, 4
    %v2749 = vsel %vm583, %v2748, %v2707
    %v2750 = vrot.slane %v2707, 4
    %v2751 = vsel %vm583, %v2731, %v2750
    %v2752 = vrot.slane %v2735, 4
    %v2753 = vsel %vm583, %v2752, %v2711
    %v2754 = vrot.slane %v2711, 4
    %v2755 = vsel %vm583, %v2735, %v2754
    %v2756 = vrot.slane %v2743, 4
    %v2757 = vsel %vm583, %v2756, %v2719
    %v2758 = vrot.slane %v2719, 4
    %v2759 = vsel %vm583, %v2743, %v2758
    %v2760 = vrot.slane %v2747, 4
    %v2761 = vsel %vm583, %v2760, %v2723
    %v2762 = vrot.slane %v2723, 4
    %v2763 = vsel %vm583, %v2747, %v2762
    %v2764 = vrot.slane %v2505, 4
    %v2765 = vsel %vm583, %v2764, %v2493
    %v2766 = vrot.slane %v2493, 4
    %v2767 = vsel %vm583, %v2505, %v2766
    %v2769 = vunpack.c.l.s4 1983009808
    %v2770 = vunpack.c.0.s8 %v2769
    %v2771 = vperm.slane %v2765, %v2770
    %v2773 = vunpack.c.l.s4 1983009808
    %v2774 = vunpack.c.0.s8 %v2773
    %v2775 = vperm.slane %v2767, %v2774
    %v2776 = vrot.slane %v2511, 4
    %v2777 = vsel %vm583, %v2776, %v2499
    %v2778 = vrot.slane %v2499, 4
    %v2779 = vsel %vm583, %v2511, %v2778
    %v2781 = vunpack.c.l.s4 1983009808
    %v2782 = vunpack.c.0.s8 %v2781
    %v2783 = vperm.slane %v2777, %v2782
    %v2785 = vunpack.c.l.s4 1983009808
    %v2786 = vunpack.c.0.s8 %v2785
    %v2787 = vperm.slane %v2779, %v2786
    %v2788 = vrot.slane %v2529, 4
    %v2789 = vsel %vm583, %v2788, %v2517
    %v2790 = vrot.slane %v2517, 4
    %v2791 = vsel %vm583, %v2529, %v2790
    %v2793 = vunpack.c.l.s4 1983009808
    %v2794 = vunpack.c.0.s8 %v2793
    %v2795 = vperm.slane %v2789, %v2794
    %v2797 = vunpack.c.l.s4 1983009808
    %v2798 = vunpack.c.0.s8 %v2797
    %v2799 = vperm.slane %v2791, %v2798
    %v2800 = vrot.slane %v2535, 4
    %v2801 = vsel %vm583, %v2800, %v2523
    %v2802 = vrot.slane %v2523, 4
    %v2803 = vsel %vm583, %v2535, %v2802
    %v2805 = vunpack.c.l.s4 1983009808
    %v2806 = vunpack.c.0.s8 %v2805
    %v2807 = vperm.slane %v2801, %v2806
    %v2809 = vunpack.c.l.s4 1983009808
    %v2810 = vunpack.c.0.s8 %v2809
    %v2811 = vperm.slane %v2803, %v2810
    %v2812 = vrot.slane %v2783, 4
    %v2813 = vsel %vm583, %v2812, %v2771
    %v2814 = vrot.slane %v2771, 4
    %v2815 = vsel %vm583, %v2783, %v2814
    %v2817 = vunpack.c.l.s4 1934713408
    %v2818 = vunpack.c.0.s8 %v2817
    %v2819 = vperm.slane %v2813, %v2818
    %v2821 = vunpack.c.l.s4 1934713408
    %v2822 = vunpack.c.0.s8 %v2821
    %v2823 = vperm.slane %v2815, %v2822
    %v2824 = vrot.slane %v2787, 4
    %v2825 = vsel %vm583, %v2824, %v2775
    %v2826 = vrot.slane %v2775, 4
    %v2827 = vsel %vm583, %v2787, %v2826
    %v2829 = vunpack.c.l.s4 1934713408
    %v2830 = vunpack.c.0.s8 %v2829
    %v2831 = vperm.slane %v2825, %v2830
    %v2833 = vunpack.c.l.s4 1934713408
    %v2834 = vunpack.c.0.s8 %v2833
    %v2835 = vperm.slane %v2827, %v2834
    %v2836 = vrot.slane %v2807, 4
    %v2837 = vsel %vm583, %v2836, %v2795
    %v2838 = vrot.slane %v2795, 4
    %v2839 = vsel %vm583, %v2807, %v2838
    %v2841 = vunpack.c.l.s4 1934713408
    %v2842 = vunpack.c.0.s8 %v2841
    %v2843 = vperm.slane %v2837, %v2842
    %v2845 = vunpack.c.l.s4 1934713408
    %v2846 = vunpack.c.0.s8 %v2845
    %v2847 = vperm.slane %v2839, %v2846
    %v2848 = vrot.slane %v2811, 4
    %v2849 = vsel %vm583, %v2848, %v2799
    %v2850 = vrot.slane %v2799, 4
    %v2851 = vsel %vm583, %v2811, %v2850
    %v2853 = vunpack.c.l.s4 1934713408
    %v2854 = vunpack.c.0.s8 %v2853
    %v2855 = vperm.slane %v2849, %v2854
    %v2857 = vunpack.c.l.s4 1934713408
    %v2858 = vunpack.c.0.s8 %v2857
    %v2859 = vperm.slane %v2851, %v2858
    %v2860 = vrot.slane %v2843, 4
    %v2861 = vsel %vm583, %v2860, %v2819
    %v2862 = vrot.slane %v2819, 4
    %v2863 = vsel %vm583, %v2843, %v2862
    %v2864 = vrot.slane %v2847, 4
    %v2865 = vsel %vm583, %v2864, %v2823
    %v2866 = vrot.slane %v2823, 4
    %v2867 = vsel %vm583, %v2847, %v2866
    %v2868 = vrot.slane %v2855, 4
    %v2869 = vsel %vm583, %v2868, %v2831
    %v2870 = vrot.slane %v2831, 4
    %v2871 = vsel %vm583, %v2855, %v2870
    %v2872 = vrot.slane %v2859, 4
    %v2873 = vsel %vm583, %v2872, %v2835
    %v2874 = vrot.slane %v2835, 4
    %v2875 = vsel %vm583, %v2859, %v2874
    %v2876 = vrot.slane %v2411, 4
    %v2877 = vsel %vm583, %v2876, %v2399
    %v2878 = vrot.slane %v2399, 4
    %v2879 = vsel %vm583, %v2411, %v2878
    %v2881 = vunpack.c.l.s4 1983009808
    %v2882 = vunpack.c.0.s8 %v2881
    %v2883 = vperm.slane %v2877, %v2882
    %v2885 = vunpack.c.l.s4 1983009808
    %v2886 = vunpack.c.0.s8 %v2885
    %v2887 = vperm.slane %v2879, %v2886
    %v2888 = vrot.slane %v2417, 4
    %v2889 = vsel %vm583, %v2888, %v2405
    %v2890 = vrot.slane %v2405, 4
    %v2891 = vsel %vm583, %v2417, %v2890
    %v2893 = vunpack.c.l.s4 1983009808
    %v2894 = vunpack.c.0.s8 %v2893
    %v2895 = vperm.slane %v2889, %v2894
    %v2897 = vunpack.c.l.s4 1983009808
    %v2898 = vunpack.c.0.s8 %v2897
    %v2899 = vperm.slane %v2891, %v2898
    %v2900 = vrot.slane %v2435, 4
    %v2901 = vsel %vm583, %v2900, %v2423
    %v2902 = vrot.slane %v2423, 4
    %v2903 = vsel %vm583, %v2435, %v2902
    %v2905 = vunpack.c.l.s4 1983009808
    %v2906 = vunpack.c.0.s8 %v2905
    %v2907 = vperm.slane %v2901, %v2906
    %v2909 = vunpack.c.l.s4 1983009808
    %v2910 = vunpack.c.0.s8 %v2909
    %v2911 = vperm.slane %v2903, %v2910
    %v2912 = vrot.slane %v2441, 4
    %v2913 = vsel %vm583, %v2912, %v2429
    %v2914 = vrot.slane %v2429, 4
    %v2915 = vsel %vm583, %v2441, %v2914
    %v2917 = vunpack.c.l.s4 1983009808
    %v2918 = vunpack.c.0.s8 %v2917
    %v2919 = vperm.slane %v2913, %v2918
    %v2921 = vunpack.c.l.s4 1983009808
    %v2922 = vunpack.c.0.s8 %v2921
    %v2923 = vperm.slane %v2915, %v2922
    %v2924 = vrot.slane %v2895, 4
    %v2925 = vsel %vm583, %v2924, %v2883
    %v2926 = vrot.slane %v2883, 4
    %v2927 = vsel %vm583, %v2895, %v2926
    %v2929 = vunpack.c.l.s4 1934713408
    %v2930 = vunpack.c.0.s8 %v2929
    %v2931 = vperm.slane %v2925, %v2930
    %v2933 = vunpack.c.l.s4 1934713408
    %v2934 = vunpack.c.0.s8 %v2933
    %v2935 = vperm.slane %v2927, %v2934
    %v2936 = vrot.slane %v2899, 4
    %v2937 = vsel %vm583, %v2936, %v2887
    %v2938 = vrot.slane %v2887, 4
    %v2939 = vsel %vm583, %v2899, %v2938
    %v2941 = vunpack.c.l.s4 1934713408
    %v2942 = vunpack.c.0.s8 %v2941
    %v2943 = vperm.slane %v2937, %v2942
    %v2945 = vunpack.c.l.s4 1934713408
    %v2946 = vunpack.c.0.s8 %v2945
    %v2947 = vperm.slane %v2939, %v2946
    %v2948 = vrot.slane %v2919, 4
    %v2949 = vsel %vm583, %v2948, %v2907
    %v2950 = vrot.slane %v2907, 4
    %v2951 = vsel %vm583, %v2919, %v2950
    %v2953 = vunpack.c.l.s4 1934713408
    %v2954 = vunpack.c.0.s8 %v2953
    %v2955 = vperm.slane %v2949, %v2954
    %v2957 = vunpack.c.l.s4 1934713408
    %v2958 = vunpack.c.0.s8 %v2957
    %v2959 = vperm.slane %v2951, %v2958
    %v2960 = vrot.slane %v2923, 4
    %v2961 = vsel %vm583, %v2960, %v2911
    %v2962 = vrot.slane %v2911, 4
    %v2963 = vsel %vm583, %v2923, %v2962
    %v2965 = vunpack.c.l.s4 1934713408
    %v2966 = vunpack.c.0.s8 %v2965
    %v2967 = vperm.slane %v2961, %v2966
    %v2969 = vunpack.c.l.s4 1934713408
    %v2970 = vunpack.c.0.s8 %v2969
    %v2971 = vperm.slane %v2963, %v2970
    %v2972 = vrot.slane %v2955, 4
    %v2973 = vsel %vm583, %v2972, %v2931
    %v2974 = vrot.slane %v2931, 4
    %v2975 = vsel %vm583, %v2955, %v2974
    %v2976 = vrot.slane %v2959, 4
    %v2977 = vsel %vm583, %v2976, %v2935
    %v2978 = vrot.slane %v2935, 4
    %v2979 = vsel %vm583, %v2959, %v2978
    %v2980 = vrot.slane %v2967, 4
    %v2981 = vsel %vm583, %v2980, %v2943
    %v2982 = vrot.slane %v2943, 4
    %v2983 = vsel %vm583, %v2967, %v2982
    %v2984 = vrot.slane %v2971, 4
    %v2985 = vsel %vm583, %v2984, %v2947
    %v2986 = vrot.slane %v2947, 4
    %v2987 = vsel %vm583, %v2971, %v2986
    %v2988 = vrot.slane %v2459, 4
    %v2989 = vsel %vm583, %v2988, %v2447
    %v2990 = vrot.slane %v2447, 4
    %v2991 = vsel %vm583, %v2459, %v2990
    %v2993 = vunpack.c.l.s4 1983009808
    %v2994 = vunpack.c.0.s8 %v2993
    %v2995 = vperm.slane %v2989, %v2994
    %v2997 = vunpack.c.l.s4 1983009808
    %v2998 = vunpack.c.0.s8 %v2997
    %v2999 = vperm.slane %v2991, %v2998
    %v3000 = vrot.slane %v2465, 4
    %v3001 = vsel %vm583, %v3000, %v2453
    %v3002 = vrot.slane %v2453, 4
    %v3003 = vsel %vm583, %v2465, %v3002
    %v3005 = vunpack.c.l.s4 1983009808
    %v3006 = vunpack.c.0.s8 %v3005
    %v3007 = vperm.slane %v3001, %v3006
    %v3009 = vunpack.c.l.s4 1983009808
    %v3010 = vunpack.c.0.s8 %v3009
    %v3011 = vperm.slane %v3003, %v3010
    %v3012 = vrot.slane %v2483, 4
    %v3013 = vsel %vm583, %v3012, %v2471
    %v3014 = vrot.slane %v2471, 4
    %v3015 = vsel %vm583, %v2483, %v3014
    %v3017 = vunpack.c.l.s4 1983009808
    %v3018 = vunpack.c.0.s8 %v3017
    %v3019 = vperm.slane %v3013, %v3018
    %v3021 = vunpack.c.l.s4 1983009808
    %v3022 = vunpack.c.0.s8 %v3021
    %v3023 = vperm.slane %v3015, %v3022
    %v3024 = vrot.slane %v2489, 4
    %v3025 = vsel %vm583, %v3024, %v2477
    %v3026 = vrot.slane %v2477, 4
    %v3027 = vsel %vm583, %v2489, %v3026
    %v3029 = vunpack.c.l.s4 1983009808
    %v3030 = vunpack.c.0.s8 %v3029
    %v3031 = vperm.slane %v3025, %v3030
    %v3033 = vunpack.c.l.s4 1983009808
    %v3034 = vunpack.c.0.s8 %v3033
    %v3035 = vperm.slane %v3027, %v3034
    %v3036 = vrot.slane %v3007, 4
    %v3037 = vsel %vm583, %v3036, %v2995
    %v3038 = vrot.slane %v2995, 4
    %v3039 = vsel %vm583, %v3007, %v3038
    %v3041 = vunpack.c.l.s4 1934713408
    %v3042 = vunpack.c.0.s8 %v3041
    %v3043 = vperm.slane %v3037, %v3042
    %v3045 = vunpack.c.l.s4 1934713408
    %v3046 = vunpack.c.0.s8 %v3045
    %v3047 = vperm.slane %v3039, %v3046
    %v3048 = vrot.slane %v3011, 4
    %v3049 = vsel %vm583, %v3048, %v2999
    %v3050 = vrot.slane %v2999, 4
    %v3051 = vsel %vm583, %v3011, %v3050
    %v3053 = vunpack.c.l.s4 1934713408
    %v3054 = vunpack.c.0.s8 %v3053
    %v3055 = vperm.slane %v3049, %v3054
    %v3057 = vunpack.c.l.s4 1934713408
    %v3058 = vunpack.c.0.s8 %v3057
    %v3059 = vperm.slane %v3051, %v3058
    %v3060 = vrot.slane %v3031, 4
    %v3061 = vsel %vm583, %v3060, %v3019
    %v3062 = vrot.slane %v3019, 4
    %v3063 = vsel %vm583, %v3031, %v3062
    %v3065 = vunpack.c.l.s4 1934713408
    %v3066 = vunpack.c.0.s8 %v3065
    %v3067 = vperm.slane %v3061, %v3066
    %v3069 = vunpack.c.l.s4 1934713408
    %v3070 = vunpack.c.0.s8 %v3069
    %v3071 = vperm.slane %v3063, %v3070
    %v3072 = vrot.slane %v3035, 4
    %v3073 = vsel %vm583, %v3072, %v3023
    %v3074 = vrot.slane %v3023, 4
    %v3075 = vsel %vm583, %v3035, %v3074
    %v3077 = vunpack.c.l.s4 1934713408
    %v3078 = vunpack.c.0.s8 %v3077
    %v3079 = vperm.slane %v3073, %v3078
    %v3081 = vunpack.c.l.s4 1934713408
    %v3082 = vunpack.c.0.s8 %v3081
    %v3083 = vperm.slane %v3075, %v3082
    %v3084 = vrot.slane %v3067, 4
    %v3085 = vsel %vm583, %v3084, %v3043
    %v3086 = vrot.slane %v3043, 4
    %v3087 = vsel %vm583, %v3067, %v3086
    %v3088 = vrot.slane %v3071, 4
    %v3089 = vsel %vm583, %v3088, %v3047
    %v3090 = vrot.slane %v3047, 4
    %v3091 = vsel %vm583, %v3071, %v3090
    %v3092 = vrot.slane %v3079, 4
    %v3093 = vsel %vm583, %v3092, %v3055
    %v3094 = vrot.slane %v3055, 4
    %v3095 = vsel %vm583, %v3079, %v3094
    %v3096 = vrot.slane %v3083, 4
    %v3097 = vsel %vm583, %v3096, %v3059
    %v3098 = vrot.slane %v3059, 4
    %v3099 = vsel %vm583, %v3083, %v3098
    %v3100 = vrot.slane %v2507, 4
    %v3101 = vsel %vm583, %v3100, %v2495
    %v3102 = vrot.slane %v2495, 4
    %v3103 = vsel %vm583, %v2507, %v3102
    %v3105 = vunpack.c.l.s4 1983009808
    %v3106 = vunpack.c.0.s8 %v3105
    %v3107 = vperm.slane %v3101, %v3106
    %v3109 = vunpack.c.l.s4 1983009808
    %v3110 = vunpack.c.0.s8 %v3109
    %v3111 = vperm.slane %v3103, %v3110
    %v3112 = vrot.slane %v2513, 4
    %v3113 = vsel %vm583, %v3112, %v2501
    %v3114 = vrot.slane %v2501, 4
    %v3115 = vsel %vm583, %v2513, %v3114
    %v3117 = vunpack.c.l.s4 1983009808
    %v3118 = vunpack.c.0.s8 %v3117
    %v3119 = vperm.slane %v3113, %v3118
    %v3121 = vunpack.c.l.s4 1983009808
    %v3122 = vunpack.c.0.s8 %v3121
    %v3123 = vperm.slane %v3115, %v3122
    %v3124 = vrot.slane %v2531, 4
    %v3125 = vsel %vm583, %v3124, %v2519
    %v3126 = vrot.slane %v2519, 4
    %v3127 = vsel %vm583, %v2531, %v3126
    %v3129 = vunpack.c.l.s4 1983009808
    %v3130 = vunpack.c.0.s8 %v3129
    %v3131 = vperm.slane %v3125, %v3130
    %v3133 = vunpack.c.l.s4 1983009808
    %v3134 = vunpack.c.0.s8 %v3133
    %v3135 = vperm.slane %v3127, %v3134
    %v3136 = vrot.slane %v2537, 4
    %v3137 = vsel %vm583, %v3136, %v2525
    %v3138 = vrot.slane %v2525, 4
    %v3139 = vsel %vm583, %v2537, %v3138
    %v3141 = vunpack.c.l.s4 1983009808
    %v3142 = vunpack.c.0.s8 %v3141
    %v3143 = vperm.slane %v3137, %v3142
    %v3145 = vunpack.c.l.s4 1983009808
    %v3146 = vunpack.c.0.s8 %v3145
    %v3147 = vperm.slane %v3139, %v3146
    %v3148 = vrot.slane %v3119, 4
    %v3149 = vsel %vm583, %v3148, %v3107
    %v3150 = vrot.slane %v3107, 4
    %v3151 = vsel %vm583, %v3119, %v3150
    %v3153 = vunpack.c.l.s4 1934713408
    %v3154 = vunpack.c.0.s8 %v3153
    %v3155 = vperm.slane %v3149, %v3154
    %v3157 = vunpack.c.l.s4 1934713408
    %v3158 = vunpack.c.0.s8 %v3157
    %v3159 = vperm.slane %v3151, %v3158
    %v3160 = vrot.slane %v3123, 4
    %v3161 = vsel %vm583, %v3160, %v3111
    %v3162 = vrot.slane %v3111, 4
    %v3163 = vsel %vm583, %v3123, %v3162
    %v3165 = vunpack.c.l.s4 1934713408
    %v3166 = vunpack.c.0.s8 %v3165
    %v3167 = vperm.slane %v3161, %v3166
    %v3169 = vunpack.c.l.s4 1934713408
    %v3170 = vunpack.c.0.s8 %v3169
    %v3171 = vperm.slane %v3163, %v3170
    %v3172 = vrot.slane %v3143, 4
    %v3173 = vsel %vm583, %v3172, %v3131
    %v3174 = vrot.slane %v3131, 4
    %v3175 = vsel %vm583, %v3143, %v3174
    %v3177 = vunpack.c.l.s4 1934713408
    %v3178 = vunpack.c.0.s8 %v3177
    %v3179 = vperm.slane %v3173, %v3178
    %v3181 = vunpack.c.l.s4 1934713408
    %v3182 = vunpack.c.0.s8 %v3181
    %v3183 = vperm.slane %v3175, %v3182
    %v3184 = vrot.slane %v3147, 4
    %v3185 = vsel %vm583, %v3184, %v3135
    %v3186 = vrot.slane %v3135, 4
    %v3187 = vsel %vm583, %v3147, %v3186
    %v3189 = vunpack.c.l.s4 1934713408
    %v3190 = vunpack.c.0.s8 %v3189
    %v3191 = vperm.slane %v3185, %v3190
    %v3193 = vunpack.c.l.s4 1934713408
    %v3194 = vunpack.c.0.s8 %v3193
    %v3195 = vperm.slane %v3187, %v3194
    %v3196 = vrot.slane %v3179, 4
    %v3197 = vsel %vm583, %v3196, %v3155
    %v3198 = vrot.slane %v3155, 4
    %v3199 = vsel %vm583, %v3179, %v3198
    %v3200 = vrot.slane %v3183, 4
    %v3201 = vsel %vm583, %v3200, %v3159
    %v3202 = vrot.slane %v3159, 4
    %v3203 = vsel %vm583, %v3183, %v3202
    %v3204 = vrot.slane %v3191, 4
    %v3205 = vsel %vm583, %v3204, %v3167
    %v3206 = vrot.slane %v3167, 4
    %v3207 = vsel %vm583, %v3191, %v3206
    %v3208 = vrot.slane %v3195, 4
    %v3209 = vsel %vm583, %v3208, %v3171
    %v3210 = vrot.slane %v3171, 4
    %v3211 = vsel %vm583, %v3195, %v3210
    %v3212 = vsel %vm1255, %v2637, -inf
    %3213 = vmax.xlane.f32.xlu0 %v3212
    %v3214 = vpop.xlane.xlu0 %3213
    %v3215 = vsel %vm1255, %v2749, -inf
    %3216 = vmax.xlane.f32.xlu0 %v3215
    %v3217 = vpop.xlane.xlu0 %3216
    %v3218 = vsel %vm1255, %v2861, -inf
    %3219 = vmax.xlane.f32.xlu0 %v3218
    %v3220 = vpop.xlane.xlu0 %3219
    %v3221 = vsel %vm1255, %v2639, -inf
    %3222 = vmax.xlane.f32.xlu0 %v3221
    %v3223 = vpop.xlane.xlu0 %3222
    %v3224 = vsel %vm1255, %v2751, -inf
    %3225 = vmax.xlane.f32.xlu0 %v3224
    %v3226 = vpop.xlane.xlu0 %3225
    %v3227 = vsel %vm1255, %v2863, -inf
    %3228 = vmax.xlane.f32.xlu0 %v3227
    %v3229 = vpop.xlane.xlu0 %3228
    %v3230 = vsel %vm1255, %v2641, -inf
    %3231 = vmax.xlane.f32.xlu0 %v3230
    %v3232 = vpop.xlane.xlu0 %3231
    %v3233 = vsel %vm1255, %v2753, -inf
    %3234 = vmax.xlane.f32.xlu0 %v3233
    %v3235 = vpop.xlane.xlu0 %3234
    %v3236 = vsel %vm1255, %v2865, -inf
    %3237 = vmax.xlane.f32.xlu0 %v3236
    %v3238 = vpop.xlane.xlu0 %3237
    %v3239 = vsel %vm1255, %v2643, -inf
    %3240 = vmax.xlane.f32.xlu0 %v3239
    %v3241 = vpop.xlane.xlu0 %3240
    %v3242 = vsel %vm1255, %v2755, -inf
    %3243 = vmax.xlane.f32.xlu0 %v3242
    %v3244 = vpop.xlane.xlu0 %3243
    %v3245 = vsel %vm1255, %v2867, -inf
    %3246 = vmax.xlane.f32.xlu0 %v3245
    %v3247 = vpop.xlane.xlu0 %3246
    %v3248 = vsel %vm1255, %v2645, -inf
    %3249 = vmax.xlane.f32.xlu0 %v3248
    %v3250 = vpop.xlane.xlu0 %3249
    %v3251 = vsel %vm1255, %v2757, -inf
    %3252 = vmax.xlane.f32.xlu0 %v3251
    %v3253 = vpop.xlane.xlu0 %3252
    %v3254 = vsel %vm1255, %v2869, -inf
    %3255 = vmax.xlane.f32.xlu0 %v3254
    %v3256 = vpop.xlane.xlu0 %3255
    %v3257 = vsel %vm1255, %v2647, -inf
    %3258 = vmax.xlane.f32.xlu0 %v3257
    %v3259 = vpop.xlane.xlu0 %3258
    %v3260 = vsel %vm1255, %v2759, -inf
    %3261 = vmax.xlane.f32.xlu0 %v3260
    %v3262 = vpop.xlane.xlu0 %3261
    %v3263 = vsel %vm1255, %v2871, -inf
    %3264 = vmax.xlane.f32.xlu0 %v3263
    %v3265 = vpop.xlane.xlu0 %3264
    %v3266 = vsel %vm1255, %v2649, -inf
    %3267 = vmax.xlane.f32.xlu0 %v3266
    %v3268 = vpop.xlane.xlu0 %3267
    %v3269 = vsel %vm1255, %v2761, -inf
    %3270 = vmax.xlane.f32.xlu0 %v3269
    %v3271 = vpop.xlane.xlu0 %3270
    %v3272 = vsel %vm1255, %v2873, -inf
    %3273 = vmax.xlane.f32.xlu0 %v3272
    %v3274 = vpop.xlane.xlu0 %3273
    %v3275 = vsel %vm1255, %v2651, -inf
    %3276 = vmax.xlane.f32.xlu0 %v3275
    %v3277 = vpop.xlane.xlu0 %3276
    %v3278 = vsel %vm1255, %v2763, -inf
    %3279 = vmax.xlane.f32.xlu0 %v3278
    %v3280 = vpop.xlane.xlu0 %3279
    %v3281 = vsel %vm1255, %v2875, -inf
    %3282 = vmax.xlane.f32.xlu0 %v3281
    %v3283 = vpop.xlane.xlu0 %3282
    %v3284 = vsel %vm1255, %v2973, -inf
    %3285 = vmax.xlane.f32.xlu0 %v3284
    %v3286 = vpop.xlane.xlu0 %3285
    %v3287 = vsel %vm1255, %v3085, -inf
    %3288 = vmax.xlane.f32.xlu0 %v3287
    %v3289 = vpop.xlane.xlu0 %3288
    %v3290 = vsel %vm1255, %v3197, -inf
    %3291 = vmax.xlane.f32.xlu0 %v3290
    %v3292 = vpop.xlane.xlu0 %3291
    %v3293 = vsel %vm1255, %v2975, -inf
    %3294 = vmax.xlane.f32.xlu0 %v3293
    %v3295 = vpop.xlane.xlu0 %3294
    %v3296 = vsel %vm1255, %v3087, -inf
    %3297 = vmax.xlane.f32.xlu0 %v3296
    %v3298 = vpop.xlane.xlu0 %3297
    %v3299 = vsel %vm1255, %v3199, -inf
    %3300 = vmax.xlane.f32.xlu0 %v3299
    %v3301 = vpop.xlane.xlu0 %3300
    %v3302 = vsel %vm1255, %v2977, -inf
    %3303 = vmax.xlane.f32.xlu0 %v3302
    %v3304 = vpop.xlane.xlu0 %3303
    %v3305 = vsel %vm1255, %v3089, -inf
    %3306 = vmax.xlane.f32.xlu0 %v3305
    %v3307 = vpop.xlane.xlu0 %3306
    %v3308 = vsel %vm1255, %v3201, -inf
    %3309 = vmax.xlane.f32.xlu0 %v3308
    %v3310 = vpop.xlane.xlu0 %3309
    %v3311 = vsel %vm1255, %v2979, -inf
    %3312 = vmax.xlane.f32.xlu0 %v3311
    %v3313 = vpop.xlane.xlu0 %3312
    %v3314 = vsel %vm1255, %v3091, -inf
    %3315 = vmax.xlane.f32.xlu0 %v3314
    %v3316 = vpop.xlane.xlu0 %3315
    %v3317 = vsel %vm1255, %v3203, -inf
    %3318 = vmax.xlane.f32.xlu0 %v3317
    %v3319 = vpop.xlane.xlu0 %3318
    %v3320 = vsel %vm1255, %v2981, -inf
    %3321 = vmax.xlane.f32.xlu0 %v3320
    %v3322 = vpop.xlane.xlu0 %3321
    %v3323 = vsel %vm1255, %v3093, -inf
    %3324 = vmax.xlane.f32.xlu0 %v3323
    %v3325 = vpop.xlane.xlu0 %3324
    %v3326 = vsel %vm1255, %v3205, -inf
    %3327 = vmax.xlane.f32.xlu0 %v3326
    %v3328 = vpop.xlane.xlu0 %3327
    %v3329 = vsel %vm1255, %v2983, -inf
    %3330 = vmax.xlane.f32.xlu0 %v3329
    %v3331 = vpop.xlane.xlu0 %3330
    %v3332 = vsel %vm1255, %v3095, -inf
    %3333 = vmax.xlane.f32.xlu0 %v3332
    %v3334 = vpop.xlane.xlu0 %3333
    %v3335 = vsel %vm1255, %v3207, -inf
    %3336 = vmax.xlane.f32.xlu0 %v3335
    %v3337 = vpop.xlane.xlu0 %3336
    %v3338 = vsel %vm1255, %v2985, -inf
    %3339 = vmax.xlane.f32.xlu0 %v3338
    %v3340 = vpop.xlane.xlu0 %3339
    %v3341 = vsel %vm1255, %v3097, -inf
    %3342 = vmax.xlane.f32.xlu0 %v3341
    %v3343 = vpop.xlane.xlu0 %3342
    %v3344 = vsel %vm1255, %v3209, -inf
    %3345 = vmax.xlane.f32.xlu0 %v3344
    %v3346 = vpop.xlane.xlu0 %3345
    %v3347 = vsel %vm1255, %v2987, -inf
    %3348 = vmax.xlane.f32.xlu0 %v3347
    %v3349 = vpop.xlane.xlu0 %3348
    %v3350 = vsel %vm1255, %v3099, -inf
    %3351 = vmax.xlane.f32.xlu0 %v3350
    %v3352 = vpop.xlane.xlu0 %3351
    %v3353 = vsel %vm1255, %v3211, -inf
    %3354 = vmax.xlane.f32.xlu0 %v3353
    %v3355 = vpop.xlane.xlu0 %3354
    %s3356 = sld [smem:[#allocation2 + $0x9]]
    %v3357 = vstv %s3356
    %v3358 = vmul.f32 %v3357, %v409
    %v3359 = vmul.f32 %v3357, %v410
    %s3360 = sld [smem:[#allocation2 + $0xa]]
    %v3361 = vstv %s3360
    %v3362 = vmul.f32 %v3361, %v398
    %v3363 = vmul.f32 %v3361, %v399
    %v3364 = vadd.f32 %v3358, %v3362
    %v3365 = vadd.f32 %v3359, %v3363
    %s3366 = sld [smem:[#allocation2 + $0xb]]
    %v3367 = vstv %s3366
    %v3368 = vmul.f32 %v3367, %v418
    %v3369 = vmul.f32 %v3367, %v419
    %s3370 = sld [smem:[#allocation2 + $0xf]]
    %v3371 = vstv %s3370
    %v3372 = vadd.f32 %v3368, %v3371
    %v3373 = vadd.f32 %v3369, %v3371
    %v3374 = vadd.f32 %v3364, %v3372
    %v3375 = vadd.f32 %v3365, %v3373
    %v3376 = vmax.f32 %v3374, 0.0
    %v3377 = vmax.f32 %v3375, 0.0
    %3380 = vrot.lane.b32.xlu0 %v3376, 126
    %v3381 = vpop.permute.xlu0 %3380
    %3382 = vrot.lane.b32.xlu0 %v3377, 126
    %v3383 = vpop.permute.xlu0 %3382
    %3386 = vrot.lane.b32.xlu0 %v3376, 124
    %v3387 = vpop.permute.xlu0 %3386
    %3388 = vrot.lane.b32.xlu0 %v3377, 124
    %v3389 = vpop.permute.xlu0 %3388
    %3392 = vrot.lane.b32.xlu0 %v3376, 122
    %v3393 = vpop.permute.xlu0 %3392
    %3394 = vrot.lane.b32.xlu0 %v3377, 122
    %v3395 = vpop.permute.xlu0 %3394
    %3398 = vrot.lane.b32.xlu0 %v3376, 120
    %v3399 = vpop.permute.xlu0 %3398
    %3400 = vrot.lane.b32.xlu0 %v3377, 120
    %v3401 = vpop.permute.xlu0 %3400
    %3404 = vrot.lane.b32.xlu0 %v3376, 118
    %v3405 = vpop.permute.xlu0 %3404
    %3406 = vrot.lane.b32.xlu0 %v3377, 118
    %v3407 = vpop.permute.xlu0 %3406
    %3410 = vrot.lane.b32.xlu0 %v3376, 116
    %v3411 = vpop.permute.xlu0 %3410
    %3412 = vrot.lane.b32.xlu0 %v3377, 116
    %v3413 = vpop.permute.xlu0 %3412
    %3416 = vrot.lane.b32.xlu0 %v3376, 114
    %v3417 = vpop.permute.xlu0 %3416
    %3418 = vrot.lane.b32.xlu0 %v3377, 114
    %v3419 = vpop.permute.xlu0 %3418
    %3422 = vrot.lane.b32.xlu0 %v3376, 112
    %v3423 = vpop.permute.xlu0 %3422
    %3424 = vrot.lane.b32.xlu0 %v3377, 112
    %v3425 = vpop.permute.xlu0 %3424
    %3428 = vrot.lane.b32.xlu0 %v3376, 110
    %v3429 = vpop.permute.xlu0 %3428
    %3430 = vrot.lane.b32.xlu0 %v3377, 110
    %v3431 = vpop.permute.xlu0 %3430
    %3434 = vrot.lane.b32.xlu0 %v3376, 108
    %v3435 = vpop.permute.xlu0 %3434
    %3436 = vrot.lane.b32.xlu0 %v3377, 108
    %v3437 = vpop.permute.xlu0 %3436
    %3440 = vrot.lane.b32.xlu0 %v3376, 106
    %v3441 = vpop.permute.xlu0 %3440
    %3442 = vrot.lane.b32.xlu0 %v3377, 106
    %v3443 = vpop.permute.xlu0 %3442
    %3446 = vrot.lane.b32.xlu0 %v3376, 104
    %v3447 = vpop.permute.xlu0 %3446
    %3448 = vrot.lane.b32.xlu0 %v3377, 104
    %v3449 = vpop.permute.xlu0 %3448
    %3452 = vrot.lane.b32.xlu0 %v3376, 102
    %v3453 = vpop.permute.xlu0 %3452
    %3454 = vrot.lane.b32.xlu0 %v3377, 102
    %v3455 = vpop.permute.xlu0 %3454
    %3458 = vrot.lane.b32.xlu0 %v3376, 100
    %v3459 = vpop.permute.xlu0 %3458
    %3460 = vrot.lane.b32.xlu0 %v3377, 100
    %v3461 = vpop.permute.xlu0 %3460
    %3464 = vrot.lane.b32.xlu0 %v3376, 98
    %v3465 = vpop.permute.xlu0 %3464
    %3466 = vrot.lane.b32.xlu0 %v3377, 98
    %v3467 = vpop.permute.xlu0 %3466
    %3470 = vrot.lane.b32.xlu0 %v3376, 96
    %v3471 = vpop.permute.xlu0 %3470
    %3472 = vrot.lane.b32.xlu0 %v3377, 96
    %v3473 = vpop.permute.xlu0 %3472
    %3476 = vrot.lane.b32.xlu0 %v3376, 94
    %v3477 = vpop.permute.xlu0 %3476
    %3478 = vrot.lane.b32.xlu0 %v3377, 94
    %v3479 = vpop.permute.xlu0 %3478
    %3482 = vrot.lane.b32.xlu0 %v3376, 92
    %v3483 = vpop.permute.xlu0 %3482
    %3484 = vrot.lane.b32.xlu0 %v3377, 92
    %v3485 = vpop.permute.xlu0 %3484
    %3488 = vrot.lane.b32.xlu0 %v3376, 90
    %v3489 = vpop.permute.xlu0 %3488
    %3490 = vrot.lane.b32.xlu0 %v3377, 90
    %v3491 = vpop.permute.xlu0 %3490
    %3494 = vrot.lane.b32.xlu0 %v3376, 88
    %v3495 = vpop.permute.xlu0 %3494
    %3496 = vrot.lane.b32.xlu0 %v3377, 88
    %v3497 = vpop.permute.xlu0 %3496
    %3500 = vrot.lane.b32.xlu0 %v3376, 86
    %v3501 = vpop.permute.xlu0 %3500
    %3502 = vrot.lane.b32.xlu0 %v3377, 86
    %v3503 = vpop.permute.xlu0 %3502
    %3506 = vrot.lane.b32.xlu0 %v3376, 84
    %v3507 = vpop.permute.xlu0 %3506
    %3508 = vrot.lane.b32.xlu0 %v3377, 84
    %v3509 = vpop.permute.xlu0 %3508
    %3512 = vrot.lane.b32.xlu0 %v3376, 82
    %v3513 = vpop.permute.xlu0 %3512
    %3514 = vrot.lane.b32.xlu0 %v3377, 82
    %v3515 = vpop.permute.xlu0 %3514
    %v3518 = vrot.slane %v3387, 4
    %v3519 = vsel %vm583, %v3518, %v3376
    %v3520 = vrot.slane %v3376, 4
    %v3521 = vsel %vm583, %v3387, %v3520
    %v3523 = vunpack.c.l.s4 1983009808
    %v3524 = vunpack.c.0.s8 %v3523
    %v3525 = vperm.slane %v3519, %v3524
    %v3527 = vunpack.c.l.s4 1983009808
    %v3528 = vunpack.c.0.s8 %v3527
    %v3529 = vperm.slane %v3521, %v3528
    %v3530 = vrot.slane %v3393, 4
    %v3531 = vsel %vm583, %v3530, %v3381
    %v3532 = vrot.slane %v3381, 4
    %v3533 = vsel %vm583, %v3393, %v3532
    %v3535 = vunpack.c.l.s4 1983009808
    %v3536 = vunpack.c.0.s8 %v3535
    %v3537 = vperm.slane %v3531, %v3536
    %v3539 = vunpack.c.l.s4 1983009808
    %v3540 = vunpack.c.0.s8 %v3539
    %v3541 = vperm.slane %v3533, %v3540
    %v3542 = vrot.slane %v3411, 4
    %v3543 = vsel %vm583, %v3542, %v3399
    %v3544 = vrot.slane %v3399, 4
    %v3545 = vsel %vm583, %v3411, %v3544
    %v3547 = vunpack.c.l.s4 1983009808
    %v3548 = vunpack.c.0.s8 %v3547
    %v3549 = vperm.slane %v3543, %v3548
    %v3551 = vunpack.c.l.s4 1983009808
    %v3552 = vunpack.c.0.s8 %v3551
    %v3553 = vperm.slane %v3545, %v3552
    %v3554 = vrot.slane %v3417, 4
    %v3555 = vsel %vm583, %v3554, %v3405
    %v3556 = vrot.slane %v3405, 4
    %v3557 = vsel %vm583, %v3417, %v3556
    %v3559 = vunpack.c.l.s4 1983009808
    %v3560 = vunpack.c.0.s8 %v3559
    %v3561 = vperm.slane %v3555, %v3560
    %v3563 = vunpack.c.l.s4 1983009808
    %v3564 = vunpack.c.0.s8 %v3563
    %v3565 = vperm.slane %v3557, %v3564
    %v3566 = vrot.slane %v3537, 4
    %v3567 = vsel %vm583, %v3566, %v3525
    %v3568 = vrot.slane %v3525, 4
    %v3569 = vsel %vm583, %v3537, %v3568
    %v3571 = vunpack.c.l.s4 1934713408
    %v3572 = vunpack.c.0.s8 %v3571
    %v3573 = vperm.slane %v3567, %v3572
    %v3575 = vunpack.c.l.s4 1934713408
    %v3576 = vunpack.c.0.s8 %v3575
    %v3577 = vperm.slane %v3569, %v3576
    %v3578 = vrot.slane %v3541, 4
    %v3579 = vsel %vm583, %v3578, %v3529
    %v3580 = vrot.slane %v3529, 4
    %v3581 = vsel %vm583, %v3541, %v3580
    %v3583 = vunpack.c.l.s4 1934713408
    %v3584 = vunpack.c.0.s8 %v3583
    %v3585 = vperm.slane %v3579, %v3584
    %v3587 = vunpack.c.l.s4 1934713408
    %v3588 = vunpack.c.0.s8 %v3587
    %v3589 = vperm.slane %v3581, %v3588
    %v3590 = vrot.slane %v3561, 4
    %v3591 = vsel %vm583, %v3590, %v3549
    %v3592 = vrot.slane %v3549, 4
    %v3593 = vsel %vm583, %v3561, %v3592
    %v3595 = vunpack.c.l.s4 1934713408
    %v3596 = vunpack.c.0.s8 %v3595
    %v3597 = vperm.slane %v3591, %v3596
    %v3599 = vunpack.c.l.s4 1934713408
    %v3600 = vunpack.c.0.s8 %v3599
    %v3601 = vperm.slane %v3593, %v3600
    %v3602 = vrot.slane %v3565, 4
    %v3603 = vsel %vm583, %v3602, %v3553
    %v3604 = vrot.slane %v3553, 4
    %v3605 = vsel %vm583, %v3565, %v3604
    %v3607 = vunpack.c.l.s4 1934713408
    %v3608 = vunpack.c.0.s8 %v3607
    %v3609 = vperm.slane %v3603, %v3608
    %v3611 = vunpack.c.l.s4 1934713408
    %v3612 = vunpack.c.0.s8 %v3611
    %v3613 = vperm.slane %v3605, %v3612
    %v3614 = vrot.slane %v3597, 4
    %v3615 = vsel %vm583, %v3614, %v3573
    %v3616 = vrot.slane %v3573, 4
    %v3617 = vsel %vm583, %v3597, %v3616
    %v3618 = vrot.slane %v3601, 4
    %v3619 = vsel %vm583, %v3618, %v3577
    %v3620 = vrot.slane %v3577, 4
    %v3621 = vsel %vm583, %v3601, %v3620
    %v3622 = vrot.slane %v3609, 4
    %v3623 = vsel %vm583, %v3622, %v3585
    %v3624 = vrot.slane %v3585, 4
    %v3625 = vsel %vm583, %v3609, %v3624
    %v3626 = vrot.slane %v3613, 4
    %v3627 = vsel %vm583, %v3626, %v3589
    %v3628 = vrot.slane %v3589, 4
    %v3629 = vsel %vm583, %v3613, %v3628
    %v3630 = vrot.slane %v3435, 4
    %v3631 = vsel %vm583, %v3630, %v3423
    %v3632 = vrot.slane %v3423, 4
    %v3633 = vsel %vm583, %v3435, %v3632
    %v3635 = vunpack.c.l.s4 1983009808
    %v3636 = vunpack.c.0.s8 %v3635
    %v3637 = vperm.slane %v3631, %v3636
    %v3639 = vunpack.c.l.s4 1983009808
    %v3640 = vunpack.c.0.s8 %v3639
    %v3641 = vperm.slane %v3633, %v3640
    %v3642 = vrot.slane %v3441, 4
    %v3643 = vsel %vm583, %v3642, %v3429
    %v3644 = vrot.slane %v3429, 4
    %v3645 = vsel %vm583, %v3441, %v3644
    %v3647 = vunpack.c.l.s4 1983009808
    %v3648 = vunpack.c.0.s8 %v3647
    %v3649 = vperm.slane %v3643, %v3648
    %v3651 = vunpack.c.l.s4 1983009808
    %v3652 = vunpack.c.0.s8 %v3651
    %v3653 = vperm.slane %v3645, %v3652
    %v3654 = vrot.slane %v3459, 4
    %v3655 = vsel %vm583, %v3654, %v3447
    %v3656 = vrot.slane %v3447, 4
    %v3657 = vsel %vm583, %v3459, %v3656
    %v3659 = vunpack.c.l.s4 1983009808
    %v3660 = vunpack.c.0.s8 %v3659
    %v3661 = vperm.slane %v3655, %v3660
    %v3663 = vunpack.c.l.s4 1983009808
    %v3664 = vunpack.c.0.s8 %v3663
    %v3665 = vperm.slane %v3657, %v3664
    %v3666 = vrot.slane %v3465, 4
    %v3667 = vsel %vm583, %v3666, %v3453
    %v3668 = vrot.slane %v3453, 4
    %v3669 = vsel %vm583, %v3465, %v3668
    %v3671 = vunpack.c.l.s4 1983009808
    %v3672 = vunpack.c.0.s8 %v3671
    %v3673 = vperm.slane %v3667, %v3672
    %v3675 = vunpack.c.l.s4 1983009808
    %v3676 = vunpack.c.0.s8 %v3675
    %v3677 = vperm.slane %v3669, %v3676
    %v3678 = vrot.slane %v3649, 4
    %v3679 = vsel %vm583, %v3678, %v3637
    %v3680 = vrot.slane %v3637, 4
    %v3681 = vsel %vm583, %v3649, %v3680
    %v3683 = vunpack.c.l.s4 1934713408
    %v3684 = vunpack.c.0.s8 %v3683
    %v3685 = vperm.slane %v3679, %v3684
    %v3687 = vunpack.c.l.s4 1934713408
    %v3688 = vunpack.c.0.s8 %v3687
    %v3689 = vperm.slane %v3681, %v3688
    %v3690 = vrot.slane %v3653, 4
    %v3691 = vsel %vm583, %v3690, %v3641
    %v3692 = vrot.slane %v3641, 4
    %v3693 = vsel %vm583, %v3653, %v3692
    %v3695 = vunpack.c.l.s4 1934713408
    %v3696 = vunpack.c.0.s8 %v3695
    %v3697 = vperm.slane %v3691, %v3696
    %v3699 = vunpack.c.l.s4 1934713408
    %v3700 = vunpack.c.0.s8 %v3699
    %v3701 = vperm.slane %v3693, %v3700
    %v3702 = vrot.slane %v3673, 4
    %v3703 = vsel %vm583, %v3702, %v3661
    %v3704 = vrot.slane %v3661, 4
    %v3705 = vsel %vm583, %v3673, %v3704
    %v3707 = vunpack.c.l.s4 1934713408
    %v3708 = vunpack.c.0.s8 %v3707
    %v3709 = vperm.slane %v3703, %v3708
    %v3711 = vunpack.c.l.s4 1934713408
    %v3712 = vunpack.c.0.s8 %v3711
    %v3713 = vperm.slane %v3705, %v3712
    %v3714 = vrot.slane %v3677, 4
    %v3715 = vsel %vm583, %v3714, %v3665
    %v3716 = vrot.slane %v3665, 4
    %v3717 = vsel %vm583, %v3677, %v3716
    %v3719 = vunpack.c.l.s4 1934713408
    %v3720 = vunpack.c.0.s8 %v3719
    %v3721 = vperm.slane %v3715, %v3720
    %v3723 = vunpack.c.l.s4 1934713408
    %v3724 = vunpack.c.0.s8 %v3723
    %v3725 = vperm.slane %v3717, %v3724
    %v3726 = vrot.slane %v3709, 4
    %v3727 = vsel %vm583, %v3726, %v3685
    %v3728 = vrot.slane %v3685, 4
    %v3729 = vsel %vm583, %v3709, %v3728
    %v3730 = vrot.slane %v3713, 4
    %v3731 = vsel %vm583, %v3730, %v3689
    %v3732 = vrot.slane %v3689, 4
    %v3733 = vsel %vm583, %v3713, %v3732
    %v3734 = vrot.slane %v3721, 4
    %v3735 = vsel %vm583, %v3734, %v3697
    %v3736 = vrot.slane %v3697, 4
    %v3737 = vsel %vm583, %v3721, %v3736
    %v3738 = vrot.slane %v3725, 4
    %v3739 = vsel %vm583, %v3738, %v3701
    %v3740 = vrot.slane %v3701, 4
    %v3741 = vsel %vm583, %v3725, %v3740
    %v3742 = vrot.slane %v3483, 4
    %v3743 = vsel %vm583, %v3742, %v3471
    %v3744 = vrot.slane %v3471, 4
    %v3745 = vsel %vm583, %v3483, %v3744
    %v3747 = vunpack.c.l.s4 1983009808
    %v3748 = vunpack.c.0.s8 %v3747
    %v3749 = vperm.slane %v3743, %v3748
    %v3751 = vunpack.c.l.s4 1983009808
    %v3752 = vunpack.c.0.s8 %v3751
    %v3753 = vperm.slane %v3745, %v3752
    %v3754 = vrot.slane %v3489, 4
    %v3755 = vsel %vm583, %v3754, %v3477
    %v3756 = vrot.slane %v3477, 4
    %v3757 = vsel %vm583, %v3489, %v3756
    %v3759 = vunpack.c.l.s4 1983009808
    %v3760 = vunpack.c.0.s8 %v3759
    %v3761 = vperm.slane %v3755, %v3760
    %v3763 = vunpack.c.l.s4 1983009808
    %v3764 = vunpack.c.0.s8 %v3763
    %v3765 = vperm.slane %v3757, %v3764
    %v3766 = vrot.slane %v3507, 4
    %v3767 = vsel %vm583, %v3766, %v3495
    %v3768 = vrot.slane %v3495, 4
    %v3769 = vsel %vm583, %v3507, %v3768
    %v3771 = vunpack.c.l.s4 1983009808
    %v3772 = vunpack.c.0.s8 %v3771
    %v3773 = vperm.slane %v3767, %v3772
    %v3775 = vunpack.c.l.s4 1983009808
    %v3776 = vunpack.c.0.s8 %v3775
    %v3777 = vperm.slane %v3769, %v3776
    %v3778 = vrot.slane %v3513, 4
    %v3779 = vsel %vm583, %v3778, %v3501
    %v3780 = vrot.slane %v3501, 4
    %v3781 = vsel %vm583, %v3513, %v3780
    %v3783 = vunpack.c.l.s4 1983009808
    %v3784 = vunpack.c.0.s8 %v3783
    %v3785 = vperm.slane %v3779, %v3784
    %v3787 = vunpack.c.l.s4 1983009808
    %v3788 = vunpack.c.0.s8 %v3787
    %v3789 = vperm.slane %v3781, %v3788
    %v3790 = vrot.slane %v3761, 4
    %v3791 = vsel %vm583, %v3790, %v3749
    %v3792 = vrot.slane %v3749, 4
    %v3793 = vsel %vm583, %v3761, %v3792
    %v3795 = vunpack.c.l.s4 1934713408
    %v3796 = vunpack.c.0.s8 %v3795
    %v3797 = vperm.slane %v3791, %v3796
    %v3799 = vunpack.c.l.s4 1934713408
    %v3800 = vunpack.c.0.s8 %v3799
    %v3801 = vperm.slane %v3793, %v3800
    %v3802 = vrot.slane %v3765, 4
    %v3803 = vsel %vm583, %v3802, %v3753
    %v3804 = vrot.slane %v3753, 4
    %v3805 = vsel %vm583, %v3765, %v3804
    %v3807 = vunpack.c.l.s4 1934713408
    %v3808 = vunpack.c.0.s8 %v3807
    %v3809 = vperm.slane %v3803, %v3808
    %v3811 = vunpack.c.l.s4 1934713408
    %v3812 = vunpack.c.0.s8 %v3811
    %v3813 = vperm.slane %v3805, %v3812
    %v3814 = vrot.slane %v3785, 4
    %v3815 = vsel %vm583, %v3814, %v3773
    %v3816 = vrot.slane %v3773, 4
    %v3817 = vsel %vm583, %v3785, %v3816
    %v3819 = vunpack.c.l.s4 1934713408
    %v3820 = vunpack.c.0.s8 %v3819
    %v3821 = vperm.slane %v3815, %v3820
    %v3823 = vunpack.c.l.s4 1934713408
    %v3824 = vunpack.c.0.s8 %v3823
    %v3825 = vperm.slane %v3817, %v3824
    %v3826 = vrot.slane %v3789, 4
    %v3827 = vsel %vm583, %v3826, %v3777
    %v3828 = vrot.slane %v3777, 4
    %v3829 = vsel %vm583, %v3789, %v3828
    %v3831 = vunpack.c.l.s4 1934713408
    %v3832 = vunpack.c.0.s8 %v3831
    %v3833 = vperm.slane %v3827, %v3832
    %v3835 = vunpack.c.l.s4 1934713408
    %v3836 = vunpack.c.0.s8 %v3835
    %v3837 = vperm.slane %v3829, %v3836
    %v3838 = vrot.slane %v3821, 4
    %v3839 = vsel %vm583, %v3838, %v3797
    %v3840 = vrot.slane %v3797, 4
    %v3841 = vsel %vm583, %v3821, %v3840
    %v3842 = vrot.slane %v3825, 4
    %v3843 = vsel %vm583, %v3842, %v3801
    %v3844 = vrot.slane %v3801, 4
    %v3845 = vsel %vm583, %v3825, %v3844
    %v3846 = vrot.slane %v3833, 4
    %v3847 = vsel %vm583, %v3846, %v3809
    %v3848 = vrot.slane %v3809, 4
    %v3849 = vsel %vm583, %v3833, %v3848
    %v3850 = vrot.slane %v3837, 4
    %v3851 = vsel %vm583, %v3850, %v3813
    %v3852 = vrot.slane %v3813, 4
    %v3853 = vsel %vm583, %v3837, %v3852
    %v3854 = vrot.slane %v3389, 4
    %v3855 = vsel %vm583, %v3854, %v3377
    %v3856 = vrot.slane %v3377, 4
    %v3857 = vsel %vm583, %v3389, %v3856
    %v3859 = vunpack.c.l.s4 1983009808
    %v3860 = vunpack.c.0.s8 %v3859
    %v3861 = vperm.slane %v3855, %v3860
    %v3863 = vunpack.c.l.s4 1983009808
    %v3864 = vunpack.c.0.s8 %v3863
    %v3865 = vperm.slane %v3857, %v3864
    %v3866 = vrot.slane %v3395, 4
    %v3867 = vsel %vm583, %v3866, %v3383
    %v3868 = vrot.slane %v3383, 4
    %v3869 = vsel %vm583, %v3395, %v3868
    %v3871 = vunpack.c.l.s4 1983009808
    %v3872 = vunpack.c.0.s8 %v3871
    %v3873 = vperm.slane %v3867, %v3872
    %v3875 = vunpack.c.l.s4 1983009808
    %v3876 = vunpack.c.0.s8 %v3875
    %v3877 = vperm.slane %v3869, %v3876
    %v3878 = vrot.slane %v3413, 4
    %v3879 = vsel %vm583, %v3878, %v3401
    %v3880 = vrot.slane %v3401, 4
    %v3881 = vsel %vm583, %v3413, %v3880
    %v3883 = vunpack.c.l.s4 1983009808
    %v3884 = vunpack.c.0.s8 %v3883
    %v3885 = vperm.slane %v3879, %v3884
    %v3887 = vunpack.c.l.s4 1983009808
    %v3888 = vunpack.c.0.s8 %v3887
    %v3889 = vperm.slane %v3881, %v3888
    %v3890 = vrot.slane %v3419, 4
    %v3891 = vsel %vm583, %v3890, %v3407
    %v3892 = vrot.slane %v3407, 4
    %v3893 = vsel %vm583, %v3419, %v3892
    %v3895 = vunpack.c.l.s4 1983009808
    %v3896 = vunpack.c.0.s8 %v3895
    %v3897 = vperm.slane %v3891, %v3896
    %v3899 = vunpack.c.l.s4 1983009808
    %v3900 = vunpack.c.0.s8 %v3899
    %v3901 = vperm.slane %v3893, %v3900
    %v3902 = vrot.slane %v3873, 4
    %v3903 = vsel %vm583, %v3902, %v3861
    %v3904 = vrot.slane %v3861, 4
    %v3905 = vsel %vm583, %v3873, %v3904
    %v3907 = vunpack.c.l.s4 1934713408
    %v3908 = vunpack.c.0.s8 %v3907
    %v3909 = vperm.slane %v3903, %v3908
    %v3911 = vunpack.c.l.s4 1934713408
    %v3912 = vunpack.c.0.s8 %v3911
    %v3913 = vperm.slane %v3905, %v3912
    %v3914 = vrot.slane %v3877, 4
    %v3915 = vsel %vm583, %v3914, %v3865
    %v3916 = vrot.slane %v3865, 4
    %v3917 = vsel %vm583, %v3877, %v3916
    %v3919 = vunpack.c.l.s4 1934713408
    %v3920 = vunpack.c.0.s8 %v3919
    %v3921 = vperm.slane %v3915, %v3920
    %v3923 = vunpack.c.l.s4 1934713408
    %v3924 = vunpack.c.0.s8 %v3923
    %v3925 = vperm.slane %v3917, %v3924
    %v3926 = vrot.slane %v3897, 4
    %v3927 = vsel %vm583, %v3926, %v3885
    %v3928 = vrot.slane %v3885, 4
    %v3929 = vsel %vm583, %v3897, %v3928
    %v3931 = vunpack.c.l.s4 1934713408
    %v3932 = vunpack.c.0.s8 %v3931
    %v3933 = vperm.slane %v3927, %v3932
    %v3935 = vunpack.c.l.s4 1934713408
    %v3936 = vunpack.c.0.s8 %v3935
    %v3937 = vperm.slane %v3929, %v3936
    %v3938 = vrot.slane %v3901, 4
    %v3939 = vsel %vm583, %v3938, %v3889
    %v3940 = vrot.slane %v3889, 4
    %v3941 = vsel %vm583, %v3901, %v3940
    %v3943 = vunpack.c.l.s4 1934713408
    %v3944 = vunpack.c.0.s8 %v3943
    %v3945 = vperm.slane %v3939, %v3944
    %v3947 = vunpack.c.l.s4 1934713408
    %v3948 = vunpack.c.0.s8 %v3947
    %v3949 = vperm.slane %v3941, %v3948
    %v3950 = vrot.slane %v3933, 4
    %v3951 = vsel %vm583, %v3950, %v3909
    %v3952 = vrot.slane %v3909, 4
    %v3953 = vsel %vm583, %v3933, %v3952
    %v3954 = vrot.slane %v3937, 4
    %v3955 = vsel %vm583, %v3954, %v3913
    %v3956 = vrot.slane %v3913, 4
    %v3957 = vsel %vm583, %v3937, %v3956
    %v3958 = vrot.slane %v3945, 4
    %v3959 = vsel %vm583, %v3958, %v3921
    %v3960 = vrot.slane %v3921, 4
    %v3961 = vsel %vm583, %v3945, %v3960
    %v3962 = vrot.slane %v3949, 4
    %v3963 = vsel %vm583, %v3962, %v3925
    %v3964 = vrot.slane %v3925, 4
    %v3965 = vsel %vm583, %v3949, %v3964
    %v3966 = vrot.slane %v3437, 4
    %v3967 = vsel %vm583, %v3966, %v3425
    %v3968 = vrot.slane %v3425, 4
    %v3969 = vsel %vm583, %v3437, %v3968
    %v3971 = vunpack.c.l.s4 1983009808
    %v3972 = vunpack.c.0.s8 %v3971
    %v3973 = vperm.slane %v3967, %v3972
    %v3975 = vunpack.c.l.s4 1983009808
    %v3976 = vunpack.c.0.s8 %v3975
    %v3977 = vperm.slane %v3969, %v3976
    %v3978 = vrot.slane %v3443, 4
    %v3979 = vsel %vm583, %v3978, %v3431
    %v3980 = vrot.slane %v3431, 4
    %v3981 = vsel %vm583, %v3443, %v3980
    %v3983 = vunpack.c.l.s4 1983009808
    %v3984 = vunpack.c.0.s8 %v3983
    %v3985 = vperm.slane %v3979, %v3984
    %v3987 = vunpack.c.l.s4 1983009808
    %v3988 = vunpack.c.0.s8 %v3987
    %v3989 = vperm.slane %v3981, %v3988
    %v3990 = vrot.slane %v3461, 4
    %v3991 = vsel %vm583, %v3990, %v3449
    %v3992 = vrot.slane %v3449, 4
    %v3993 = vsel %vm583, %v3461, %v3992
    %v3995 = vunpack.c.l.s4 1983009808
    %v3996 = vunpack.c.0.s8 %v3995
    %v3997 = vperm.slane %v3991, %v3996
    %v3999 = vunpack.c.l.s4 1983009808
    %v4000 = vunpack.c.0.s8 %v3999
    %v4001 = vperm.slane %v3993, %v4000
    %v4002 = vrot.slane %v3467, 4
    %v4003 = vsel %vm583, %v4002, %v3455
    %v4004 = vrot.slane %v3455, 4
    %v4005 = vsel %vm583, %v3467, %v4004
    %v4007 = vunpack.c.l.s4 1983009808
    %v4008 = vunpack.c.0.s8 %v4007
    %v4009 = vperm.slane %v4003, %v4008
    %v4011 = vunpack.c.l.s4 1983009808
    %v4012 = vunpack.c.0.s8 %v4011
    %v4013 = vperm.slane %v4005, %v4012
    %v4014 = vrot.slane %v3985, 4
    %v4015 = vsel %vm583, %v4014, %v3973
    %v4016 = vrot.slane %v3973, 4
    %v4017 = vsel %vm583, %v3985, %v4016
    %v4019 = vunpack.c.l.s4 1934713408
    %v4020 = vunpack.c.0.s8 %v4019
    %v4021 = vperm.slane %v4015, %v4020
    %v4023 = vunpack.c.l.s4 1934713408
    %v4024 = vunpack.c.0.s8 %v4023
    %v4025 = vperm.slane %v4017, %v4024
    %v4026 = vrot.slane %v3989, 4
    %v4027 = vsel %vm583, %v4026, %v3977
    %v4028 = vrot.slane %v3977, 4
    %v4029 = vsel %vm583, %v3989, %v4028
    %v4031 = vunpack.c.l.s4 1934713408
    %v4032 = vunpack.c.0.s8 %v4031
    %v4033 = vperm.slane %v4027, %v4032
    %v4035 = vunpack.c.l.s4 1934713408
    %v4036 = vunpack.c.0.s8 %v4035
    %v4037 = vperm.slane %v4029, %v4036
    %v4038 = vrot.slane %v4009, 4
    %v4039 = vsel %vm583, %v4038, %v3997
    %v4040 = vrot.slane %v3997, 4
    %v4041 = vsel %vm583, %v4009, %v4040
    %v4043 = vunpack.c.l.s4 1934713408
    %v4044 = vunpack.c.0.s8 %v4043
    %v4045 = vperm.slane %v4039, %v4044
    %v4047 = vunpack.c.l.s4 1934713408
    %v4048 = vunpack.c.0.s8 %v4047
    %v4049 = vperm.slane %v4041, %v4048
    %v4050 = vrot.slane %v4013, 4
    %v4051 = vsel %vm583, %v4050, %v4001
    %v4052 = vrot.slane %v4001, 4
    %v4053 = vsel %vm583, %v4013, %v4052
    %v4055 = vunpack.c.l.s4 1934713408
    %v4056 = vunpack.c.0.s8 %v4055
    %v4057 = vperm.slane %v4051, %v4056
    %v4059 = vunpack.c.l.s4 1934713408
    %v4060 = vunpack.c.0.s8 %v4059
    %v4061 = vperm.slane %v4053, %v4060
    %v4062 = vrot.slane %v4045, 4
    %v4063 = vsel %vm583, %v4062, %v4021
    %v4064 = vrot.slane %v4021, 4
    %v4065 = vsel %vm583, %v4045, %v4064
    %v4066 = vrot.slane %v4049, 4
    %v4067 = vsel %vm583, %v4066, %v4025
    %v4068 = vrot.slane %v4025, 4
    %v4069 = vsel %vm583, %v4049, %v4068
    %v4070 = vrot.slane %v4057, 4
    %v4071 = vsel %vm583, %v4070, %v4033
    %v4072 = vrot.slane %v4033, 4
    %v4073 = vsel %vm583, %v4057, %v4072
    %v4074 = vrot.slane %v4061, 4
    %v4075 = vsel %vm583, %v4074, %v4037
    %v4076 = vrot.slane %v4037, 4
    %v4077 = vsel %vm583, %v4061, %v4076
    %v4078 = vrot.slane %v3485, 4
    %v4079 = vsel %vm583, %v4078, %v3473
    %v4080 = vrot.slane %v3473, 4
    %v4081 = vsel %vm583, %v3485, %v4080
    %v4083 = vunpack.c.l.s4 1983009808
    %v4084 = vunpack.c.0.s8 %v4083
    %v4085 = vperm.slane %v4079, %v4084
    %v4087 = vunpack.c.l.s4 1983009808
    %v4088 = vunpack.c.0.s8 %v4087
    %v4089 = vperm.slane %v4081, %v4088
    %v4090 = vrot.slane %v3491, 4
    %v4091 = vsel %vm583, %v4090, %v3479
    %v4092 = vrot.slane %v3479, 4
    %v4093 = vsel %vm583, %v3491, %v4092
    %v4095 = vunpack.c.l.s4 1983009808
    %v4096 = vunpack.c.0.s8 %v4095
    %v4097 = vperm.slane %v4091, %v4096
    %v4099 = vunpack.c.l.s4 1983009808
    %v4100 = vunpack.c.0.s8 %v4099
    %v4101 = vperm.slane %v4093, %v4100
    %v4102 = vrot.slane %v3509, 4
    %v4103 = vsel %vm583, %v4102, %v3497
    %v4104 = vrot.slane %v3497, 4
    %v4105 = vsel %vm583, %v3509, %v4104
    %v4107 = vunpack.c.l.s4 1983009808
    %v4108 = vunpack.c.0.s8 %v4107
    %v4109 = vperm.slane %v4103, %v4108
    %v4111 = vunpack.c.l.s4 1983009808
    %v4112 = vunpack.c.0.s8 %v4111
    %v4113 = vperm.slane %v4105, %v4112
    %v4114 = vrot.slane %v3515, 4
    %v4115 = vsel %vm583, %v4114, %v3503
    %v4116 = vrot.slane %v3503, 4
    %v4117 = vsel %vm583, %v3515, %v4116
    %v4119 = vunpack.c.l.s4 1983009808
    %v4120 = vunpack.c.0.s8 %v4119
    %v4121 = vperm.slane %v4115, %v4120
    %v4123 = vunpack.c.l.s4 1983009808
    %v4124 = vunpack.c.0.s8 %v4123
    %v4125 = vperm.slane %v4117, %v4124
    %v4126 = vrot.slane %v4097, 4
    %v4127 = vsel %vm583, %v4126, %v4085
    %v4128 = vrot.slane %v4085, 4
    %v4129 = vsel %vm583, %v4097, %v4128
    %v4131 = vunpack.c.l.s4 1934713408
    %v4132 = vunpack.c.0.s8 %v4131
    %v4133 = vperm.slane %v4127, %v4132
    %v4135 = vunpack.c.l.s4 1934713408
    %v4136 = vunpack.c.0.s8 %v4135
    %v4137 = vperm.slane %v4129, %v4136
    %v4138 = vrot.slane %v4101, 4
    %v4139 = vsel %vm583, %v4138, %v4089
    %v4140 = vrot.slane %v4089, 4
    %v4141 = vsel %vm583, %v4101, %v4140
    %v4143 = vunpack.c.l.s4 1934713408
    %v4144 = vunpack.c.0.s8 %v4143
    %v4145 = vperm.slane %v4139, %v4144
    %v4147 = vunpack.c.l.s4 1934713408
    %v4148 = vunpack.c.0.s8 %v4147
    %v4149 = vperm.slane %v4141, %v4148
    %v4150 = vrot.slane %v4121, 4
    %v4151 = vsel %vm583, %v4150, %v4109
    %v4152 = vrot.slane %v4109, 4
    %v4153 = vsel %vm583, %v4121, %v4152
    %v4155 = vunpack.c.l.s4 1934713408
    %v4156 = vunpack.c.0.s8 %v4155
    %v4157 = vperm.slane %v4151, %v4156
    %v4159 = vunpack.c.l.s4 1934713408
    %v4160 = vunpack.c.0.s8 %v4159
    %v4161 = vperm.slane %v4153, %v4160
    %v4162 = vrot.slane %v4125, 4
    %v4163 = vsel %vm583, %v4162, %v4113
    %v4164 = vrot.slane %v4113, 4
    %v4165 = vsel %vm583, %v4125, %v4164
    %v4167 = vunpack.c.l.s4 1934713408
    %v4168 = vunpack.c.0.s8 %v4167
    %v4169 = vperm.slane %v4163, %v4168
    %v4171 = vunpack.c.l.s4 1934713408
    %v4172 = vunpack.c.0.s8 %v4171
    %v4173 = vperm.slane %v4165, %v4172
    %v4174 = vrot.slane %v4157, 4
    %v4175 = vsel %vm583, %v4174, %v4133
    %v4176 = vrot.slane %v4133, 4
    %v4177 = vsel %vm583, %v4157, %v4176
    %v4178 = vrot.slane %v4161, 4
    %v4179 = vsel %vm583, %v4178, %v4137
    %v4180 = vrot.slane %v4137, 4
    %v4181 = vsel %vm583, %v4161, %v4180
    %v4182 = vrot.slane %v4169, 4
    %v4183 = vsel %vm583, %v4182, %v4145
    %v4184 = vrot.slane %v4145, 4
    %v4185 = vsel %vm583, %v4169, %v4184
    %v4186 = vrot.slane %v4173, 4
    %v4187 = vsel %vm583, %v4186, %v4149
    %v4188 = vrot.slane %v4149, 4
    %v4189 = vsel %vm583, %v4173, %v4188
    %v4190 = vsel %vm1255, %v3615, -inf
    %4191 = vmax.xlane.f32.xlu0 %v4190
    %v4192 = vpop.xlane.xlu0 %4191
    %v4193 = vsel %vm1255, %v3727, -inf
    %4194 = vmax.xlane.f32.xlu0 %v4193
    %v4195 = vpop.xlane.xlu0 %4194
    %v4196 = vsel %vm1255, %v3839, -inf
    %4197 = vmax.xlane.f32.xlu0 %v4196
    %v4198 = vpop.xlane.xlu0 %4197
    %v4199 = vsel %vm1255, %v3617, -inf
    %4200 = vmax.xlane.f32.xlu0 %v4199
    %v4201 = vpop.xlane.xlu0 %4200
    %v4202 = vsel %vm1255, %v3729, -inf
    %4203 = vmax.xlane.f32.xlu0 %v4202
    %v4204 = vpop.xlane.xlu0 %4203
    %v4205 = vsel %vm1255, %v3841, -inf
    %4206 = vmax.xlane.f32.xlu0 %v4205
    %v4207 = vpop.xlane.xlu0 %4206
    %v4208 = vsel %vm1255, %v3619, -inf
    %4209 = vmax.xlane.f32.xlu0 %v4208
    %v4210 = vpop.xlane.xlu0 %4209
    %v4211 = vsel %vm1255, %v3731, -inf
    %4212 = vmax.xlane.f32.xlu0 %v4211
    %v4213 = vpop.xlane.xlu0 %4212
    %v4214 = vsel %vm1255, %v3843, -inf
    %4215 = vmax.xlane.f32.xlu0 %v4214
    %v4216 = vpop.xlane.xlu0 %4215
    %v4217 = vsel %vm1255, %v3621, -inf
    %4218 = vmax.xlane.f32.xlu0 %v4217
    %v4219 = vpop.xlane.xlu0 %4218
    %v4220 = vsel %vm1255, %v3733, -inf
    %4221 = vmax.xlane.f32.xlu0 %v4220
    %v4222 = vpop.xlane.xlu0 %4221
    %v4223 = vsel %vm1255, %v3845, -inf
    %4224 = vmax.xlane.f32.xlu0 %v4223
    %v4225 = vpop.xlane.xlu0 %4224
    %v4226 = vsel %vm1255, %v3623, -inf
    %4227 = vmax.xlane.f32.xlu0 %v4226
    %v4228 = vpop.xlane.xlu0 %4227
    %v4229 = vsel %vm1255, %v3735, -inf
    %4230 = vmax.xlane.f32.xlu0 %v4229
    %v4231 = vpop.xlane.xlu0 %4230
    %v4232 = vsel %vm1255, %v3847, -inf
    %4233 = vmax.xlane.f32.xlu0 %v4232
    %v4234 = vpop.xlane.xlu0 %4233
    %v4235 = vsel %vm1255, %v3625, -inf
    %4236 = vmax.xlane.f32.xlu0 %v4235
    %v4237 = vpop.xlane.xlu0 %4236
    %v4238 = vsel %vm1255, %v3737, -inf
    %4239 = vmax.xlane.f32.xlu0 %v4238
    %v4240 = vpop.xlane.xlu0 %4239
    %v4241 = vsel %vm1255, %v3849, -inf
    %4242 = vmax.xlane.f32.xlu0 %v4241
    %v4243 = vpop.xlane.xlu0 %4242
    %v4244 = vsel %vm1255, %v3627, -inf
    %4245 = vmax.xlane.f32.xlu0 %v4244
    %v4246 = vpop.xlane.xlu0 %4245
    %v4247 = vsel %vm1255, %v3739, -inf
    %4248 = vmax.xlane.f32.xlu0 %v4247
    %v4249 = vpop.xlane.xlu0 %4248
    %v4250 = vsel %vm1255, %v3851, -inf
    %4251 = vmax.xlane.f32.xlu0 %v4250
    %v4252 = vpop.xlane.xlu0 %4251
    %v4253 = vsel %vm1255, %v3629, -inf
    %4254 = vmax.xlane.f32.xlu0 %v4253
    %v4255 = vpop.xlane.xlu0 %4254
    %v4256 = vsel %vm1255, %v3741, -inf
    %4257 = vmax.xlane.f32.xlu0 %v4256
    %v4258 = vpop.xlane.xlu0 %4257
    %v4259 = vsel %vm1255, %v3853, -inf
    %4260 = vmax.xlane.f32.xlu0 %v4259
    %v4261 = vpop.xlane.xlu0 %4260
    %v4262 = vsel %vm1255, %v3951, -inf
    %4263 = vmax.xlane.f32.xlu0 %v4262
    %v4264 = vpop.xlane.xlu0 %4263
    %v4265 = vsel %vm1255, %v4063, -inf
    %4266 = vmax.xlane.f32.xlu0 %v4265
    %v4267 = vpop.xlane.xlu0 %4266
    %v4268 = vsel %vm1255, %v4175, -inf
    %4269 = vmax.xlane.f32.xlu0 %v4268
    %v4270 = vpop.xlane.xlu0 %4269
    %v4271 = vsel %vm1255, %v3953, -inf
    %4272 = vmax.xlane.f32.xlu0 %v4271
    %v4273 = vpop.xlane.xlu0 %4272
    %v4274 = vsel %vm1255, %v4065, -inf
    %4275 = vmax.xlane.f32.xlu0 %v4274
    %v4276 = vpop.xlane.xlu0 %4275
    %v4277 = vsel %vm1255, %v4177, -inf
    %4278 = vmax.xlane.f32.xlu0 %v4277
    %v4279 = vpop.xlane.xlu0 %4278
    %v4280 = vsel %vm1255, %v3955, -inf
    %4281 = vmax.xlane.f32.xlu0 %v4280
    %v4282 = vpop.xlane.xlu0 %4281
    %v4283 = vsel %vm1255, %v4067, -inf
    %4284 = vmax.xlane.f32.xlu0 %v4283
    %v4285 = vpop.xlane.xlu0 %4284
    %v4286 = vsel %vm1255, %v4179, -inf
    %4287 = vmax.xlane.f32.xlu0 %v4286
    %v4288 = vpop.xlane.xlu0 %4287
    %v4289 = vsel %vm1255, %v3957, -inf
    %4290 = vmax.xlane.f32.xlu0 %v4289
    %v4291 = vpop.xlane.xlu0 %4290
    %v4292 = vsel %vm1255, %v4069, -inf
    %4293 = vmax.xlane.f32.xlu0 %v4292
    %v4294 = vpop.xlane.xlu0 %4293
    %v4295 = vsel %vm1255, %v4181, -inf
    %4296 = vmax.xlane.f32.xlu0 %v4295
    %v4297 = vpop.xlane.xlu0 %4296
    %v4298 = vsel %vm1255, %v3959, -inf
    %4299 = vmax.xlane.f32.xlu0 %v4298
    %v4300 = vpop.xlane.xlu0 %4299
    %v4301 = vsel %vm1255, %v4071, -inf
    %4302 = vmax.xlane.f32.xlu0 %v4301
    %v4303 = vpop.xlane.xlu0 %4302
    %v4304 = vsel %vm1255, %v4183, -inf
    %4305 = vmax.xlane.f32.xlu0 %v4304
    %v4306 = vpop.xlane.xlu0 %4305
    %v4307 = vsel %vm1255, %v3961, -inf
    %4308 = vmax.xlane.f32.xlu0 %v4307
    %v4309 = vpop.xlane.xlu0 %4308
    %v4310 = vsel %vm1255, %v4073, -inf
    %4311 = vmax.xlane.f32.xlu0 %v4310
    %v4312 = vpop.xlane.xlu0 %4311
    %v4313 = vsel %vm1255, %v4185, -inf
    %4314 = vmax.xlane.f32.xlu0 %v4313
    %v4315 = vpop.xlane.xlu0 %4314
    %v4316 = vsel %vm1255, %v3963, -inf
    %4317 = vmax.xlane.f32.xlu0 %v4316
    %v4318 = vpop.xlane.xlu0 %4317
    %v4319 = vsel %vm1255, %v4075, -inf
    %4320 = vmax.xlane.f32.xlu0 %v4319
    %v4321 = vpop.xlane.xlu0 %4320
    %v4322 = vsel %vm1255, %v4187, -inf
    %4323 = vmax.xlane.f32.xlu0 %v4322
    %v4324 = vpop.xlane.xlu0 %4323
    %v4325 = vsel %vm1255, %v3965, -inf
    %4326 = vmax.xlane.f32.xlu0 %v4325
    %v4327 = vpop.xlane.xlu0 %4326
    %v4328 = vsel %vm1255, %v4077, -inf
    %4329 = vmax.xlane.f32.xlu0 %v4328
    %v4330 = vpop.xlane.xlu0 %4329
    %v4331 = vsel %vm1255, %v4189, -inf
    %4332 = vmax.xlane.f32.xlu0 %v4331
    %v4333 = vpop.xlane.xlu0 %4332
    %v4334 = vlaneseq
    %v4335 = vshrl.u32 %v4334, 7
    %v4336 = vadd.s32 %v4335, 8
    %v4337 = vlaneseq
    %v4338 = vand.u32 %v4337, 127
    %vm4339 = vcmp.ge.s32.totalorder %v4335, 8
    %vm4340 = vcmp.ge.s32.totalorder %v4336, 8
    %vm4341 = vcmp.ge.s32.totalorder %v4338, 16
    %vm4342 = vmand %vm4339, %vm4341
    %vm4343 = vmand %vm4340, %vm4341
    %vm4344 = vmxor %vm4342, 1
    %vm4345 = vmxor %vm4343, 1
    %v4394 = vperm.slane %v1258, %v4338
    %v4395 = vadd.s32 %v4338, 4294967288
    %v4396 = vperm.slane %v1261, %v4395
    %vm4397 = vcmask 130112
    %v4398 = vsel %vm4397, %v4396, %v4394
    %v4399 = vadd.s32 %v4338, 4294967280
    %v4400 = vperm.slane %v1264, %v4399
    %vm4401 = vcmask 195712
    %v4402 = vsel %vm4401, %v4400, %v4398
    %v4403 = vperm.slane %v1267, %v4338
    %v4404 = vperm.slane %v1270, %v4395
    %v4405 = vsel %vm4397, %v4404, %v4403
    %v4406 = vperm.slane %v1273, %v4399
    %v4407 = vsel %vm4401, %v4406, %v4405
    %v4408 = vperm.slane %v1276, %v4338
    %v4409 = vperm.slane %v1279, %v4395
    %v4410 = vsel %vm4397, %v4409, %v4408
    %v4411 = vperm.slane %v1282, %v4399
    %v4412 = vsel %vm4401, %v4411, %v4410
    %v4413 = vperm.slane %v1285, %v4338
    %v4414 = vperm.slane %v1288, %v4395
    %v4415 = vsel %vm4397, %v4414, %v4413
    %v4416 = vperm.slane %v1291, %v4399
    %v4417 = vsel %vm4401, %v4416, %v4415
    %v4418 = vperm.slane %v1294, %v4338
    %v4419 = vperm.slane %v1297, %v4395
    %v4420 = vsel %vm4397, %v4419, %v4418
    %v4421 = vperm.slane %v1300, %v4399
    %v4422 = vsel %vm4401, %v4421, %v4420
    %v4423 = vperm.slane %v1303, %v4338
    %v4424 = vperm.slane %v1306, %v4395
    %v4425 = vsel %vm4397, %v4424, %v4423
    %v4426 = vperm.slane %v1309, %v4399
    %v4427 = vsel %vm4401, %v4426, %v4425
    %v4428 = vperm.slane %v1312, %v4338
    %v4429 = vperm.slane %v1315, %v4395
    %v4430 = vsel %vm4397, %v4429, %v4428
    %v4431 = vperm.slane %v1318, %v4399
    %v4432 = vsel %vm4401, %v4431, %v4430
    %v4433 = vperm.slane %v1321, %v4338
    %v4434 = vperm.slane %v1324, %v4395
    %v4435 = vsel %vm4397, %v4434, %v4433
    %v4436 = vperm.slane %v1327, %v4399
    %v4437 = vsel %vm4401, %v4436, %v4435
    %v4438 = vperm.slane %v1330, %v4338
    %v4439 = vperm.slane %v1333, %v4395
    %v4440 = vsel %vm4397, %v4439, %v4438
    %v4441 = vperm.slane %v1336, %v4399
    %v4442 = vsel %vm4401, %v4441, %v4440
    %v4443 = vperm.slane %v1339, %v4338
    %v4444 = vperm.slane %v1342, %v4395
    %v4445 = vsel %vm4397, %v4444, %v4443
    %v4446 = vperm.slane %v1345, %v4399
    %v4447 = vsel %vm4401, %v4446, %v4445
    %v4448 = vperm.slane %v1348, %v4338
    %v4449 = vperm.slane %v1351, %v4395
    %v4450 = vsel %vm4397, %v4449, %v4448
    %v4451 = vperm.slane %v1354, %v4399
    %v4452 = vsel %vm4401, %v4451, %v4450
    %v4453 = vperm.slane %v1357, %v4338
    %v4454 = vperm.slane %v1360, %v4395
    %v4455 = vsel %vm4397, %v4454, %v4453
    %v4456 = vperm.slane %v1363, %v4399
    %v4457 = vsel %vm4401, %v4456, %v4455
    %v4458 = vperm.slane %v1366, %v4338
    %v4459 = vperm.slane %v1369, %v4395
    %v4460 = vsel %vm4397, %v4459, %v4458
    %v4461 = vperm.slane %v1372, %v4399
    %v4462 = vsel %vm4401, %v4461, %v4460
    %v4463 = vperm.slane %v1375, %v4338
    %v4464 = vperm.slane %v1378, %v4395
    %v4465 = vsel %vm4397, %v4464, %v4463
    %v4466 = vperm.slane %v1381, %v4399
    %v4467 = vsel %vm4401, %v4466, %v4465
    %v4468 = vperm.slane %v1384, %v4338
    %v4469 = vperm.slane %v1387, %v4395
    %v4470 = vsel %vm4397, %v4469, %v4468
    %v4471 = vperm.slane %v1390, %v4399
    %v4472 = vsel %vm4401, %v4471, %v4470
    %v4473 = vperm.slane %v1393, %v4338
    %v4474 = vperm.slane %v1396, %v4395
    %v4475 = vsel %vm4397, %v4474, %v4473
    %v4476 = vperm.slane %v1399, %v4399
    %v4477 = vsel %vm4401, %v4476, %v4475
    %vm4478 = vcmask 1041409
    %v4479 = vsel %vm4478, %v4407, %v4402
    %vm4480 = vcmask 1042434
    %v4481 = vsel %vm4480, %v4412, %v4479
    %vm4482 = vcmask 1043459
    %v4483 = vsel %vm4482, %v4417, %v4481
    %vm4484 = vcmask 1044484
    %v4485 = vsel %vm4484, %v4422, %v4483
    %vm4486 = vcmask 1045509
    %v4487 = vsel %vm4486, %v4427, %v4485
    %vm4488 = vcmask 1046534
    %v4489 = vsel %vm4488, %v4432, %v4487
    %vm4490 = vcmask 1047559
    %v4491 = vsel %vm4490, %v4437, %v4489
    %v4492 = vsel %vm4478, %v4447, %v4442
    %v4493 = vsel %vm4480, %v4452, %v4492
    %v4494 = vsel %vm4482, %v4457, %v4493
    %v4495 = vsel %vm4484, %v4462, %v4494
    %v4496 = vsel %vm4486, %v4467, %v4495
    %v4497 = vsel %vm4488, %v4472, %v4496
    %v4498 = vsel %vm4490, %v4477, %v4497
    %v4501 = vsel %vm4344, %v4491, 0.0
    %v4502 = vsel %vm4345, %v4498, 0.0
    %v4551 = vperm.slane %v2236, %v4338
    %v4552 = vperm.slane %v2239, %v4395
    %v4553 = vsel %vm4397, %v4552, %v4551
    %v4554 = vperm.slane %v2242, %v4399
    %v4555 = vsel %vm4401, %v4554, %v4553
    %v4556 = vperm.slane %v2245, %v4338
    %v4557 = vperm.slane %v2248, %v4395
    %v4558 = vsel %vm4397, %v4557, %v4556
    %v4559 = vperm.slane %v2251, %v4399
    %v4560 = vsel %vm4401, %v4559, %v4558
    %v4561 = vperm.slane %v2254, %v4338
    %v4562 = vperm.slane %v2257, %v4395
    %v4563 = vsel %vm4397, %v4562, %v4561
    %v4564 = vperm.slane %v2260, %v4399
    %v4565 = vsel %vm4401, %v4564, %v4563
    %v4566 = vperm.slane %v2263, %v4338
    %v4567 = vperm.slane %v2266, %v4395
    %v4568 = vsel %vm4397, %v4567, %v4566
    %v4569 = vperm.slane %v2269, %v4399
    %v4570 = vsel %vm4401, %v4569, %v4568
    %v4571 = vperm.slane %v2272, %v4338
    %v4572 = vperm.slane %v2275, %v4395
    %v4573 = vsel %vm4397, %v4572, %v4571
    %v4574 = vperm.slane %v2278, %v4399
    %v4575 = vsel %vm4401, %v4574, %v4573
    %v4576 = vperm.slane %v2281, %v4338
    %v4577 = vperm.slane %v2284, %v4395
    %v4578 = vsel %vm4397, %v4577, %v4576
    %v4579 = vperm.slane %v2287, %v4399
    %v4580 = vsel %vm4401, %v4579, %v4578
    %v4581 = vperm.slane %v2290, %v4338
    %v4582 = vperm.slane %v2293, %v4395
    %v4583 = vsel %vm4397, %v4582, %v4581
    %v4584 = vperm.slane %v2296, %v4399
    %v4585 = vsel %vm4401, %v4584, %v4583
    %v4586 = vperm.slane %v2299, %v4338
    %v4587 = vperm.slane %v2302, %v4395
    %v4588 = vsel %vm4397, %v4587, %v4586
    %v4589 = vperm.slane %v2305, %v4399
    %v4590 = vsel %vm4401, %v4589, %v4588
    %v4591 = vperm.slane %v2308, %v4338
    %v4592 = vperm.slane %v2311, %v4395
    %v4593 = vsel %vm4397, %v4592, %v4591
    %v4594 = vperm.slane %v2314, %v4399
    %v4595 = vsel %vm4401, %v4594, %v4593
    %v4596 = vperm.slane %v2317, %v4338
    %v4597 = vperm.slane %v2320, %v4395
    %v4598 = vsel %vm4397, %v4597, %v4596
    %v4599 = vperm.slane %v2323, %v4399
    %v4600 = vsel %vm4401, %v4599, %v4598
    %v4601 = vperm.slane %v2326, %v4338
    %v4602 = vperm.slane %v2329, %v4395
    %v4603 = vsel %vm4397, %v4602, %v4601
    %v4604 = vperm.slane %v2332, %v4399
    %v4605 = vsel %vm4401, %v4604, %v4603
    %v4606 = vperm.slane %v2335, %v4338
    %v4607 = vperm.slane %v2338, %v4395
    %v4608 = vsel %vm4397, %v4607, %v4606
    %v4609 = vperm.slane %v2341, %v4399
    %v4610 = vsel %vm4401, %v4609, %v4608
    %v4611 = vperm.slane %v2344, %v4338
    %v4612 = vperm.slane %v2347, %v4395
    %v4613 = vsel %vm4397, %v4612, %v4611
    %v4614 = vperm.slane %v2350, %v4399
    %v4615 = vsel %vm4401, %v4614, %v4613
    %v4616 = vperm.slane %v2353, %v4338
    %v4617 = vperm.slane %v2356, %v4395
    %v4618 = vsel %vm4397, %v4617, %v4616
    %v4619 = vperm.slane %v2359, %v4399
    %v4620 = vsel %vm4401, %v4619, %v4618
    %v4621 = vperm.slane %v2362, %v4338
    %v4622 = vperm.slane %v2365, %v4395
    %v4623 = vsel %vm4397, %v4622, %v4621
    %v4624 = vperm.slane %v2368, %v4399
    %v4625 = vsel %vm4401, %v4624, %v4623
    %v4626 = vperm.slane %v2371, %v4338
    %v4627 = vperm.slane %v2374, %v4395
    %v4628 = vsel %vm4397, %v4627, %v4626
    %v4629 = vperm.slane %v2377, %v4399
    %v4630 = vsel %vm4401, %v4629, %v4628
    %v4631 = vsel %vm4478, %v4560, %v4555
    %v4632 = vsel %vm4480, %v4565, %v4631
    %v4633 = vsel %vm4482, %v4570, %v4632
    %v4634 = vsel %vm4484, %v4575, %v4633
    %v4635 = vsel %vm4486, %v4580, %v4634
    %v4636 = vsel %vm4488, %v4585, %v4635
    %v4637 = vsel %vm4490, %v4590, %v4636
    %v4638 = vsel %vm4478, %v4600, %v4595
    %v4639 = vsel %vm4480, %v4605, %v4638
    %v4640 = vsel %vm4482, %v4610, %v4639
    %v4641 = vsel %vm4484, %v4615, %v4640
    %v4642 = vsel %vm4486, %v4620, %v4641
    %v4643 = vsel %vm4488, %v4625, %v4642
    %v4644 = vsel %vm4490, %v4630, %v4643
    %v4647 = vsel %vm4344, %v4637, 0.0
    %v4648 = vsel %vm4345, %v4644, 0.0
    %v4697 = vperm.slane %v3214, %v4338
    %v4698 = vperm.slane %v3217, %v4395
    %v4699 = vsel %vm4397, %v4698, %v4697
    %v4700 = vperm.slane %v3220, %v4399
    %v4701 = vsel %vm4401, %v4700, %v4699
    %v4702 = vperm.slane %v3223, %v4338
    %v4703 = vperm.slane %v3226, %v4395
    %v4704 = vsel %vm4397, %v4703, %v4702
    %v4705 = vperm.slane %v3229, %v4399
    %v4706 = vsel %vm4401, %v4705, %v4704
    %v4707 = vperm.slane %v3232, %v4338
    %v4708 = vperm.slane %v3235, %v4395
    %v4709 = vsel %vm4397, %v4708, %v4707
    %v4710 = vperm.slane %v3238, %v4399
    %v4711 = vsel %vm4401, %v4710, %v4709
    %v4712 = vperm.slane %v3241, %v4338
    %v4713 = vperm.slane %v3244, %v4395
    %v4714 = vsel %vm4397, %v4713, %v4712
    %v4715 = vperm.slane %v3247, %v4399
    %v4716 = vsel %vm4401, %v4715, %v4714
    %v4717 = vperm.slane %v3250, %v4338
    %v4718 = vperm.slane %v3253, %v4395
    %v4719 = vsel %vm4397, %v4718, %v4717
    %v4720 = vperm.slane %v3256, %v4399
    %v4721 = vsel %vm4401, %v4720, %v4719
    %v4722 = vperm.slane %v3259, %v4338
    %v4723 = vperm.slane %v3262, %v4395
    %v4724 = vsel %vm4397, %v4723, %v4722
    %v4725 = vperm.slane %v3265, %v4399
    %v4726 = vsel %vm4401, %v4725, %v4724
    %v4727 = vperm.slane %v3268, %v4338
    %v4728 = vperm.slane %v3271, %v4395
    %v4729 = vsel %vm4397, %v4728, %v4727
    %v4730 = vperm.slane %v3274, %v4399
    %v4731 = vsel %vm4401, %v4730, %v4729
    %v4732 = vperm.slane %v3277, %v4338
    %v4733 = vperm.slane %v3280, %v4395
    %v4734 = vsel %vm4397, %v4733, %v4732
    %v4735 = vperm.slane %v3283, %v4399
    %v4736 = vsel %vm4401, %v4735, %v4734
    %v4737 = vperm.slane %v3286, %v4338
    %v4738 = vperm.slane %v3289, %v4395
    %v4739 = vsel %vm4397, %v4738, %v4737
    %v4740 = vperm.slane %v3292, %v4399
    %v4741 = vsel %vm4401, %v4740, %v4739
    %v4742 = vperm.slane %v3295, %v4338
    %v4743 = vperm.slane %v3298, %v4395
    %v4744 = vsel %vm4397, %v4743, %v4742
    %v4745 = vperm.slane %v3301, %v4399
    %v4746 = vsel %vm4401, %v4745, %v4744
    %v4747 = vperm.slane %v3304, %v4338
    %v4748 = vperm.slane %v3307, %v4395
    %v4749 = vsel %vm4397, %v4748, %v4747
    %v4750 = vperm.slane %v3310, %v4399
    %v4751 = vsel %vm4401, %v4750, %v4749
    %v4752 = vperm.slane %v3313, %v4338
    %v4753 = vperm.slane %v3316, %v4395
    %v4754 = vsel %vm4397, %v4753, %v4752
    %v4755 = vperm.slane %v3319, %v4399
    %v4756 = vsel %vm4401, %v4755, %v4754
    %v4757 = vperm.slane %v3322, %v4338
    %v4758 = vperm.slane %v3325, %v4395
    %v4759 = vsel %vm4397, %v4758, %v4757
    %v4760 = vperm.slane %v3328, %v4399
    %v4761 = vsel %vm4401, %v4760, %v4759
    %v4762 = vperm.slane %v3331, %v4338
    %v4763 = vperm.slane %v3334, %v4395
    %v4764 = vsel %vm4397, %v4763, %v4762
    %v4765 = vperm.slane %v3337, %v4399
    %v4766 = vsel %vm4401, %v4765, %v4764
    %v4767 = vperm.slane %v3340, %v4338
    %v4768 = vperm.slane %v3343, %v4395
    %v4769 = vsel %vm4397, %v4768, %v4767
    %v4770 = vperm.slane %v3346, %v4399
    %v4771 = vsel %vm4401, %v4770, %v4769
    %v4772 = vperm.slane %v3349, %v4338
    %v4773 = vperm.slane %v3352, %v4395
    %v4774 = vsel %vm4397, %v4773, %v4772
    %v4775 = vperm.slane %v3355, %v4399
    %v4776 = vsel %vm4401, %v4775, %v4774
    %v4777 = vsel %vm4478, %v4706, %v4701
    %v4778 = vsel %vm4480, %v4711, %v4777
    %v4779 = vsel %vm4482, %v4716, %v4778
    %v4780 = vsel %vm4484, %v4721, %v4779
    %v4781 = vsel %vm4486, %v4726, %v4780
    %v4782 = vsel %vm4488, %v4731, %v4781
    %v4783 = vsel %vm4490, %v4736, %v4782
    %v4784 = vsel %vm4478, %v4746, %v4741
    %v4785 = vsel %vm4480, %v4751, %v4784
    %v4786 = vsel %vm4482, %v4756, %v4785
    %v4787 = vsel %vm4484, %v4761, %v4786
    %v4788 = vsel %vm4486, %v4766, %v4787
    %v4789 = vsel %vm4488, %v4771, %v4788
    %v4790 = vsel %vm4490, %v4776, %v4789
    %v4793 = vsel %vm4344, %v4783, 0.0
    %v4794 = vsel %vm4345, %v4790, 0.0
    %v4843 = vperm.slane %v4192, %v4338
    %v4844 = vperm.slane %v4195, %v4395
    %v4845 = vsel %vm4397, %v4844, %v4843
    %v4846 = vperm.slane %v4198, %v4399
    %v4847 = vsel %vm4401, %v4846, %v4845
    %v4848 = vperm.slane %v4201, %v4338
    %v4849 = vperm.slane %v4204, %v4395
    %v4850 = vsel %vm4397, %v4849, %v4848
    %v4851 = vperm.slane %v4207, %v4399
    %v4852 = vsel %vm4401, %v4851, %v4850
    %v4853 = vperm.slane %v4210, %v4338
    %v4854 = vperm.slane %v4213, %v4395
    %v4855 = vsel %vm4397, %v4854, %v4853
    %v4856 = vperm.slane %v4216, %v4399
    %v4857 = vsel %vm4401, %v4856, %v4855
    %v4858 = vperm.slane %v4219, %v4338
    %v4859 = vperm.slane %v4222, %v4395
    %v4860 = vsel %vm4397, %v4859, %v4858
    %v4861 = vperm.slane %v4225, %v4399
    %v4862 = vsel %vm4401, %v4861, %v4860
    %v4863 = vperm.slane %v4228, %v4338
    %v4864 = vperm.slane %v4231, %v4395
    %v4865 = vsel %vm4397, %v4864, %v4863
    %v4866 = vperm.slane %v4234, %v4399
    %v4867 = vsel %vm4401, %v4866, %v4865
    %v4868 = vperm.slane %v4237, %v4338
    %v4869 = vperm.slane %v4240, %v4395
    %v4870 = vsel %vm4397, %v4869, %v4868
    %v4871 = vperm.slane %v4243, %v4399
    %v4872 = vsel %vm4401, %v4871, %v4870
    %v4873 = vperm.slane %v4246, %v4338
    %v4874 = vperm.slane %v4249, %v4395
    %v4875 = vsel %vm4397, %v4874, %v4873
    %v4876 = vperm.slane %v4252, %v4399
    %v4877 = vsel %vm4401, %v4876, %v4875
    %v4878 = vperm.slane %v4255, %v4338
    %v4879 = vperm.slane %v4258, %v4395
    %v4880 = vsel %vm4397, %v4879, %v4878
    %v4881 = vperm.slane %v4261, %v4399
    %v4882 = vsel %vm4401, %v4881, %v4880
    %v4883 = vperm.slane %v4264, %v4338
    %v4884 = vperm.slane %v4267, %v4395
    %v4885 = vsel %vm4397, %v4884, %v4883
    %v4886 = vperm.slane %v4270, %v4399
    %v4887 = vsel %vm4401, %v4886, %v4885
    %v4888 = vperm.slane %v4273, %v4338
    %v4889 = vperm.slane %v4276, %v4395
    %v4890 = vsel %vm4397, %v4889, %v4888
    %v4891 = vperm.slane %v4279, %v4399
    %v4892 = vsel %vm4401, %v4891, %v4890
    %v4893 = vperm.slane %v4282, %v4338
    %v4894 = vperm.slane %v4285, %v4395
    %v4895 = vsel %vm4397, %v4894, %v4893
    %v4896 = vperm.slane %v4288, %v4399
    %v4897 = vsel %vm4401, %v4896, %v4895
    %v4898 = vperm.slane %v4291, %v4338
    %v4899 = vperm.slane %v4294, %v4395
    %v4900 = vsel %vm4397, %v4899, %v4898
    %v4901 = vperm.slane %v4297, %v4399
    %v4902 = vsel %vm4401, %v4901, %v4900
    %v4903 = vperm.slane %v4300, %v4338
    %v4904 = vperm.slane %v4303, %v4395
    %v4905 = vsel %vm4397, %v4904, %v4903
    %v4906 = vperm.slane %v4306, %v4399
    %v4907 = vsel %vm4401, %v4906, %v4905
    %v4908 = vperm.slane %v4309, %v4338
    %v4909 = vperm.slane %v4312, %v4395
    %v4910 = vsel %vm4397, %v4909, %v4908
    %v4911 = vperm.slane %v4315, %v4399
    %v4912 = vsel %vm4401, %v4911, %v4910
    %v4913 = vperm.slane %v4318, %v4338
    %v4914 = vperm.slane %v4321, %v4395
    %v4915 = vsel %vm4397, %v4914, %v4913
    %v4916 = vperm.slane %v4324, %v4399
    %v4917 = vsel %vm4401, %v4916, %v4915
    %v4918 = vperm.slane %v4327, %v4338
    %v4919 = vperm.slane %v4330, %v4395
    %v4920 = vsel %vm4397, %v4919, %v4918
    %v4921 = vperm.slane %v4333, %v4399
    %v4922 = vsel %vm4401, %v4921, %v4920
    %v4923 = vsel %vm4478, %v4852, %v4847
    %v4924 = vsel %vm4480, %v4857, %v4923
    %v4925 = vsel %vm4482, %v4862, %v4924
    %v4926 = vsel %vm4484, %v4867, %v4925
    %v4927 = vsel %vm4486, %v4872, %v4926
    %v4928 = vsel %vm4488, %v4877, %v4927
    %v4929 = vsel %vm4490, %v4882, %v4928
    %v4930 = vsel %vm4478, %v4892, %v4887
    %v4931 = vsel %vm4480, %v4897, %v4930
    %v4932 = vsel %vm4482, %v4902, %v4931
    %v4933 = vsel %vm4484, %v4907, %v4932
    %v4934 = vsel %vm4486, %v4912, %v4933
    %v4935 = vsel %vm4488, %v4917, %v4934
    %v4936 = vsel %vm4490, %v4922, %v4935
    %v4939 = vsel %vm4344, %v4929, 0.0
    %v4940 = vsel %vm4345, %v4936, 0.0
    %4943 = vrot.lane.b32.xlu0 %v4501, 1
    %v4944 = vpop.permute.xlu0 %4943
    %4945 = vrot.lane.b32.xlu0 %v4502, 1
    %v4946 = vpop.permute.xlu0 %4945
    %v4949 = vsel %vm408, 0.0, %v4944
    %v4950 = vsel %vm408, 0.0, %v4946
    %4951 = vrot.lane.b32.xlu0 %v4501, 127
    %v4952 = vpop.permute.xlu0 %4951
    %4953 = vrot.lane.b32.xlu0 %v4502, 127
    %v4954 = vpop.permute.xlu0 %4953
    %vm4957 = vcmask 187392
    %v4958 = vsel %vm4957, %v4952, 0.0
    %v4959 = vsel %vm4957, %v4954, 0.0
    %4962 = vrot.lane.b32.xlu0 %v4647, 1
    %v4963 = vpop.permute.xlu0 %4962
    %4964 = vrot.lane.b32.xlu0 %v4648, 1
    %v4965 = vpop.permute.xlu0 %4964
    %v4968 = vsel %vm408, 0.0, %v4963
    %v4969 = vsel %vm408, 0.0, %v4965
    %4970 = vrot.lane.b32.xlu0 %v4647, 127
    %v4971 = vpop.permute.xlu0 %4970
    %4972 = vrot.lane.b32.xlu0 %v4648, 127
    %v4973 = vpop.permute.xlu0 %4972
    %v4976 = vsel %vm4957, %v4971, 0.0
    %v4977 = vsel %vm4957, %v4973, 0.0
    %4980 = vrot.lane.b32.xlu0 %v4793, 1
    %v4981 = vpop.permute.xlu0 %4980
    %4982 = vrot.lane.b32.xlu0 %v4794, 1
    %v4983 = vpop.permute.xlu0 %4982
    %v4986 = vsel %vm408, 0.0, %v4981
    %v4987 = vsel %vm408, 0.0, %v4983
    %4988 = vrot.lane.b32.xlu0 %v4793, 127
    %v4989 = vpop.permute.xlu0 %4988
    %4990 = vrot.lane.b32.xlu0 %v4794, 127
    %v4991 = vpop.permute.xlu0 %4990
    %v4994 = vsel %vm4957, %v4989, 0.0
    %v4995 = vsel %vm4957, %v4991, 0.0
    %4998 = vrot.lane.b32.xlu0 %v4939, 1
    %v4999 = vpop.permute.xlu0 %4998
    %5000 = vrot.lane.b32.xlu0 %v4940, 1
    %v5001 = vpop.permute.xlu0 %5000
    %v5004 = vsel %vm408, 0.0, %v4999
    %v5005 = vsel %vm408, 0.0, %v5001
    %5006 = vrot.lane.b32.xlu0 %v4939, 127
    %v5007 = vpop.permute.xlu0 %5006
    %5008 = vrot.lane.b32.xlu0 %v4940, 127
    %v5009 = vpop.permute.xlu0 %5008
    %v5012 = vsel %vm4957, %v5007, 0.0
    %v5013 = vsel %vm4957, %v5009, 0.0
    %s5014 = sld [smem:[#allocation2 + $0x10]]
    %v5015 = vstv %s5014
    %v5016 = vmul.f32 %v5015, %v4949
    %v5017 = vmul.f32 %v5015, %v4950
    %s5018 = sld [smem:[#allocation2 + $0x11]]
    %v5019 = vstv %s5018
    %v5020 = vmul.f32 %v5019, %v4501
    %v5021 = vmul.f32 %v5019, %v4502
    %s5022 = sld [smem:[#allocation2 + $0x12]]
    %v5023 = vstv %s5022
    %v5024 = vmul.f32 %v5023, %v4958
    %v5025 = vmul.f32 %v5023, %v4959
    %s5026 = sld [smem:[#allocation2 + $0x13]]
    %v5027 = vstv %s5026
    %v5028 = vmul.f32 %v5027, %v4968
    %v5029 = vmul.f32 %v5027, %v4969
    %s5030 = sld [smem:[#allocation2 + $0x14]]
    %v5031 = vstv %s5030
    %v5032 = vmul.f32 %v5031, %v4647
    %v5033 = vmul.f32 %v5031, %v4648
    %s5034 = sld [smem:[#allocation2 + $0x15]]
    %v5035 = vstv %s5034
    %v5036 = vmul.f32 %v5035, %v4976
    %v5037 = vmul.f32 %v5035, %v4977
    %s5038 = sld [smem:[#allocation2 + $0x16]]
    %v5039 = vstv %s5038
    %v5040 = vmul.f32 %v5039, %v4986
    %v5041 = vmul.f32 %v5039, %v4987
    %s5042 = sld [smem:[#allocation2 + $0x17]]
    %v5043 = vstv %s5042
    %v5044 = vmul.f32 %v5043, %v4793
    %v5045 = vmul.f32 %v5043, %v4794
    %s5046 = sld [smem:[#allocation2 + $0x18]]
    %v5047 = vstv %s5046
    %v5048 = vmul.f32 %v5047, %v4994
    %v5049 = vmul.f32 %v5047, %v4995
    %s5050 = sld [smem:[#allocation2 + $0x19]]
    %v5051 = vstv %s5050
    %v5052 = vmul.f32 %v5051, %v5004
    %v5053 = vmul.f32 %v5051, %v5005
    %s5054 = sld [smem:[#allocation2 + $0x1a]]
    %v5055 = vstv %s5054
    %v5056 = vmul.f32 %v5055, %v4939
    %v5057 = vmul.f32 %v5055, %v4940
    %s5058 = sld [smem:[#allocation2 + $0x1b]]
    %v5059 = vstv %s5058
    %v5060 = vmul.f32 %v5059, %v5012
    %v5061 = vmul.f32 %v5059, %v5013
    %v5062 = vadd.f32 %v5016, %v5020
    %v5063 = vadd.f32 %v5017, %v5021
    %v5064 = vadd.f32 %v5024, %v5028
    %v5065 = vadd.f32 %v5025, %v5029
    %v5066 = vadd.f32 %v5032, %v5036
    %v5067 = vadd.f32 %v5033, %v5037
    %v5068 = vadd.f32 %v5040, %v5044
    %v5069 = vadd.f32 %v5041, %v5045
    %v5070 = vadd.f32 %v5048, %v5052
    %v5071 = vadd.f32 %v5049, %v5053
    %v5072 = vadd.f32 %v5056, %v5060
    %v5073 = vadd.f32 %v5057, %v5061
    %v5074 = vadd.f32 %v5062, %v5064
    %v5075 = vadd.f32 %v5063, %v5065
    %v5076 = vadd.f32 %v5066, %v5068
    %v5077 = vadd.f32 %v5067, %v5069
    %v5078 = vadd.f32 %v5070, %v5072
    %v5079 = vadd.f32 %v5071, %v5073
    %v5080 = vadd.f32 %v5074, %v5076
    %v5081 = vadd.f32 %v5075, %v5077
    %v5082 = vadd.f32 %v5080, %v5078
    %v5083 = vadd.f32 %v5081, %v5079
    %s5084 = sld [smem:[#allocation2 + $0x28]]
    %v5085 = vstv %s5084
    %v5086 = vadd.f32 %v5082, %v5085
    %v5087 = vadd.f32 %v5083, %v5085
    %5090 = vrot.lane.b32.xlu0 %v5086, 126
    %v5091 = vpop.permute.xlu0 %5090
    %5092 = vrot.lane.b32.xlu0 %v5087, 126
    %v5093 = vpop.permute.xlu0 %5092
    %5096 = vrot.lane.b32.xlu0 %v5086, 124
    %v5097 = vpop.permute.xlu0 %5096
    %5098 = vrot.lane.b32.xlu0 %v5087, 124
    %v5099 = vpop.permute.xlu0 %5098
    %5102 = vrot.lane.b32.xlu0 %v5086, 122
    %v5103 = vpop.permute.xlu0 %5102
    %5104 = vrot.lane.b32.xlu0 %v5087, 122
    %v5105 = vpop.permute.xlu0 %5104
    %5108 = vrot.lane.b32.xlu0 %v5086, 120
    %v5109 = vpop.permute.xlu0 %5108
    %5110 = vrot.lane.b32.xlu0 %v5087, 120
    %v5111 = vpop.permute.xlu0 %5110
    %5114 = vrot.lane.b32.xlu0 %v5086, 118
    %v5115 = vpop.permute.xlu0 %5114
    %5116 = vrot.lane.b32.xlu0 %v5087, 118
    %v5117 = vpop.permute.xlu0 %5116
    %5120 = vrot.lane.b32.xlu0 %v5086, 116
    %v5121 = vpop.permute.xlu0 %5120
    %5122 = vrot.lane.b32.xlu0 %v5087, 116
    %v5123 = vpop.permute.xlu0 %5122
    %5126 = vrot.lane.b32.xlu0 %v5086, 114
    %v5127 = vpop.permute.xlu0 %5126
    %5128 = vrot.lane.b32.xlu0 %v5087, 114
    %v5129 = vpop.permute.xlu0 %5128
    %5132 = vrot.lane.b32.xlu0 %v5086, 112
    %v5133 = vpop.permute.xlu0 %5132
    %5135 = vrot.lane.b32.xlu0 %v5086, 110
    %v5136 = vpop.permute.xlu0 %5135
    %5138 = vrot.lane.b32.xlu0 %v5086, 108
    %v5139 = vpop.permute.xlu0 %5138
    %5141 = vrot.lane.b32.xlu0 %v5086, 106
    %v5142 = vpop.permute.xlu0 %5141
    %v5144 = vrot.slane %v5097, 4
    %v5145 = vsel %vm583, %v5144, %v5086
    %v5146 = vrot.slane %v5086, 4
    %v5147 = vsel %vm583, %v5097, %v5146
    %v5149 = vunpack.c.l.s4 1983009808
    %v5150 = vunpack.c.0.s8 %v5149
    %v5151 = vperm.slane %v5145, %v5150
    %v5153 = vunpack.c.l.s4 1983009808
    %v5154 = vunpack.c.0.s8 %v5153
    %v5155 = vperm.slane %v5147, %v5154
    %v5156 = vrot.slane %v5103, 4
    %v5157 = vsel %vm583, %v5156, %v5091
    %v5158 = vrot.slane %v5091, 4
    %v5159 = vsel %vm583, %v5103, %v5158
    %v5161 = vunpack.c.l.s4 1983009808
    %v5162 = vunpack.c.0.s8 %v5161
    %v5163 = vperm.slane %v5157, %v5162
    %v5165 = vunpack.c.l.s4 1983009808
    %v5166 = vunpack.c.0.s8 %v5165
    %v5167 = vperm.slane %v5159, %v5166
    %v5168 = vrot.slane %v5121, 4
    %v5169 = vsel %vm583, %v5168, %v5109
    %v5170 = vrot.slane %v5109, 4
    %v5171 = vsel %vm583, %v5121, %v5170
    %v5173 = vunpack.c.l.s4 1983009808
    %v5174 = vunpack.c.0.s8 %v5173
    %v5175 = vperm.slane %v5169, %v5174
    %v5177 = vunpack.c.l.s4 1983009808
    %v5178 = vunpack.c.0.s8 %v5177
    %v5179 = vperm.slane %v5171, %v5178
    %v5180 = vrot.slane %v5127, 4
    %v5181 = vsel %vm583, %v5180, %v5115
    %v5182 = vrot.slane %v5115, 4
    %v5183 = vsel %vm583, %v5127, %v5182
    %v5185 = vunpack.c.l.s4 1983009808
    %v5186 = vunpack.c.0.s8 %v5185
    %v5187 = vperm.slane %v5181, %v5186
    %v5189 = vunpack.c.l.s4 1983009808
    %v5190 = vunpack.c.0.s8 %v5189
    %v5191 = vperm.slane %v5183, %v5190
    %v5192 = vrot.slane %v5163, 4
    %v5193 = vsel %vm583, %v5192, %v5151
    %v5194 = vrot.slane %v5151, 4
    %v5195 = vsel %vm583, %v5163, %v5194
    %v5197 = vunpack.c.l.s4 1934713408
    %v5198 = vunpack.c.0.s8 %v5197
    %v5199 = vperm.slane %v5193, %v5198
    %v5201 = vunpack.c.l.s4 1934713408
    %v5202 = vunpack.c.0.s8 %v5201
    %v5203 = vperm.slane %v5195, %v5202
    %v5204 = vrot.slane %v5167, 4
    %v5205 = vsel %vm583, %v5204, %v5155
    %v5206 = vrot.slane %v5155, 4
    %v5207 = vsel %vm583, %v5167, %v5206
    %v5209 = vunpack.c.l.s4 1934713408
    %v5210 = vunpack.c.0.s8 %v5209
    %v5211 = vperm.slane %v5205, %v5210
    %v5213 = vunpack.c.l.s4 1934713408
    %v5214 = vunpack.c.0.s8 %v5213
    %v5215 = vperm.slane %v5207, %v5214
    %v5216 = vrot.slane %v5187, 4
    %v5217 = vsel %vm583, %v5216, %v5175
    %v5218 = vrot.slane %v5175, 4
    %v5219 = vsel %vm583, %v5187, %v5218
    %v5221 = vunpack.c.l.s4 1934713408
    %v5222 = vunpack.c.0.s8 %v5221
    %v5223 = vperm.slane %v5217, %v5222
    %v5225 = vunpack.c.l.s4 1934713408
    %v5226 = vunpack.c.0.s8 %v5225
    %v5227 = vperm.slane %v5219, %v5226
    %v5228 = vrot.slane %v5191, 4
    %v5229 = vsel %vm583, %v5228, %v5179
    %v5230 = vrot.slane %v5179, 4
    %v5231 = vsel %vm583, %v5191, %v5230
    %v5233 = vunpack.c.l.s4 1934713408
    %v5234 = vunpack.c.0.s8 %v5233
    %v5235 = vperm.slane %v5229, %v5234
    %v5237 = vunpack.c.l.s4 1934713408
    %v5238 = vunpack.c.0.s8 %v5237
    %v5239 = vperm.slane %v5231, %v5238
    %v5240 = vrot.slane %v5223, 4
    %v5241 = vsel %vm583, %v5240, %v5199
    %v5242 = vrot.slane %v5199, 4
    %v5243 = vsel %vm583, %v5223, %v5242
    %v5244 = vrot.slane %v5227, 4
    %v5245 = vsel %vm583, %v5244, %v5203
    %v5246 = vrot.slane %v5203, 4
    %v5247 = vsel %vm583, %v5227, %v5246
    %v5248 = vrot.slane %v5235, 4
    %v5249 = vsel %vm583, %v5248, %v5211
    %v5250 = vrot.slane %v5211, 4
    %v5251 = vsel %vm583, %v5235, %v5250
    %v5252 = vrot.slane %v5239, 4
    %v5253 = vsel %vm583, %v5252, %v5215
    %v5254 = vrot.slane %v5215, 4
    %v5255 = vsel %vm583, %v5239, %v5254
    %v5256 = vrot.slane %v5139, 4
    %v5257 = vsel %vm583, %v5256, %v5133
    %v5258 = vrot.slane %v5133, 4
    %v5259 = vsel %vm583, %v5139, %v5258
    %v5261 = vunpack.c.l.s4 1983009808
    %v5262 = vunpack.c.0.s8 %v5261
    %v5263 = vperm.slane %v5257, %v5262
    %v5265 = vunpack.c.l.s4 1983009808
    %v5266 = vunpack.c.0.s8 %v5265
    %v5267 = vperm.slane %v5259, %v5266
    %v5268 = vrot.slane %v5142, 4
    %v5269 = vsel %vm583, %v5268, %v5136
    %v5270 = vrot.slane %v5136, 4
    %v5271 = vsel %vm583, %v5142, %v5270
    %v5273 = vunpack.c.l.s4 1983009808
    %v5274 = vunpack.c.0.s8 %v5273
    %v5275 = vperm.slane %v5269, %v5274
    %v5277 = vunpack.c.l.s4 1983009808
    %v5278 = vunpack.c.0.s8 %v5277
    %v5279 = vperm.slane %v5271, %v5278
    %v5280 = vrot.slane %v5275, 4
    %v5281 = vsel %vm583, %v5280, %v5263
    %v5282 = vrot.slane %v5263, 4
    %v5283 = vsel %vm583, %v5275, %v5282
    %v5285 = vunpack.c.l.s4 1934713408
    %v5286 = vunpack.c.0.s8 %v5285
    %v5287 = vperm.slane %v5281, %v5286
    %v5289 = vunpack.c.l.s4 1934713408
    %v5290 = vunpack.c.0.s8 %v5289
    %v5291 = vperm.slane %v5283, %v5290
    %v5292 = vrot.slane %v5279, 4
    %v5293 = vsel %vm583, %v5292, %v5267
    %v5294 = vrot.slane %v5267, 4
    %v5295 = vsel %vm583, %v5279, %v5294
    %v5297 = vunpack.c.l.s4 1934713408
    %v5298 = vunpack.c.0.s8 %v5297
    %v5299 = vperm.slane %v5293, %v5298
    %v5301 = vunpack.c.l.s4 1934713408
    %v5302 = vunpack.c.0.s8 %v5301
    %v5303 = vperm.slane %v5295, %v5302
    %v5304 = vrot.slane %v5287, 4
    %v5305 = vsel %vm583, 0.0, %v5304
    %v5306 = vrot.slane %v5291, 4
    %v5307 = vsel %vm583, 0.0, %v5306
    %v5308 = vrot.slane %v5299, 4
    %v5309 = vsel %vm583, 0.0, %v5308
    %v5310 = vrot.slane %v5303, 4
    %v5311 = vsel %vm583, 0.0, %v5310
    %v5312 = vrot.slane %v5099, 4
    %v5313 = vsel %vm583, %v5312, %v5087
    %v5314 = vrot.slane %v5087, 4
    %v5315 = vsel %vm583, %v5099, %v5314
    %v5317 = vunpack.c.l.s4 1983009808
    %v5318 = vunpack.c.0.s8 %v5317
    %v5319 = vperm.slane %v5313, %v5318
    %v5321 = vunpack.c.l.s4 1983009808
    %v5322 = vunpack.c.0.s8 %v5321
    %v5323 = vperm.slane %v5315, %v5322
    %v5324 = vrot.slane %v5105, 4
    %v5325 = vsel %vm583, %v5324, %v5093
    %v5326 = vrot.slane %v5093, 4
    %v5327 = vsel %vm583, %v5105, %v5326
    %v5329 = vunpack.c.l.s4 1983009808
    %v5330 = vunpack.c.0.s8 %v5329
    %v5331 = vperm.slane %v5325, %v5330
    %v5333 = vunpack.c.l.s4 1983009808
    %v5334 = vunpack.c.0.s8 %v5333
    %v5335 = vperm.slane %v5327, %v5334
    %v5336 = vrot.slane %v5123, 4
    %v5337 = vsel %vm583, %v5336, %v5111
    %v5338 = vrot.slane %v5111, 4
    %v5339 = vsel %vm583, %v5123, %v5338
    %v5341 = vunpack.c.l.s4 1983009808
    %v5342 = vunpack.c.0.s8 %v5341
    %v5343 = vperm.slane %v5337, %v5342
    %v5345 = vunpack.c.l.s4 1983009808
    %v5346 = vunpack.c.0.s8 %v5345
    %v5347 = vperm.slane %v5339, %v5346
    %v5348 = vrot.slane %v5129, 4
    %v5349 = vsel %vm583, %v5348, %v5117
    %v5350 = vrot.slane %v5117, 4
    %v5351 = vsel %vm583, %v5129, %v5350
    %v5353 = vunpack.c.l.s4 1983009808
    %v5354 = vunpack.c.0.s8 %v5353
    %v5355 = vperm.slane %v5349, %v5354
    %v5357 = vunpack.c.l.s4 1983009808
    %v5358 = vunpack.c.0.s8 %v5357
    %v5359 = vperm.slane %v5351, %v5358
    %v5360 = vrot.slane %v5331, 4
    %v5361 = vsel %vm583, %v5360, %v5319
    %v5362 = vrot.slane %v5319, 4
    %v5363 = vsel %vm583, %v5331, %v5362
    %v5365 = vunpack.c.l.s4 1934713408
    %v5366 = vunpack.c.0.s8 %v5365
    %v5367 = vperm.slane %v5361, %v5366
    %v5369 = vunpack.c.l.s4 1934713408
    %v5370 = vunpack.c.0.s8 %v5369
    %v5371 = vperm.slane %v5363, %v5370
    %v5372 = vrot.slane %v5335, 4
    %v5373 = vsel %vm583, %v5372, %v5323
    %v5374 = vrot.slane %v5323, 4
    %v5375 = vsel %vm583, %v5335, %v5374
    %v5377 = vunpack.c.l.s4 1934713408
    %v5378 = vunpack.c.0.s8 %v5377
    %v5379 = vperm.slane %v5373, %v5378
    %v5381 = vunpack.c.l.s4 1934713408
    %v5382 = vunpack.c.0.s8 %v5381
    %v5383 = vperm.slane %v5375, %v5382
    %v5384 = vrot.slane %v5355, 4
    %v5385 = vsel %vm583, %v5384, %v5343
    %v5386 = vrot.slane %v5343, 4
    %v5387 = vsel %vm583, %v5355, %v5386
    %v5389 = vunpack.c.l.s4 1934713408
    %v5390 = vunpack.c.0.s8 %v5389
    %v5391 = vperm.slane %v5385, %v5390
    %v5393 = vunpack.c.l.s4 1934713408
    %v5394 = vunpack.c.0.s8 %v5393
    %v5395 = vperm.slane %v5387, %v5394
    %v5396 = vrot.slane %v5359, 4
    %v5397 = vsel %vm583, %v5396, %v5347
    %v5398 = vrot.slane %v5347, 4
    %v5399 = vsel %vm583, %v5359, %v5398
    %v5401 = vunpack.c.l.s4 1934713408
    %v5402 = vunpack.c.0.s8 %v5401
    %v5403 = vperm.slane %v5397, %v5402
    %v5405 = vunpack.c.l.s4 1934713408
    %v5406 = vunpack.c.0.s8 %v5405
    %v5407 = vperm.slane %v5399, %v5406
    %v5408 = vrot.slane %v5391, 4
    %v5409 = vsel %vm583, %v5408, %v5367
    %v5410 = vrot.slane %v5367, 4
    %v5411 = vsel %vm583, %v5391, %v5410
    %v5412 = vrot.slane %v5395, 4
    %v5413 = vsel %vm583, %v5412, %v5371
    %v5414 = vrot.slane %v5371, 4
    %v5415 = vsel %vm583, %v5395, %v5414
    %v5416 = vrot.slane %v5403, 4
    %v5417 = vsel %vm583, %v5416, %v5379
    %v5418 = vrot.slane %v5379, 4
    %v5419 = vsel %vm583, %v5403, %v5418
    %v5420 = vrot.slane %v5407, 4
    %v5421 = vsel %vm583, %v5420, %v5383
    %v5422 = vrot.slane %v5383, 4
    %v5423 = vsel %vm583, %v5407, %v5422
    %v5424 = vsel %vm1255, %v5241, -inf
    %5425 = vmax.xlane.f32.xlu0 %v5424
    %v5426 = vpop.xlane.xlu0 %5425
    %vm5427 = vcmask 11264
    %v5428 = vsel %vm5427, %v5287, -inf
    %5429 = vmax.xlane.f32.xlu0 %v5428
    %v5430 = vpop.xlane.xlu0 %5429
    %v5431 = vsel %vm1255, %v5243, -inf
    %5432 = vmax.xlane.f32.xlu0 %v5431
    %v5433 = vpop.xlane.xlu0 %5432
    %v5434 = vsel %vm5427, %v5305, -inf
    %5435 = vmax.xlane.f32.xlu0 %v5434
    %v5436 = vpop.xlane.xlu0 %5435
    %v5437 = vsel %vm1255, %v5245, -inf
    %5438 = vmax.xlane.f32.xlu0 %v5437
    %v5439 = vpop.xlane.xlu0 %5438
    %v5440 = vsel %vm5427, %v5291, -inf
    %5441 = vmax.xlane.f32.xlu0 %v5440
    %v5442 = vpop.xlane.xlu0 %5441
    %v5443 = vsel %vm1255, %v5247, -inf
    %5444 = vmax.xlane.f32.xlu0 %v5443
    %v5445 = vpop.xlane.xlu0 %5444
    %v5446 = vsel %vm5427, %v5307, -inf
    %5447 = vmax.xlane.f32.xlu0 %v5446
    %v5448 = vpop.xlane.xlu0 %5447
    %v5449 = vsel %vm1255, %v5249, -inf
    %5450 = vmax.xlane.f32.xlu0 %v5449
    %v5451 = vpop.xlane.xlu0 %5450
    %v5452 = vsel %vm5427, %v5299, -inf
    %5453 = vmax.xlane.f32.xlu0 %v5452
    %v5454 = vpop.xlane.xlu0 %5453
    %v5455 = vsel %vm1255, %v5251, -inf
    %5456 = vmax.xlane.f32.xlu0 %v5455
    %v5457 = vpop.xlane.xlu0 %5456
    %v5458 = vsel %vm5427, %v5309, -inf
    %5459 = vmax.xlane.f32.xlu0 %v5458
    %v5460 = vpop.xlane.xlu0 %5459
    %v5461 = vsel %vm1255, %v5253, -inf
    %5462 = vmax.xlane.f32.xlu0 %v5461
    %v5463 = vpop.xlane.xlu0 %5462
    %v5464 = vsel %vm5427, %v5303, -inf
    %5465 = vmax.xlane.f32.xlu0 %v5464
    %v5466 = vpop.xlane.xlu0 %5465
    %v5467 = vsel %vm1255, %v5255, -inf
    %5468 = vmax.xlane.f32.xlu0 %v5467
    %v5469 = vpop.xlane.xlu0 %5468
    %v5470 = vsel %vm5427, %v5311, -inf
    %5471 = vmax.xlane.f32.xlu0 %v5470
    %v5472 = vpop.xlane.xlu0 %5471
    %v5473 = vsel %vm1255, %v5409, -inf
    %5474 = vmax.xlane.f32.xlu0 %v5473
    %v5475 = vpop.xlane.xlu0 %5474
    %v5476 = vsel %vm1255, %v5411, -inf
    %5477 = vmax.xlane.f32.xlu0 %v5476
    %v5478 = vpop.xlane.xlu0 %5477
    %v5479 = vsel %vm1255, %v5413, -inf
    %5480 = vmax.xlane.f32.xlu0 %v5479
    %v5481 = vpop.xlane.xlu0 %5480
    %v5482 = vsel %vm1255, %v5415, -inf
    %5483 = vmax.xlane.f32.xlu0 %v5482
    %v5484 = vpop.xlane.xlu0 %5483
    %v5485 = vsel %vm1255, %v5417, -inf
    %5486 = vmax.xlane.f32.xlu0 %v5485
    %v5487 = vpop.xlane.xlu0 %5486
    %v5488 = vsel %vm1255, %v5419, -inf
    %5489 = vmax.xlane.f32.xlu0 %v5488
    %v5490 = vpop.xlane.xlu0 %5489
    %v5491 = vsel %vm1255, %v5421, -inf
    %5492 = vmax.xlane.f32.xlu0 %v5491
    %v5493 = vpop.xlane.xlu0 %5492
    %v5494 = vsel %vm1255, %v5423, -inf
    %5495 = vmax.xlane.f32.xlu0 %v5494
    %v5496 = vpop.xlane.xlu0 %5495
    %s5497 = sld [smem:[#allocation2 + $0x1c]]
    %v5498 = vstv %s5497
    %v5499 = vmul.f32 %v5498, %v4949
    %v5500 = vmul.f32 %v5498, %v4950
    %s5501 = sld [smem:[#allocation2 + $0x1d]]
    %v5502 = vstv %s5501
    %v5503 = vmul.f32 %v5502, %v4501
    %v5504 = vmul.f32 %v5502, %v4502
    %s5505 = sld [smem:[#allocation2 + $0x1e]]
    %v5506 = vstv %s5505
    %v5507 = vmul.f32 %v5506, %v4958
    %v5508 = vmul.f32 %v5506, %v4959
    %s5509 = sld [smem:[#allocation2 + $0x1f]]
    %v5510 = vstv %s5509
    %v5511 = vmul.f32 %v5510, %v4968
    %v5512 = vmul.f32 %v5510, %v4969
    %s5513 = sld [smem:[#allocation2 + $0x20]]
    %v5514 = vstv %s5513
    %v5515 = vmul.f32 %v5514, %v4647
    %v5516 = vmul.f32 %v5514, %v4648
    %s5517 = sld [smem:[#allocation2 + $0x21]]
    %v5518 = vstv %s5517
    %v5519 = vmul.f32 %v5518, %v4976
    %v5520 = vmul.f32 %v5518, %v4977
    %s5521 = sld [smem:[#allocation2 + $0x22]]
    %v5522 = vstv %s5521
    %v5523 = vmul.f32 %v5522, %v4986
    %v5524 = vmul.f32 %v5522, %v4987
    %s5525 = sld [smem:[#allocation2 + $0x23]]
    %v5526 = vstv %s5525
    %v5527 = vmul.f32 %v5526, %v4793
    %v5528 = vmul.f32 %v5526, %v4794
    %s5529 = sld [smem:[#allocation2 + $0x24]]
    %v5530 = vstv %s5529
    %v5531 = vmul.f32 %v5530, %v4994
    %v5532 = vmul.f32 %v5530, %v4995
    %s5533 = sld [smem:[#allocation2 + $0x25]]
    %v5534 = vstv %s5533
    %v5535 = vmul.f32 %v5534, %v5004
    %v5536 = vmul.f32 %v5534, %v5005
    %s5537 = sld [smem:[#allocation2 + $0x26]]
    %v5538 = vstv %s5537
    %v5539 = vmul.f32 %v5538, %v4939
    %v5540 = vmul.f32 %v5538, %v4940
    %s5541 = sld [smem:[#allocation2 + $0x27]]
    %v5542 = vstv %s5541
    %v5543 = vmul.f32 %v5542, %v5012
    %v5544 = vmul.f32 %v5542, %v5013
    %v5545 = vadd.f32 %v5499, %v5503
    %v5546 = vadd.f32 %v5500, %v5504
    %v5547 = vadd.f32 %v5507, %v5511
    %v5548 = vadd.f32 %v5508, %v5512
    %v5549 = vadd.f32 %v5515, %v5519
    %v5550 = vadd.f32 %v5516, %v5520
    %v5551 = vadd.f32 %v5523, %v5527
    %v5552 = vadd.f32 %v5524, %v5528
    %v5553 = vadd.f32 %v5531, %v5535
    %v5554 = vadd.f32 %v5532, %v5536
    %v5555 = vadd.f32 %v5539, %v5543
    %v5556 = vadd.f32 %v5540, %v5544
    %v5557 = vadd.f32 %v5545, %v5547
    %v5558 = vadd.f32 %v5546, %v5548
    %v5559 = vadd.f32 %v5549, %v5551
    %v5560 = vadd.f32 %v5550, %v5552
    %v5561 = vadd.f32 %v5553, %v5555
    %v5562 = vadd.f32 %v5554, %v5556
    %v5563 = vadd.f32 %v5557, %v5559
    %v5564 = vadd.f32 %v5558, %v5560
    %v5565 = vadd.f32 %v5563, %v5561
    %v5566 = vadd.f32 %v5564, %v5562
    %s5567 = sld [smem:[#allocation2 + $0x29]]
    %v5568 = vstv %s5567
    %v5569 = vadd.f32 %v5565, %v5568
    %v5570 = vadd.f32 %v5566, %v5568
    %5573 = vrot.lane.b32.xlu0 %v5569, 126
    %v5574 = vpop.permute.xlu0 %5573
    %5575 = vrot.lane.b32.xlu0 %v5570, 126
    %v5576 = vpop.permute.xlu0 %5575
    %5579 = vrot.lane.b32.xlu0 %v5569, 124
    %v5580 = vpop.permute.xlu0 %5579
    %5581 = vrot.lane.b32.xlu0 %v5570, 124
    %v5582 = vpop.permute.xlu0 %5581
    %5585 = vrot.lane.b32.xlu0 %v5569, 122
    %v5586 = vpop.permute.xlu0 %5585
    %5587 = vrot.lane.b32.xlu0 %v5570, 122
    %v5588 = vpop.permute.xlu0 %5587
    %5591 = vrot.lane.b32.xlu0 %v5569, 120
    %v5592 = vpop.permute.xlu0 %5591
    %5593 = vrot.lane.b32.xlu0 %v5570, 120
    %v5594 = vpop.permute.xlu0 %5593
    %5597 = vrot.lane.b32.xlu0 %v5569, 118
    %v5598 = vpop.permute.xlu0 %5597
    %5599 = vrot.lane.b32.xlu0 %v5570, 118
    %v5600 = vpop.permute.xlu0 %5599
    %5603 = vrot.lane.b32.xlu0 %v5569, 116
    %v5604 = vpop.permute.xlu0 %5603
    %5605 = vrot.lane.b32.xlu0 %v5570, 116
    %v5606 = vpop.permute.xlu0 %5605
    %5609 = vrot.lane.b32.xlu0 %v5569, 114
    %v5610 = vpop.permute.xlu0 %5609
    %5611 = vrot.lane.b32.xlu0 %v5570, 114
    %v5612 = vpop.permute.xlu0 %5611
    %5615 = vrot.lane.b32.xlu0 %v5569, 112
    %v5616 = vpop.permute.xlu0 %5615
    %5618 = vrot.lane.b32.xlu0 %v5569, 110
    %v5619 = vpop.permute.xlu0 %5618
    %5621 = vrot.lane.b32.xlu0 %v5569, 108
    %v5622 = vpop.permute.xlu0 %5621
    %5624 = vrot.lane.b32.xlu0 %v5569, 106
    %v5625 = vpop.permute.xlu0 %5624
    %v5627 = vrot.slane %v5580, 4
    %v5628 = vsel %vm583, %v5627, %v5569
    %v5629 = vrot.slane %v5569, 4
    %v5630 = vsel %vm583, %v5580, %v5629
    %v5632 = vunpack.c.l.s4 1983009808
    %v5633 = vunpack.c.0.s8 %v5632
    %v5634 = vperm.slane %v5628, %v5633
    %v5636 = vunpack.c.l.s4 1983009808
    %v5637 = vunpack.c.0.s8 %v5636
    %v5638 = vperm.slane %v5630, %v5637
    %v5639 = vrot.slane %v5586, 4
    %v5640 = vsel %vm583, %v5639, %v5574
    %v5641 = vrot.slane %v5574, 4
    %v5642 = vsel %vm583, %v5586, %v5641
    %v5644 = vunpack.c.l.s4 1983009808
    %v5645 = vunpack.c.0.s8 %v5644
    %v5646 = vperm.slane %v5640, %v5645
    %v5648 = vunpack.c.l.s4 1983009808
    %v5649 = vunpack.c.0.s8 %v5648
    %v5650 = vperm.slane %v5642, %v5649
    %v5651 = vrot.slane %v5604, 4
    %v5652 = vsel %vm583, %v5651, %v5592
    %v5653 = vrot.slane %v5592, 4
    %v5654 = vsel %vm583, %v5604, %v5653
    %v5656 = vunpack.c.l.s4 1983009808
    %v5657 = vunpack.c.0.s8 %v5656
    %v5658 = vperm.slane %v5652, %v5657
    %v5660 = vunpack.c.l.s4 1983009808
    %v5661 = vunpack.c.0.s8 %v5660
    %v5662 = vperm.slane %v5654, %v5661
    %v5663 = vrot.slane %v5610, 4
    %v5664 = vsel %vm583, %v5663, %v5598
    %v5665 = vrot.slane %v5598, 4
    %v5666 = vsel %vm583, %v5610, %v5665
    %v5668 = vunpack.c.l.s4 1983009808
    %v5669 = vunpack.c.0.s8 %v5668
    %v5670 = vperm.slane %v5664, %v5669
    %v5672 = vunpack.c.l.s4 1983009808
    %v5673 = vunpack.c.0.s8 %v5672
    %v5674 = vperm.slane %v5666, %v5673
    %v5675 = vrot.slane %v5646, 4
    %v5676 = vsel %vm583, %v5675, %v5634
    %v5677 = vrot.slane %v5634, 4
    %v5678 = vsel %vm583, %v5646, %v5677
    %v5680 = vunpack.c.l.s4 1934713408
    %v5681 = vunpack.c.0.s8 %v5680
    %v5682 = vperm.slane %v5676, %v5681
    %v5684 = vunpack.c.l.s4 1934713408
    %v5685 = vunpack.c.0.s8 %v5684
    %v5686 = vperm.slane %v5678, %v5685
    %v5687 = vrot.slane %v5650, 4
    %v5688 = vsel %vm583, %v5687, %v5638
    %v5689 = vrot.slane %v5638, 4
    %v5690 = vsel %vm583, %v5650, %v5689
    %v5692 = vunpack.c.l.s4 1934713408
    %v5693 = vunpack.c.0.s8 %v5692
    %v5694 = vperm.slane %v5688, %v5693
    %v5696 = vunpack.c.l.s4 1934713408
    %v5697 = vunpack.c.0.s8 %v5696
    %v5698 = vperm.slane %v5690, %v5697
    %v5699 = vrot.slane %v5670, 4
    %v5700 = vsel %vm583, %v5699, %v5658
    %v5701 = vrot.slane %v5658, 4
    %v5702 = vsel %vm583, %v5670, %v5701
    %v5704 = vunpack.c.l.s4 1934713408
    %v5705 = vunpack.c.0.s8 %v5704
    %v5706 = vperm.slane %v5700, %v5705
    %v5708 = vunpack.c.l.s4 1934713408
    %v5709 = vunpack.c.0.s8 %v5708
    %v5710 = vperm.slane %v5702, %v5709
    %v5711 = vrot.slane %v5674, 4
    %v5712 = vsel %vm583, %v5711, %v5662
    %v5713 = vrot.slane %v5662, 4
    %v5714 = vsel %vm583, %v5674, %v5713
    %v5716 = vunpack.c.l.s4 1934713408
    %v5717 = vunpack.c.0.s8 %v5716
    %v5718 = vperm.slane %v5712, %v5717
    %v5720 = vunpack.c.l.s4 1934713408
    %v5721 = vunpack.c.0.s8 %v5720
    %v5722 = vperm.slane %v5714, %v5721
    %v5723 = vrot.slane %v5706, 4
    %v5724 = vsel %vm583, %v5723, %v5682
    %v5725 = vrot.slane %v5682, 4
    %v5726 = vsel %vm583, %v5706, %v5725
    %v5727 = vrot.slane %v5710, 4
    %v5728 = vsel %vm583, %v5727, %v5686
    %v5729 = vrot.slane %v5686, 4
    %v5730 = vsel %vm583, %v5710, %v5729
    %v5731 = vrot.slane %v5718, 4
    %v5732 = vsel %vm583, %v5731, %v5694
    %v5733 = vrot.slane %v5694, 4
    %v5734 = vsel %vm583, %v5718, %v5733
    %v5735 = vrot.slane %v5722, 4
    %v5736 = vsel %vm583, %v5735, %v5698
    %v5737 = vrot.slane %v5698, 4
    %v5738 = vsel %vm583, %v5722, %v5737
    %v5739 = vrot.slane %v5622, 4
    %v5740 = vsel %vm583, %v5739, %v5616
    %v5741 = vrot.slane %v5616, 4
    %v5742 = vsel %vm583, %v5622, %v5741
    %v5744 = vunpack.c.l.s4 1983009808
    %v5745 = vunpack.c.0.s8 %v5744
    %v5746 = vperm.slane %v5740, %v5745
    %v5748 = vunpack.c.l.s4 1983009808
    %v5749 = vunpack.c.0.s8 %v5748
    %v5750 = vperm.slane %v5742, %v5749
    %v5751 = vrot.slane %v5625, 4
    %v5752 = vsel %vm583, %v5751, %v5619
    %v5753 = vrot.slane %v5619, 4
    %v5754 = vsel %vm583, %v5625, %v5753
    %v5756 = vunpack.c.l.s4 1983009808
    %v5757 = vunpack.c.0.s8 %v5756
    %v5758 = vperm.slane %v5752, %v5757
    %v5760 = vunpack.c.l.s4 1983009808
    %v5761 = vunpack.c.0.s8 %v5760
    %v5762 = vperm.slane %v5754, %v5761
    %v5763 = vrot.slane %v5758, 4
    %v5764 = vsel %vm583, %v5763, %v5746
    %v5765 = vrot.slane %v5746, 4
    %v5766 = vsel %vm583, %v5758, %v5765
    %v5768 = vunpack.c.l.s4 1934713408
    %v5769 = vunpack.c.0.s8 %v5768
    %v5770 = vperm.slane %v5764, %v5769
    %v5772 = vunpack.c.l.s4 1934713408
    %v5773 = vunpack.c.0.s8 %v5772
    %v5774 = vperm.slane %v5766, %v5773
    %v5775 = vrot.slane %v5762, 4
    %v5776 = vsel %vm583, %v5775, %v5750
    %v5777 = vrot.slane %v5750, 4
    %v5778 = vsel %vm583, %v5762, %v5777
    %v5780 = vunpack.c.l.s4 1934713408
    %v5781 = vunpack.c.0.s8 %v5780
    %v5782 = vperm.slane %v5776, %v5781
    %v5784 = vunpack.c.l.s4 1934713408
    %v5785 = vunpack.c.0.s8 %v5784
    %v5786 = vperm.slane %v5778, %v5785
    %v5787 = vrot.slane %v5770, 4
    %v5788 = vsel %vm583, 0.0, %v5787
    %v5789 = vrot.slane %v5774, 4
    %v5790 = vsel %vm583, 0.0, %v5789
    %v5791 = vrot.slane %v5782, 4
    %v5792 = vsel %vm583, 0.0, %v5791
    %v5793 = vrot.slane %v5786, 4
    %v5794 = vsel %vm583, 0.0, %v5793
    %v5795 = vrot.slane %v5582, 4
    %v5796 = vsel %vm583, %v5795, %v5570
    %v5797 = vrot.slane %v5570, 4
    %v5798 = vsel %vm583, %v5582, %v5797
    %v5800 = vunpack.c.l.s4 1983009808
    %v5801 = vunpack.c.0.s8 %v5800
    %v5802 = vperm.slane %v5796, %v5801
    %v5804 = vunpack.c.l.s4 1983009808
    %v5805 = vunpack.c.0.s8 %v5804
    %v5806 = vperm.slane %v5798, %v5805
    %v5807 = vrot.slane %v5588, 4
    %v5808 = vsel %vm583, %v5807, %v5576
    %v5809 = vrot.slane %v5576, 4
    %v5810 = vsel %vm583, %v5588, %v5809
    %v5812 = vunpack.c.l.s4 1983009808
    %v5813 = vunpack.c.0.s8 %v5812
    %v5814 = vperm.slane %v5808, %v5813
    %v5816 = vunpack.c.l.s4 1983009808
    %v5817 = vunpack.c.0.s8 %v5816
    %v5818 = vperm.slane %v5810, %v5817
    %v5819 = vrot.slane %v5606, 4
    %v5820 = vsel %vm583, %v5819, %v5594
    %v5821 = vrot.slane %v5594, 4
    %v5822 = vsel %vm583, %v5606, %v5821
    %v5824 = vunpack.c.l.s4 1983009808
    %v5825 = vunpack.c.0.s8 %v5824
    %v5826 = vperm.slane %v5820, %v5825
    %v5828 = vunpack.c.l.s4 1983009808
    %v5829 = vunpack.c.0.s8 %v5828
    %v5830 = vperm.slane %v5822, %v5829
    %v5831 = vrot.slane %v5612, 4
    %v5832 = vsel %vm583, %v5831, %v5600
    %v5833 = vrot.slane %v5600, 4
    %v5834 = vsel %vm583, %v5612, %v5833
    %v5836 = vunpack.c.l.s4 1983009808
    %v5837 = vunpack.c.0.s8 %v5836
    %v5838 = vperm.slane %v5832, %v5837
    %v5840 = vunpack.c.l.s4 1983009808
    %v5841 = vunpack.c.0.s8 %v5840
    %v5842 = vperm.slane %v5834, %v5841
    %v5843 = vrot.slane %v5814, 4
    %v5844 = vsel %vm583, %v5843, %v5802
    %v5845 = vrot.slane %v5802, 4
    %v5846 = vsel %vm583, %v5814, %v5845
    %v5848 = vunpack.c.l.s4 1934713408
    %v5849 = vunpack.c.0.s8 %v5848
    %v5850 = vperm.slane %v5844, %v5849
    %v5852 = vunpack.c.l.s4 1934713408
    %v5853 = vunpack.c.0.s8 %v5852
    %v5854 = vperm.slane %v5846, %v5853
    %v5855 = vrot.slane %v5818, 4
    %v5856 = vsel %vm583, %v5855, %v5806
    %v5857 = vrot.slane %v5806, 4
    %v5858 = vsel %vm583, %v5818, %v5857
    %v5860 = vunpack.c.l.s4 1934713408
    %v5861 = vunpack.c.0.s8 %v5860
    %v5862 = vperm.slane %v5856, %v5861
    %v5864 = vunpack.c.l.s4 1934713408
    %v5865 = vunpack.c.0.s8 %v5864
    %v5866 = vperm.slane %v5858, %v5865
    %v5867 = vrot.slane %v5838, 4
    %v5868 = vsel %vm583, %v5867, %v5826
    %v5869 = vrot.slane %v5826, 4
    %v5870 = vsel %vm583, %v5838, %v5869
    %v5872 = vunpack.c.l.s4 1934713408
    %v5873 = vunpack.c.0.s8 %v5872
    %v5874 = vperm.slane %v5868, %v5873
    %v5876 = vunpack.c.l.s4 1934713408
    %v5877 = vunpack.c.0.s8 %v5876
    %v5878 = vperm.slane %v5870, %v5877
    %v5879 = vrot.slane %v5842, 4
    %v5880 = vsel %vm583, %v5879, %v5830
    %v5881 = vrot.slane %v5830, 4
    %v5882 = vsel %vm583, %v5842, %v5881
    %v5884 = vunpack.c.l.s4 1934713408
    %v5885 = vunpack.c.0.s8 %v5884
    %v5886 = vperm.slane %v5880, %v5885
    %v5888 = vunpack.c.l.s4 1934713408
    %v5889 = vunpack.c.0.s8 %v5888
    %v5890 = vperm.slane %v5882, %v5889
    %v5891 = vrot.slane %v5874, 4
    %v5892 = vsel %vm583, %v5891, %v5850
    %v5893 = vrot.slane %v5850, 4
    %v5894 = vsel %vm583, %v5874, %v5893
    %v5895 = vrot.slane %v5878, 4
    %v5896 = vsel %vm583, %v5895, %v5854
    %v5897 = vrot.slane %v5854, 4
    %v5898 = vsel %vm583, %v5878, %v5897
    %v5899 = vrot.slane %v5886, 4
    %v5900 = vsel %vm583, %v5899, %v5862
    %v5901 = vrot.slane %v5862, 4
    %v5902 = vsel %vm583, %v5886, %v5901
    %v5903 = vrot.slane %v5890, 4
    %v5904 = vsel %vm583, %v5903, %v5866
    %v5905 = vrot.slane %v5866, 4
    %v5906 = vsel %vm583, %v5890, %v5905
    %v5907 = vsel %vm1255, %v5724, -inf
    %5908 = vmax.xlane.f32.xlu0 %v5907
    %v5909 = vpop.xlane.xlu0 %5908
    %v5910 = vsel %vm5427, %v5770, -inf
    %5911 = vmax.xlane.f32.xlu0 %v5910
    %v5912 = vpop.xlane.xlu0 %5911
    %v5913 = vsel %vm1255, %v5726, -inf
    %5914 = vmax.xlane.f32.xlu0 %v5913
    %v5915 = vpop.xlane.xlu0 %5914
    %v5916 = vsel %vm5427, %v5788, -inf
    %5917 = vmax.xlane.f32.xlu0 %v5916
    %v5918 = vpop.xlane.xlu0 %5917
    %v5919 = vsel %vm1255, %v5728, -inf
    %5920 = vmax.xlane.f32.xlu0 %v5919
    %v5921 = vpop.xlane.xlu0 %5920
    %v5922 = vsel %vm5427, %v5774, -inf
    %5923 = vmax.xlane.f32.xlu0 %v5922
    %v5924 = vpop.xlane.xlu0 %5923
    %v5925 = vsel %vm1255, %v5730, -inf
    %5926 = vmax.xlane.f32.xlu0 %v5925
    %v5927 = vpop.xlane.xlu0 %5926
    %v5928 = vsel %vm5427, %v5790, -inf
    %5929 = vmax.xlane.f32.xlu0 %v5928
    %v5930 = vpop.xlane.xlu0 %5929
    %v5931 = vsel %vm1255, %v5732, -inf
    %5932 = vmax.xlane.f32.xlu0 %v5931
    %v5933 = vpop.xlane.xlu0 %5932
    %v5934 = vsel %vm5427, %v5782, -inf
    %5935 = vmax.xlane.f32.xlu0 %v5934
    %v5936 = vpop.xlane.xlu0 %5935
    %v5937 = vsel %vm1255, %v5734, -inf
    %5938 = vmax.xlane.f32.xlu0 %v5937
    %v5939 = vpop.xlane.xlu0 %5938
    %v5940 = vsel %vm5427, %v5792, -inf
    %5941 = vmax.xlane.f32.xlu0 %v5940
    %v5942 = vpop.xlane.xlu0 %5941
    %v5943 = vsel %vm1255, %v5736, -inf
    %5944 = vmax.xlane.f32.xlu0 %v5943
    %v5945 = vpop.xlane.xlu0 %5944
    %v5946 = vsel %vm5427, %v5786, -inf
    %5947 = vmax.xlane.f32.xlu0 %v5946
    %v5948 = vpop.xlane.xlu0 %5947
    %v5949 = vsel %vm1255, %v5738, -inf
    %5950 = vmax.xlane.f32.xlu0 %v5949
    %v5951 = vpop.xlane.xlu0 %5950
    %v5952 = vsel %vm5427, %v5794, -inf
    %5953 = vmax.xlane.f32.xlu0 %v5952
    %v5954 = vpop.xlane.xlu0 %5953
    %v5955 = vsel %vm1255, %v5892, -inf
    %5956 = vmax.xlane.f32.xlu0 %v5955
    %v5957 = vpop.xlane.xlu0 %5956
    %v5958 = vsel %vm1255, %v5894, -inf
    %5959 = vmax.xlane.f32.xlu0 %v5958
    %v5960 = vpop.xlane.xlu0 %5959
    %v5961 = vsel %vm1255, %v5896, -inf
    %5962 = vmax.xlane.f32.xlu0 %v5961
    %v5963 = vpop.xlane.xlu0 %5962
    %v5964 = vsel %vm1255, %v5898, -inf
    %5965 = vmax.xlane.f32.xlu0 %v5964
    %v5966 = vpop.xlane.xlu0 %5965
    %v5967 = vsel %vm1255, %v5900, -inf
    %5968 = vmax.xlane.f32.xlu0 %v5967
    %v5969 = vpop.xlane.xlu0 %5968
    %v5970 = vsel %vm1255, %v5902, -inf
    %5971 = vmax.xlane.f32.xlu0 %v5970
    %v5972 = vpop.xlane.xlu0 %5971
    %v5973 = vsel %vm1255, %v5904, -inf
    %5974 = vmax.xlane.f32.xlu0 %v5973
    %v5975 = vpop.xlane.xlu0 %5974
    %v5976 = vsel %vm1255, %v5906, -inf
    %5977 = vmax.xlane.f32.xlu0 %v5976
    %v5978 = vpop.xlane.xlu0 %5977
    %v5995 = vperm.slane %v5426, %v4338
    %v5996 = vperm.slane %v5430, %v4395
    %v5997 = vsel %vm4397, %v5996, %v5995
    %v5998 = vperm.slane %v5433, %v4338
    %v5999 = vperm.slane %v5436, %v4395
    %v6000 = vsel %vm4397, %v5999, %v5998
    %v6001 = vperm.slane %v5439, %v4338
    %v6002 = vperm.slane %v5442, %v4395
    %v6003 = vsel %vm4397, %v6002, %v6001
    %v6004 = vperm.slane %v5445, %v4338
    %v6005 = vperm.slane %v5448, %v4395
    %v6006 = vsel %vm4397, %v6005, %v6004
    %v6007 = vperm.slane %v5451, %v4338
    %v6008 = vperm.slane %v5454, %v4395
    %v6009 = vsel %vm4397, %v6008, %v6007
    %v6010 = vperm.slane %v5457, %v4338
    %v6011 = vperm.slane %v5460, %v4395
    %v6012 = vsel %vm4397, %v6011, %v6010
    %v6013 = vperm.slane %v5463, %v4338
    %v6014 = vperm.slane %v5466, %v4395
    %v6015 = vsel %vm4397, %v6014, %v6013
    %v6016 = vperm.slane %v5469, %v4338
    %v6017 = vperm.slane %v5472, %v4395
    %v6018 = vsel %vm4397, %v6017, %v6016
    %v6019 = vsel %vm4478, %v6000, %v5997
    %v6020 = vsel %vm4480, %v6003, %v6019
    %v6021 = vsel %vm4482, %v6006, %v6020
    %v6022 = vsel %vm4484, %v6009, %v6021
    %v6023 = vsel %vm4486, %v6012, %v6022
    %v6024 = vsel %vm4488, %v6015, %v6023
    %v6025 = vsel %vm4490, %v6018, %v6024
    %v6043 = vadd.s32 %v4338, 4294967284
    %v6044 = vperm.slane %v5909, %v6043
    %v6045 = vadd.s32 %v4338, 4294967276
    %v6046 = vperm.slane %v5912, %v6045
    %vm6047 = vcmask 228512
    %v6048 = vsel %vm6047, %v6046, %v6044
    %v6049 = vperm.slane %v5915, %v6043
    %v6050 = vperm.slane %v5918, %v6045
    %v6051 = vsel %vm6047, %v6050, %v6049
    %v6052 = vperm.slane %v5921, %v6043
    %v6053 = vperm.slane %v5924, %v6045
    %v6054 = vsel %vm6047, %v6053, %v6052
    %v6055 = vperm.slane %v5927, %v6043
    %v6056 = vperm.slane %v5930, %v6045
    %v6057 = vsel %vm6047, %v6056, %v6055
    %v6058 = vperm.slane %v5933, %v6043
    %v6059 = vperm.slane %v5936, %v6045
    %v6060 = vsel %vm6047, %v6059, %v6058
    %v6061 = vperm.slane %v5939, %v6043
    %v6062 = vperm.slane %v5942, %v6045
    %v6063 = vsel %vm6047, %v6062, %v6061
    %v6064 = vperm.slane %v5945, %v6043
    %v6065 = vperm.slane %v5948, %v6045
    %v6066 = vsel %vm6047, %v6065, %v6064
    %v6067 = vperm.slane %v5951, %v6043
    %v6068 = vperm.slane %v5954, %v6045
    %v6069 = vsel %vm6047, %v6068, %v6067
    %v6070 = vsel %vm4478, %v6051, %v6048
    %v6071 = vsel %vm4480, %v6054, %v6070
    %v6072 = vsel %vm4482, %v6057, %v6071
    %v6073 = vsel %vm4484, %v6060, %v6072
    %v6074 = vsel %vm4486, %v6063, %v6073
    %v6075 = vsel %vm4488, %v6066, %v6074
    %v6076 = vsel %vm4490, %v6069, %v6075
    %vm6078 = vcmask 97280
    %v6079 = vsel %vm6078, %v6025, %v6076
    %v6088 = vperm.slane %v5475, %v4338
    %v6089 = vperm.slane %v5478, %v4338
    %v6090 = vperm.slane %v5481, %v4338
    %v6091 = vperm.slane %v5484, %v4338
    %v6092 = vperm.slane %v5487, %v4338
    %v6093 = vperm.slane %v5490, %v4338
    %v6094 = vperm.slane %v5493, %v4338
    %v6095 = vperm.slane %v5496, %v4338
    %v6096 = vsel %vm4478, %v6089, %v6088
    %v6097 = vsel %vm4480, %v6090, %v6096
    %v6098 = vsel %vm4482, %v6091, %v6097
    %v6099 = vsel %vm4484, %v6092, %v6098
    %v6100 = vsel %vm4486, %v6093, %v6099
    %v6101 = vsel %vm4488, %v6094, %v6100
    %v6102 = vsel %vm4490, %v6095, %v6101
    %v6112 = vperm.slane %v5957, %v4395
    %v6113 = vperm.slane %v5960, %v4395
    %v6114 = vperm.slane %v5963, %v4395
    %v6115 = vperm.slane %v5966, %v4395
    %v6116 = vperm.slane %v5969, %v4395
    %v6117 = vperm.slane %v5972, %v4395
    %v6118 = vperm.slane %v5975, %v4395
    %v6119 = vperm.slane %v5978, %v4395
    %v6120 = vsel %vm4478, %v6113, %v6112
    %v6121 = vsel %vm4480, %v6114, %v6120
    %v6122 = vsel %vm4482, %v6115, %v6121
    %v6123 = vsel %vm4484, %v6116, %v6122
    %v6124 = vsel %vm4486, %v6117, %v6123
    %v6125 = vsel %vm4488, %v6118, %v6124
    %v6126 = vsel %vm4490, %v6119, %v6125
    %v6128 = vsel %vm157, %v6102, %v6126
    %6130 = vrot.lane.b32.xlu0 %v6128, 24
    %v6131 = vpop.permute.xlu0 %6130
    %vm6133 = vcmask 195584
    %v6134 = vsel %vm6133, %v6079, %v6131
    %v6135 = vld [vmem:[%s6] sm:$0x3]
    %vm6136 = vcmask 326656
    %v6138 = vsel %vm6136, %v6135, 0
    %v6141 = vsel %vm6136, %v6134, 0
    %6143 = vmatpush.xpose.msra.mxu0 0.0
    %6144 = vmatpush.xpose.msra.mxu0 0.0
    %6145 = vmatpush.xpose.msra.mxu0 0.0
    %6146 = vmatpush.xpose.msra.mxu0 0.0
    %6147 = vmatpush.xpose.msra.mxu0 0.0
    %6148 = vmatpush.xpose.msra.mxu0 0.0
    %6149 = vmatpush.xpose.msra.mxu0 0.0
    %6150 = vmatpush.xpose.msra.mxu0 0.0
    %6151 = vmatpush.xpose.msra.mxu0 0.0
    %6152 = vmatpush.xpose.msra.mxu0 0.0
    %6153 = vmatpush.xpose.msra.mxu0 0.0
    %6154 = vmatpush.xpose.msra.mxu0 0.0
    %6155 = vmatpush.xpose.msra.mxu0 0.0
    %6156 = vmatpush.xpose.msra.mxu0 0.0
    %6157 = vmatpush.xpose.msra.mxu0 0.0
    %6158 = vmatpush.xpose.msra.mxu0 %v6141
    %6159 = vmatmul.f32.gmra.mxu0 %v6138
    %v6160 = vpop.f32.mrf.mxu0
    %v6161 = vadd.f32 0.0, %v6160
    %6162 = vdwg.mxu0
    %s6163 = sld [smem:[#allocation2 + $0x2a]]
    %v6164 = vstv %s6163
    %v6165 = vadd.f32 %v6161, %v6164
    %s6166 = sld [smem:[#allocation2 + $0x2b]]
    %v6167 = vstv %s6166
    %v6168 = vadd.f32 %v6161, %v6167
    %v6170 = vrot.slane %v6168, 1
    %v6172 = vmul.f32 %v6165, %v6170
    %v6173 = vsub.f32 0.0, %v6172
    %v6174 = vmul.f32 %v6173, 1.442695
    %v6175 = vpow.pop %v6174
    %v6176 = vadd.f32 %v6175, 1.0
    %v6177 = vrcp.pop %v6176
    %v6178 = vmul.f32 %v6176, %v6177
    %v6179 = vsub.f32 1.0, %v6178
    %v6180 = vmul.f32 %v6177, %v6179
    %v6181 = vadd.f32 %v6177, %v6180
    %vm6182 = vweird.f32 %v6176
    %vm6183 = vweird.f32 %v6177
    %vm6184 = vmor %vm6182, %vm6183
    %v6185 = vsel %vm6184, %v6177, %v6181
    %v6186 = vand.u32 2147483647, %v6176
    %vm6187 = vcmp.eq.f32.partialorder %v6186, 8.507059e+37
    %v6188 = vand.u32 %v6176, 2147483648
    %v6189 = vor.u32 1.1754944e-38, %v6188
    %v6190 = vsel %vm6187, %v6189, %v6185
    %v6191 = vmul.f32 1.0, %v6190
    %vm6192 = vcmask 57344
    %6193 = vst.msk [vmem:[#allocation5] sm:$0x1] %vm6192, %v6191
    // Predicated region
    $region38: #{net_forward.1} parent=1 // pred_check
      _
    $region39: #{net_forward.1} parent=1 // pred_check_branch
      %6195 = sbr.rel (0) target = $region41
    $region40: #{net_forward.1} parent=1 // pred_region
      %6197 = vsyncadd [#allocation3], 0
      %s6199 = sshll.u32 [#allocation5], 4
      %s6200 = int_to_ptr.vmem [resolvable:$true] %s6199
      %s6201 = sshll.u32 %s8, 4
      %s6202 = int_to_ptr.hbm [resolvable:$true] %s6201
      %6204 = dma.vmem_to_hbm [thread:$0]  %s6200, 16, %s6202, [#allocation3]
    $region41: #{net_forward.1} parent=1 // pred_fallthru
      _
    // Predicated region
    $region42: #{net_forward.1} parent=1 // pred_check
      _
    $region43: #{net_forward.1} parent=1 // pred_check_branch
      %6206 = sbr.rel (0) target = $region45
    $region44: #{net_forward.1} parent=1 // pred_region
      %6208 = dma.done [#allocation3], 16
    $region45: #{net_forward.1} parent=1 // pred_fallthru
      _
    %6209 = vsyncpa [#allocation3], 1
    %6210 = vsyncpa [#allocation4], 1

</llo_original>
